<compile_context>
chip_gen: v6e
topology: v6e:2x2x1
jax: 0.10.0
libtpu: 0.0.40
codegen_flags: <defaults>
</compile_context>

<pallas_src>
from functools import partial

import jax
import jax.numpy as jnp
from jax.experimental import pallas as pl
from jax.experimental.pallas import tpu as pltpu

INPUT_SIZE = 30
HIDDEN = 128
NUM_LAYERS = 2        # hard-coded as two stacked cells in the kernel body
NUM_CLASSES = 3

I_PAD = 128           # input features padded to one full lane tile
C_PAD = 128           # classifier output padded to one full lane tile


def _lstm_kernel(xf_ref, wih0_ref, whh0_ref, b0_ref,
                 wih1_ref, whh1_ref, b1_ref, wfc_ref, bfc_ref,
                 out_ref, g_ref, hs_ref, *, seq_len, batch, hidden):
    T, B, H = seq_len, batch, hidden

    def gates_to_hc(g, c):
        # Gate columns are [i, f, o, g] (host-side permuted); the i/f/o columns of
        # the weights/biases were pre-scaled by 0.5, so a single tanh gives all
        # sigmoid gates via sigmoid(x) = 0.5*tanh(0.5*x) + 0.5.
        t = jnp.tanh(g)                         # one EUP push over (B, 4H)
        i = 0.5 * t[:, 0:H] + 0.5
        f = 0.5 * t[:, H:2 * H] + 0.5
        o = 0.5 * t[:, 2 * H:3 * H] + 0.5
        gg = t[:, 3 * H:4 * H]
        c_new = f * c + i * gg
        h_new = o * jnp.tanh(c_new)             # one EUP push over (B, H)
        return h_new, c_new

    zeros = jnp.zeros((B, H), jnp.float32)

    # ---- Pass A: layer 0 ---------------------------------------------------
    # Hoisted input projection for all timesteps into VMEM scratch.
    g_ref[...] = (jnp.dot(xf_ref[...], wih0_ref[...],
                          preferred_element_type=jnp.float32) + b0_ref[...])

    whh0 = whh0_ref[...]                        # (H, 4H)
    h, c = zeros, zeros
    for t in range(T):                          # T small & static: fully unrolled
        g = g_ref[pl.ds(t * B, B), :] + jnp.dot(
            h, whh0, preferred_element_type=jnp.float32)
        h, c = gates_to_hc(g, c)
        hs_ref[pl.ds(t * B, B), :] = h          # stack h1 for layer-1 projection

    # ---- Pass B: layer 1 ---------------------------------------------------
    # Hoisted layer-1 input projection (one M=T*B matmul), reusing the gate scratch.
    g_ref[...] = (jnp.dot(hs_ref[...], wih1_ref[...],
                          preferred_element_type=jnp.float32) + b1_ref[...])

    whh1 = whh1_ref[...]                        # (H, 4H)
    h, c = zeros, zeros
    for t in range(T):
        g = g_ref[pl.ds(t * B, B), :] + jnp.dot(
            h, whh1, preferred_element_type=jnp.float32)
        h, c = gates_to_hc(g, c)

    # ---- fc head (lane-dense padded output) --------------------------------
    out_ref[...] = (jnp.dot(h, wfc_ref[...],
                            preferred_element_type=jnp.float32) + bfc_ref[...])


def douban_lstm_forward(x, params):
    """x: (B, T, INPUT_SIZE) float32, batch_first like the PyTorch module."""
    B, T, I = x.shape
    H, C = HIDDEN, NUM_CLASSES

    # Batch padded to a multiple of 8: states are exact (8,128) vregs and the
    # per-step row slices of the gate scratch land on sublane boundaries.
    B_pad = max(8, ((B + 7) // 8) * 8)
    x_tm = jnp.transpose(x, (1, 0, 2))                       # time-major (T, B, I)
    x_tm = jnp.pad(x_tm, ((0, 0), (0, B_pad - B), (0, I_PAD - I)))
    xf = x_tm.reshape(T * B_pad, I_PAD)                      # (T*B_pad, 128)

    # Gate-column permutation [i, f, g, o] -> [i, f, o, g] plus 0.5 pre-scale on
    # the sigmoid (i/f/o) columns so the kernel needs a single tanh per gate set.
    perm = jnp.concatenate([jnp.arange(0, H), jnp.arange(H, 2 * H),
                            jnp.arange(3 * H, 4 * H), jnp.arange(2 * H, 3 * H)])
    scale = jnp.concatenate([jnp.full((3 * H,), 0.5, jnp.float32),
                             jnp.ones((H,), jnp.float32)])

    def prep(w_ih, w_hh, b_ih, b_hh):
        wih = w_ih.T[:, perm] * scale                        # (in, 4H)
        whh = w_hh.T[:, perm] * scale                        # (H, 4H)
        b = ((b_ih + b_hh)[perm] * scale).reshape(1, 4 * H)  # (1, 4H)
        return wih, whh, b

    wih0, whh0, b0 = prep(params["w_ih_l0"], params["w_hh_l0"],
                          params["b_ih_l0"], params["b_hh_l0"])
    wih0 = jnp.pad(wih0, ((0, I_PAD - I), (0, 0)))           # (128, 4H), zero rows
    wih1, whh1, b1 = prep(params["w_ih_l1"], params["w_hh_l1"],
                          params["b_ih_l1"], params["b_hh_l1"])

    wfc = jnp.pad(params["fc_w"].T, ((0, 0), (0, C_PAD - C)))        # (H, 128)
    bfc = jnp.pad(params["fc_b"], ((0, C_PAD - C),)).reshape(1, C_PAD)

    kernel = partial(_lstm_kernel, seq_len=T, batch=B_pad, hidden=H)

    vmem = pl.BlockSpec(memory_space=pltpu.MemorySpace.VMEM)
    out = pl.pallas_call(
        kernel,
        out_shape=jax.ShapeDtypeStruct((B_pad, C_PAD), jnp.float32),
        in_specs=[vmem] * 9,
        out_specs=vmem,
        scratch_shapes=[
            pltpu.VMEM((T * B_pad, 4 * H), jnp.float32),     # g0_all / g1_all
            pltpu.VMEM((T * B_pad, H), jnp.float32),         # stacked h1
        ],
    )(xf, wih0, whh0, b0, wih1, whh1, b1, wfc, bfc)
    return out[:B, :C]


def _reference_forward(x, params):
    """Pure-JAX reference (same math as the PyTorch module) for checking."""
    H = HIDDEN
    B = x.shape[0]

    def cell_step(carry, x_t, wih, whh, b):
        h, c = carry
        gates = x_t @ wih.T + h @ whh.T + b
        i = jax.nn.sigmoid(gates[:, 0:H])
        f = jax.nn.sigmoid(gates[:, H:2 * H])
        g = jnp.tanh(gates[:, 2 * H:3 * H])
        o = jax.nn.sigmoid(gates[:, 3 * H:4 * H])
        c = f * c + i * g
        h = o * jnp.tanh(c)
        return (h, c), h

    x_tm = jnp.transpose(x, (1, 0, 2))
    b_l0 = params["b_ih_l0"] + params["b_hh_l0"]
    b_l1 = params["b_ih_l1"] + params["b_hh_l1"]

    init = (jnp.zeros((B, H), jnp.float32), jnp.zeros((B, H), jnp.float32))
    _, h1_seq = jax.lax.scan(
        lambda cr, xt: cell_step(cr, xt, params["w_ih_l0"], params["w_hh_l0"], b_l0),
        init, x_tm)
    _, h2_seq = jax.lax.scan(
        lambda cr, xt: cell_step(cr, xt, params["w_ih_l1"], params["w_hh_l1"], b_l1),
        init, h1_seq)
    last = h2_seq[-1]
    return last @ params["fc_w"].T + params["fc_b"]


def init_params(key):
    H, I, C = HIDDEN, INPUT_SIZE, NUM_CLASSES
    bound = 1.0 / (H ** 0.5)
    ks = jax.random.split(key, 10)
    u = lambda k_, shape: jax.random.uniform(k_, shape, jnp.float32, -bound, bound)
    return {
        "w_ih_l0": u(ks[0], (4 * H, I)),
        "w_hh_l0": u(ks[1], (4 * H, H)),
        "b_ih_l0": u(ks[2], (4 * H,)),
        "b_hh_l0": u(ks[3], (4 * H,)),
        "w_ih_l1": u(ks[4], (4 * H, H)),
        "w_hh_l1": u(ks[5], (4 * H, H)),
        "b_ih_l1": u(ks[6], (4 * H,)),
        "b_hh_l1": u(ks[7], (4 * H,)),
        "fc_w": u(ks[8], (C, H)),
        "fc_b": u(ks[9], (C,)),
    }


if __name__ == "__main__":
    key = jax.random.PRNGKey(0)
    pkey, xkey = jax.random.split(key)
    params = init_params(pkey)

    B, T = 4, 8
    x = jax.random.normal(xkey, (B, T, INPUT_SIZE), jnp.float32)

    out = douban_lstm_forward(x, params)
    out = jax.block_until_ready(out)

    ref = jax.block_until_ready(_reference_forward(x, params))
    assert out.shape == (B, NUM_CLASSES)
    assert jnp.allclose(out, ref, atol=1e-4, rtol=1e-4), (out, ref)

    print("KERNEL_OK")
</pallas_src>

<mosaic_0001>
module attributes {stable_mosaic.version = 11 : i64} {
  func.func @_lstm_kernel(%arg0: memref<64x128xf32, #tpu.memory_space<vmem>>, %arg1: memref<128x512xf32, #tpu.memory_space<vmem>>, %arg2: memref<128x512xf32, #tpu.memory_space<vmem>>, %arg3: memref<1x512xf32, #tpu.memory_space<vmem>>, %arg4: memref<128x512xf32, #tpu.memory_space<vmem>>, %arg5: memref<128x512xf32, #tpu.memory_space<vmem>>, %arg6: memref<1x512xf32, #tpu.memory_space<vmem>>, %arg7: memref<128x128xf32, #tpu.memory_space<vmem>>, %arg8: memref<1x128xf32, #tpu.memory_space<vmem>>, %arg9: memref<8x128xf32, #tpu.memory_space<vmem>>, %arg10: memref<64x512xf32, #tpu.memory_space<vmem>>, %arg11: memref<64x128xf32, #tpu.memory_space<vmem>>) attributes {dimension_semantics = [], scalar_prefetch = 0 : i64, scratch_operands = 2 : i64, tpu.core_type = #tpu.core_type<tc>} {
    %cst = arith.constant 0.000000e+00 : f32
    %0 = vector.broadcast %cst : f32 to vector<8x128xf32>
    %c0 = arith.constant 0 : index
    %c0_0 = arith.constant 0 : index
    %1 = vector.load %arg0[%c0, %c0_0] : memref<64x128xf32, #tpu.memory_space<vmem>>, vector<64x128xf32>
    %c0_1 = arith.constant 0 : index
    %c0_2 = arith.constant 0 : index
    %2 = vector.load %arg1[%c0_1, %c0_2] : memref<128x512xf32, #tpu.memory_space<vmem>>, vector<128x512xf32>
    %cst_3 = arith.constant dense<0.000000e+00> : vector<64x512xf32>
    %3 = tpu.matmul %1, %2, %cst_3 {dimension_numbers = #tpu.dot_dimension_numbers<[1], [0], [0], [1], [0, 0, 1, 1], [], []>} : vector<64x128xf32>, vector<128x512xf32>, vector<64x512xf32> -> vector<64x512xf32>
    %c0_4 = arith.constant 0 : index
    %c0_5 = arith.constant 0 : index
    %4 = vector.load %arg3[%c0_4, %c0_5] : memref<1x512xf32, #tpu.memory_space<vmem>>, vector<1x512xf32>
    %5 = vector.broadcast %4 : vector<1x512xf32> to vector<64x512xf32>
    %6 = arith.addf %3, %5 : vector<64x512xf32>
    %c0_6 = arith.constant 0 : index
    %c0_7 = arith.constant 0 : index
    %7 = vector.load %arg10[%c0_6, %c0_7] : memref<64x512xf32, #tpu.memory_space<vmem>>, vector<64x512xf32>
    tpu.vector_store %arg10[%c0_6, %c0_7], %6 {strides = array<i32>} : memref<64x512xf32, #tpu.memory_space<vmem>>, vector<64x512xf32>,
    %c0_8 = arith.constant 0 : index
    %c0_9 = arith.constant 0 : index
    %8 = vector.load %arg2[%c0_8, %c0_9] : memref<128x512xf32, #tpu.memory_space<vmem>>, vector<128x512xf32>
    %c0_10 = arith.constant 0 : index
    %c0_11 = arith.constant 0 : index
    %9 = vector.load %arg10[%c0_10, %c0_11] : memref<64x512xf32, #tpu.memory_space<vmem>>, vector<8x512xf32>
    %cst_12 = arith.constant dense<0.000000e+00> : vector<8x512xf32>
    %10 = tpu.matmul %0, %8, %cst_12 {dimension_numbers = #tpu.dot_dimension_numbers<[1], [0], [0], [1], [0, 0, 1, 1], [], []>} : vector<8x128xf32>, vector<128x512xf32>, vector<8x512xf32> -> vector<8x512xf32>
    %11 = arith.addf %9, %10 : vector<8x512xf32>
    %12 = math.tanh %11 : vector<8x512xf32>
    %13 = vector.extract_strided_slice %12 {offsets = [0, 0], sizes = [8, 128], strides = [1, 1]} : vector<8x512xf32> to vector<8x128xf32>
    %cst_13 = arith.constant 5.000000e-01 : f32
    %14 = vector.broadcast %cst_13 : f32 to vector<8x128xf32>
    %15 = arith.mulf %14, %13 : vector<8x128xf32>
    %cst_14 = arith.constant 5.000000e-01 : f32
    %16 = vector.broadcast %cst_14 : f32 to vector<8x128xf32>
    %17 = arith.addf %15, %16 : vector<8x128xf32>
    %18 = vector.extract_strided_slice %12 {offsets = [0, 128], sizes = [8, 128], strides = [1, 1]} : vector<8x512xf32> to vector<8x128xf32>
    %cst_15 = arith.constant 5.000000e-01 : f32
    %19 = vector.broadcast %cst_15 : f32 to vector<8x128xf32>
    %20 = arith.mulf %19, %18 : vector<8x128xf32>
    %cst_16 = arith.constant 5.000000e-01 : f32
    %21 = vector.broadcast %cst_16 : f32 to vector<8x128xf32>
    %22 = arith.addf %20, %21 : vector<8x128xf32>
    %23 = vector.extract_strided_slice %12 {offsets = [0, 256], sizes = [8, 128], strides = [1, 1]} : vector<8x512xf32> to vector<8x128xf32>
    %cst_17 = arith.constant 5.000000e-01 : f32
    %24 = vector.broadcast %cst_17 : f32 to vector<8x128xf32>
    %25 = arith.mulf %24, %23 : vector<8x128xf32>
    %cst_18 = arith.constant 5.000000e-01 : f32
    %26 = vector.broadcast %cst_18 : f32 to vector<8x128xf32>
    %27 = arith.addf %25, %26 : vector<8x128xf32>
    %28 = vector.extract_strided_slice %12 {offsets = [0, 384], sizes = [8, 128], strides = [1, 1]} : vector<8x512xf32> to vector<8x128xf32>
    %29 = arith.mulf %22, %0 : vector<8x128xf32>
    %30 = arith.mulf %17, %28 : vector<8x128xf32>
    %31 = arith.addf %29, %30 : vector<8x128xf32>
    %32 = math.tanh %31 : vector<8x128xf32>
    %33 = arith.mulf %27, %32 : vector<8x128xf32>
    %c0_19 = arith.constant 0 : index
    %c0_20 = arith.constant 0 : index
    %34 = vector.load %arg11[%c0_19, %c0_20] : memref<64x128xf32, #tpu.memory_space<vmem>>, vector<8x128xf32>
    tpu.vector_store %arg11[%c0_19, %c0_20], %33 {strides = array<i32>} : memref<64x128xf32, #tpu.memory_space<vmem>>, vector<8x128xf32>,
    %c8 = arith.constant 8 : index
    %c0_21 = arith.constant 0 : index
    %35 = vector.load %arg10[%c8, %c0_21] : memref<64x512xf32, #tpu.memory_space<vmem>>, vector<8x512xf32>
    %cst_22 = arith.constant dense<0.000000e+00> : vector<8x512xf32>
    %36 = tpu.matmul %33, %8, %cst_22 {dimension_numbers = #tpu.dot_dimension_numbers<[1], [0], [0], [1], [0, 0, 1, 1], [], []>} : vector<8x128xf32>, vector<128x512xf32>, vector<8x512xf32> -> vector<8x512xf32>
    %37 = arith.addf %35, %36 : vector<8x512xf32>
    %38 = math.tanh %37 : vector<8x512xf32>
    %39 = vector.extract_strided_slice %38 {offsets = [0, 0], sizes = [8, 128], strides = [1, 1]} : vector<8x512xf32> to vector<8x128xf32>
    %cst_23 = arith.constant 5.000000e-01 : f32
    %40 = vector.broadcast %cst_23 : f32 to vector<8x128xf32>
    %41 = arith.mulf %40, %39 : vector<8x128xf32>
    %cst_24 = arith.constant 5.000000e-01 : f32
    %42 = vector.broadcast %cst_24 : f32 to vector<8x128xf32>
    %43 = arith.addf %41, %42 : vector<8x128xf32>
    %44 = vector.extract_strided_slice %38 {offsets = [0, 128], sizes = [8, 128], strides = [1, 1]} : vector<8x512xf32> to vector<8x128xf32>
    %cst_25 = arith.constant 5.000000e-01 : f32
    %45 = vector.broadcast %cst_25 : f32 to vector<8x128xf32>
    %46 = arith.mulf %45, %44 : vector<8x128xf32>
    %cst_26 = arith.constant 5.000000e-01 : f32
    %47 = vector.broadcast %cst_26 : f32 to vector<8x128xf32>
    %48 = arith.addf %46, %47 : vector<8x128xf32>
    %49 = vector.extract_strided_slice %38 {offsets = [0, 256], sizes = [8, 128], strides = [1, 1]} : vector<8x512xf32> to vector<8x128xf32>
    %cst_27 = arith.constant 5.000000e-01 : f32
    %50 = vector.broadcast %cst_27 : f32 to vector<8x128xf32>
    %51 = arith.mulf %50, %49 : vector<8x128xf32>
    %cst_28 = arith.constant 5.000000e-01 : f32
    %52 = vector.broadcast %cst_28 : f32 to vector<8x128xf32>
    %53 = arith.addf %51, %52 : vector<8x128xf32>
    %54 = vector.extract_strided_slice %38 {offsets = [0, 384], sizes = [8, 128], strides = [1, 1]} : vector<8x512xf32> to vector<8x128xf32>
    %55 = arith.mulf %48, %31 : vector<8x128xf32>
    %56 = arith.mulf %43, %54 : vector<8x128xf32>
    %57 = arith.addf %55, %56 : vector<8x128xf32>
    %58 = math.tanh %57 : vector<8x128xf32>
    %59 = arith.mulf %53, %58 : vector<8x128xf32>
    %c8_29 = arith.constant 8 : index
    %c0_30 = arith.constant 0 : index
    %60 = vector.load %arg11[%c8_29, %c0_30] : memref<64x128xf32, #tpu.memory_space<vmem>>, vector<8x128xf32>
    tpu.vector_store %arg11[%c8_29, %c0_30], %59 {strides = array<i32>} : memref<64x128xf32, #tpu.memory_space<vmem>>, vector<8x128xf32>,
    %c16 = arith.constant 16 : index
    %c0_31 = arith.constant 0 : index
    %61 = vector.load %arg10[%c16, %c0_31] : memref<64x512xf32, #tpu.memory_space<vmem>>, vector<8x512xf32>
    %cst_32 = arith.constant dense<0.000000e+00> : vector<8x512xf32>
    %62 = tpu.matmul %59, %8, %cst_32 {dimension_numbers = #tpu.dot_dimension_numbers<[1], [0], [0], [1], [0, 0, 1, 1], [], []>} : vector<8x128xf32>, vector<128x512xf32>, vector<8x512xf32> -> vector<8x512xf32>
    %63 = arith.addf %61, %62 : vector<8x512xf32>
    %64 = math.tanh %63 : vector<8x512xf32>
    %65 = vector.extract_strided_slice %64 {offsets = [0, 0], sizes = [8, 128], strides = [1, 1]} : vector<8x512xf32> to vector<8x128xf32>
    %cst_33 = arith.constant 5.000000e-01 : f32
    %66 = vector.broadcast %cst_33 : f32 to vector<8x128xf32>
    %67 = arith.mulf %66, %65 : vector<8x128xf32>
    %cst_34 = arith.constant 5.000000e-01 : f32
    %68 = vector.broadcast %cst_34 : f32 to vector<8x128xf32>
    %69 = arith.addf %67, %68 : vector<8x128xf32>
    %70 = vector.extract_strided_slice %64 {offsets = [0, 128], sizes = [8, 128], strides = [1, 1]} : vector<8x512xf32> to vector<8x128xf32>
    %cst_35 = arith.constant 5.000000e-01 : f32
    %71 = vector.broadcast %cst_35 : f32 to vector<8x128xf32>
    %72 = arith.mulf %71, %70 : vector<8x128xf32>
    %cst_36 = arith.constant 5.000000e-01 : f32
    %73 = vector.broadcast %cst_36 : f32 to vector<8x128xf32>
    %74 = arith.addf %72, %73 : vector<8x128xf32>
    %75 = vector.extract_strided_slice %64 {offsets = [0, 256], sizes = [8, 128], strides = [1, 1]} : vector<8x512xf32> to vector<8x128xf32>
    %cst_37 = arith.constant 5.000000e-01 : f32
    %76 = vector.broadcast %cst_37 : f32 to vector<8x128xf32>
    %77 = arith.mulf %76, %75 : vector<8x128xf32>
    %cst_38 = arith.constant 5.000000e-01 : f32
    %78 = vector.broadcast %cst_38 : f32 to vector<8x128xf32>
    %79 = arith.addf %77, %78 : vector<8x128xf32>
    %80 = vector.extract_strided_slice %64 {offsets = [0, 384], sizes = [8, 128], strides = [1, 1]} : vector<8x512xf32> to vector<8x128xf32>
    %81 = arith.mulf %74, %57 : vector<8x128xf32>
    %82 = arith.mulf %69, %80 : vector<8x128xf32>
    %83 = arith.addf %81, %82 : vector<8x128xf32>
    %84 = math.tanh %83 : vector<8x128xf32>
    %85 = arith.mulf %79, %84 : vector<8x128xf32>
    %c16_39 = arith.constant 16 : index
    %c0_40 = arith.constant 0 : index
    %86 = vector.load %arg11[%c16_39, %c0_40] : memref<64x128xf32, #tpu.memory_space<vmem>>, vector<8x128xf32>
    tpu.vector_store %arg11[%c16_39, %c0_40], %85 {strides = array<i32>} : memref<64x128xf32, #tpu.memory_space<vmem>>, vector<8x128xf32>,
    %c24 = arith.constant 24 : index
    %c0_41 = arith.constant 0 : index
    %87 = vector.load %arg10[%c24, %c0_41] : memref<64x512xf32, #tpu.memory_space<vmem>>, vector<8x512xf32>
    %cst_42 = arith.constant dense<0.000000e+00> : vector<8x512xf32>
    %88 = tpu.matmul %85, %8, %cst_42 {dimension_numbers = #tpu.dot_dimension_numbers<[1], [0], [0], [1], [0, 0, 1, 1], [], []>} : vector<8x128xf32>, vector<128x512xf32>, vector<8x512xf32> -> vector<8x512xf32>
    %89 = arith.addf %87, %88 : vector<8x512xf32>
    %90 = math.tanh %89 : vector<8x512xf32>
    %91 = vector.extract_strided_slice %90 {offsets = [0, 0], sizes = [8, 128], strides = [1, 1]} : vector<8x512xf32> to vector<8x128xf32>
    %cst_43 = arith.constant 5.000000e-01 : f32
    %92 = vector.broadcast %cst_43 : f32 to vector<8x128xf32>
    %93 = arith.mulf %92, %91 : vector<8x128xf32>
    %cst_44 = arith.constant 5.000000e-01 : f32
    %94 = vector.broadcast %cst_44 : f32 to vector<8x128xf32>
    %95 = arith.addf %93, %94 : vector<8x128xf32>
    %96 = vector.extract_strided_slice %90 {offsets = [0, 128], sizes = [8, 128], strides = [1, 1]} : vector<8x512xf32> to vector<8x128xf32>
    %cst_45 = arith.constant 5.000000e-01 : f32
    %97 = vector.broadcast %cst_45 : f32 to vector<8x128xf32>
    %98 = arith.mulf %97, %96 : vector<8x128xf32>
    %cst_46 = arith.constant 5.000000e-01 : f32
    %99 = vector.broadcast %cst_46 : f32 to vector<8x128xf32>
    %100 = arith.addf %98, %99 : vector<8x128xf32>
    %101 = vector.extract_strided_slice %90 {offsets = [0, 256], sizes = [8, 128], strides = [1, 1]} : vector<8x512xf32> to vector<8x128xf32>
    %cst_47 = arith.constant 5.000000e-01 : f32
    %102 = vector.broadcast %cst_47 : f32 to vector<8x128xf32>
    %103 = arith.mulf %102, %101 : vector<8x128xf32>
    %cst_48 = arith.constant 5.000000e-01 : f32
    %104 = vector.broadcast %cst_48 : f32 to vector<8x128xf32>
    %105 = arith.addf %103, %104 : vector<8x128xf32>
    %106 = vector.extract_strided_slice %90 {offsets = [0, 384], sizes = [8, 128], strides = [1, 1]} : vector<8x512xf32> to vector<8x128xf32>
    %107 = arith.mulf %100, %83 : vector<8x128xf32>
    %108 = arith.mulf %95, %106 : vector<8x128xf32>
    %109 = arith.addf %107, %108 : vector<8x128xf32>
    %110 = math.tanh %109 : vector<8x128xf32>
    %111 = arith.mulf %105, %110 : vector<8x128xf32>
    %c24_49 = arith.constant 24 : index
    %c0_50 = arith.constant 0 : index
    %112 = vector.load %arg11[%c24_49, %c0_50] : memref<64x128xf32, #tpu.memory_space<vmem>>, vector<8x128xf32>
    tpu.vector_store %arg11[%c24_49, %c0_50], %111 {strides = array<i32>} : memref<64x128xf32, #tpu.memory_space<vmem>>, vector<8x128xf32>,
    %c32 = arith.constant 32 : index
    %c0_51 = arith.constant 0 : index
    %113 = vector.load %arg10[%c32, %c0_51] : memref<64x512xf32, #tpu.memory_space<vmem>>, vector<8x512xf32>
    %cst_52 = arith.constant dense<0.000000e+00> : vector<8x512xf32>
    %114 = tpu.matmul %111, %8, %cst_52 {dimension_numbers = #tpu.dot_dimension_numbers<[1], [0], [0], [1], [0, 0, 1, 1], [], []>} : vector<8x128xf32>, vector<128x512xf32>, vector<8x512xf32> -> vector<8x512xf32>
    %115 = arith.addf %113, %114 : vector<8x512xf32>
    %116 = math.tanh %115 : vector<8x512xf32>
    %117 = vector.extract_strided_slice %116 {offsets = [0, 0], sizes = [8, 128], strides = [1, 1]} : vector<8x512xf32> to vector<8x128xf32>
    %cst_53 = arith.constant 5.000000e-01 : f32
    %118 = vector.broadcast %cst_53 : f32 to vector<8x128xf32>
    %119 = arith.mulf %118, %117 : vector<8x128xf32>
    %cst_54 = arith.constant 5.000000e-01 : f32
    %120 = vector.broadcast %cst_54 : f32 to vector<8x128xf32>
    %121 = arith.addf %119, %120 : vector<8x128xf32>
    %122 = vector.extract_strided_slice %116 {offsets = [0, 128], sizes = [8, 128], strides = [1, 1]} : vector<8x512xf32> to vector<8x128xf32>
    %cst_55 = arith.constant 5.000000e-01 : f32
    %123 = vector.broadcast %cst_55 : f32 to vector<8x128xf32>
    %124 = arith.mulf %123, %122 : vector<8x128xf32>
    %cst_56 = arith.constant 5.000000e-01 : f32
    %125 = vector.broadcast %cst_56 : f32 to vector<8x128xf32>
    %126 = arith.addf %124, %125 : vector<8x128xf32>
    %127 = vector.extract_strided_slice %116 {offsets = [0, 256], sizes = [8, 128], strides = [1, 1]} : vector<8x512xf32> to vector<8x128xf32>
    %cst_57 = arith.constant 5.000000e-01 : f32
    %128 = vector.broadcast %cst_57 : f32 to vector<8x128xf32>
    %129 = arith.mulf %128, %127 : vector<8x128xf32>
    %cst_58 = arith.constant 5.000000e-01 : f32
    %130 = vector.broadcast %cst_58 : f32 to vector<8x128xf32>
    %131 = arith.addf %129, %130 : vector<8x128xf32>
    %132 = vector.extract_strided_slice %116 {offsets = [0, 384], sizes = [8, 128], strides = [1, 1]} : vector<8x512xf32> to vector<8x128xf32>
    %133 = arith.mulf %126, %109 : vector<8x128xf32>
    %134 = arith.mulf %121, %132 : vector<8x128xf32>
    %135 = arith.addf %133, %134 : vector<8x128xf32>
    %136 = math.tanh %135 : vector<8x128xf32>
    %137 = arith.mulf %131, %136 : vector<8x128xf32>
    %c32_59 = arith.constant 32 : index
    %c0_60 = arith.constant 0 : index
    %138 = vector.load %arg11[%c32_59, %c0_60] : memref<64x128xf32, #tpu.memory_space<vmem>>, vector<8x128xf32>
    tpu.vector_store %arg11[%c32_59, %c0_60], %137 {strides = array<i32>} : memref<64x128xf32, #tpu.memory_space<vmem>>, vector<8x128xf32>,
    %c40 = arith.constant 40 : index
    %c0_61 = arith.constant 0 : index
    %139 = vector.load %arg10[%c40, %c0_61] : memref<64x512xf32, #tpu.memory_space<vmem>>, vector<8x512xf32>
    %cst_62 = arith.constant dense<0.000000e+00> : vector<8x512xf32>
    %140 = tpu.matmul %137, %8, %cst_62 {dimension_numbers = #tpu.dot_dimension_numbers<[1], [0], [0], [1], [0, 0, 1, 1], [], []>} : vector<8x128xf32>, vector<128x512xf32>, vector<8x512xf32> -> vector<8x512xf32>
    %141 = arith.addf %139, %140 : vector<8x512xf32>
    %142 = math.tanh %141 : vector<8x512xf32>
    %143 = vector.extract_strided_slice %142 {offsets = [0, 0], sizes = [8, 128], strides = [1, 1]} : vector<8x512xf32> to vector<8x128xf32>
    %cst_63 = arith.constant 5.000000e-01 : f32
    %144 = vector.broadcast %cst_63 : f32 to vector<8x128xf32>
    %145 = arith.mulf %144, %143 : vector<8x128xf32>
    %cst_64 = arith.constant 5.000000e-01 : f32
    %146 = vector.broadcast %cst_64 : f32 to vector<8x128xf32>
    %147 = arith.addf %145, %146 : vector<8x128xf32>
    %148 = vector.extract_strided_slice %142 {offsets = [0, 128], sizes = [8, 128], strides = [1, 1]} : vector<8x512xf32> to vector<8x128xf32>
    %cst_65 = arith.constant 5.000000e-01 : f32
    %149 = vector.broadcast %cst_65 : f32 to vector<8x128xf32>
    %150 = arith.mulf %149, %148 : vector<8x128xf32>
    %cst_66 = arith.constant 5.000000e-01 : f32
    %151 = vector.broadcast %cst_66 : f32 to vector<8x128xf32>
    %152 = arith.addf %150, %151 : vector<8x128xf32>
    %153 = vector.extract_strided_slice %142 {offsets = [0, 256], sizes = [8, 128], strides = [1, 1]} : vector<8x512xf32> to vector<8x128xf32>
    %cst_67 = arith.constant 5.000000e-01 : f32
    %154 = vector.broadcast %cst_67 : f32 to vector<8x128xf32>
    %155 = arith.mulf %154, %153 : vector<8x128xf32>
    %cst_68 = arith.constant 5.000000e-01 : f32
    %156 = vector.broadcast %cst_68 : f32 to vector<8x128xf32>
    %157 = arith.addf %155, %156 : vector<8x128xf32>
    %158 = vector.extract_strided_slice %142 {offsets = [0, 384], sizes = [8, 128], strides = [1, 1]} : vector<8x512xf32> to vector<8x128xf32>
    %159 = arith.mulf %152, %135 : vector<8x128xf32>
    %160 = arith.mulf %147, %158 : vector<8x128xf32>
    %161 = arith.addf %159, %160 : vector<8x128xf32>
    %162 = math.tanh %161 : vector<8x128xf32>
    %163 = arith.mulf %157, %162 : vector<8x128xf32>
    %c40_69 = arith.constant 40 : index
    %c0_70 = arith.constant 0 : index
    %164 = vector.load %arg11[%c40_69, %c0_70] : memref<64x128xf32, #tpu.memory_space<vmem>>, vector<8x128xf32>
    tpu.vector_store %arg11[%c40_69, %c0_70], %163 {strides = array<i32>} : memref<64x128xf32, #tpu.memory_space<vmem>>, vector<8x128xf32>,
    %c48 = arith.constant 48 : index
    %c0_71 = arith.constant 0 : index
    %165 = vector.load %arg10[%c48, %c0_71] : memref<64x512xf32, #tpu.memory_space<vmem>>, vector<8x512xf32>
    %cst_72 = arith.constant dense<0.000000e+00> : vector<8x512xf32>
    %166 = tpu.matmul %163, %8, %cst_72 {dimension_numbers = #tpu.dot_dimension_numbers<[1], [0], [0], [1], [0, 0, 1, 1], [], []>} : vector<8x128xf32>, vector<128x512xf32>, vector<8x512xf32> -> vector<8x512xf32>
    %167 = arith.addf %165, %166 : vector<8x512xf32>
    %168 = math.tanh %167 : vector<8x512xf32>
    %169 = vector.extract_strided_slice %168 {offsets = [0, 0], sizes = [8, 128], strides = [1, 1]} : vector<8x512xf32> to vector<8x128xf32>
    %cst_73 = arith.constant 5.000000e-01 : f32
    %170 = vector.broadcast %cst_73 : f32 to vector<8x128xf32>
    %171 = arith.mulf %170, %169 : vector<8x128xf32>
    %cst_74 = arith.constant 5.000000e-01 : f32
    %172 = vector.broadcast %cst_74 : f32 to vector<8x128xf32>
    %173 = arith.addf %171, %172 : vector<8x128xf32>
    %174 = vector.extract_strided_slice %168 {offsets = [0, 128], sizes = [8, 128], strides = [1, 1]} : vector<8x512xf32> to vector<8x128xf32>
    %cst_75 = arith.constant 5.000000e-01 : f32
    %175 = vector.broadcast %cst_75 : f32 to vector<8x128xf32>
    %176 = arith.mulf %175, %174 : vector<8x128xf32>
    %cst_76 = arith.constant 5.000000e-01 : f32
    %177 = vector.broadcast %cst_76 : f32 to vector<8x128xf32>
    %178 = arith.addf %176, %177 : vector<8x128xf32>
    %179 = vector.extract_strided_slice %168 {offsets = [0, 256], sizes = [8, 128], strides = [1, 1]} : vector<8x512xf32> to vector<8x128xf32>
    %cst_77 = arith.constant 5.000000e-01 : f32
    %180 = vector.broadcast %cst_77 : f32 to vector<8x128xf32>
    %181 = arith.mulf %180, %179 : vector<8x128xf32>
    %cst_78 = arith.constant 5.000000e-01 : f32
    %182 = vector.broadcast %cst_78 : f32 to vector<8x128xf32>
    %183 = arith.addf %181, %182 : vector<8x128xf32>
    %184 = vector.extract_strided_slice %168 {offsets = [0, 384], sizes = [8, 128], strides = [1, 1]} : vector<8x512xf32> to vector<8x128xf32>
    %185 = arith.mulf %178, %161 : vector<8x128xf32>
    %186 = arith.mulf %173, %184 : vector<8x128xf32>
    %187 = arith.addf %185, %186 : vector<8x128xf32>
    %188 = math.tanh %187 : vector<8x128xf32>
    %189 = arith.mulf %183, %188 : vector<8x128xf32>
    %c48_79 = arith.constant 48 : index
    %c0_80 = arith.constant 0 : index
    %190 = vector.load %arg11[%c48_79, %c0_80] : memref<64x128xf32, #tpu.memory_space<vmem>>, vector<8x128xf32>
    tpu.vector_store %arg11[%c48_79, %c0_80], %189 {strides = array<i32>} : memref<64x128xf32, #tpu.memory_space<vmem>>, vector<8x128xf32>,
    %c56 = arith.constant 56 : index
    %c0_81 = arith.constant 0 : index
    %191 = vector.load %arg10[%c56, %c0_81] : memref<64x512xf32, #tpu.memory_space<vmem>>, vector<8x512xf32>
    %cst_82 = arith.constant dense<0.000000e+00> : vector<8x512xf32>
    %192 = tpu.matmul %189, %8, %cst_82 {dimension_numbers = #tpu.dot_dimension_numbers<[1], [0], [0], [1], [0, 0, 1, 1], [], []>} : vector<8x128xf32>, vector<128x512xf32>, vector<8x512xf32> -> vector<8x512xf32>
    %193 = arith.addf %191, %192 : vector<8x512xf32>
    %194 = math.tanh %193 : vector<8x512xf32>
    %195 = vector.extract_strided_slice %194 {offsets = [0, 0], sizes = [8, 128], strides = [1, 1]} : vector<8x512xf32> to vector<8x128xf32>
    %cst_83 = arith.constant 5.000000e-01 : f32
    %196 = vector.broadcast %cst_83 : f32 to vector<8x128xf32>
    %197 = arith.mulf %196, %195 : vector<8x128xf32>
    %cst_84 = arith.constant 5.000000e-01 : f32
    %198 = vector.broadcast %cst_84 : f32 to vector<8x128xf32>
    %199 = arith.addf %197, %198 : vector<8x128xf32>
    %200 = vector.extract_strided_slice %194 {offsets = [0, 128], sizes = [8, 128], strides = [1, 1]} : vector<8x512xf32> to vector<8x128xf32>
    %cst_85 = arith.constant 5.000000e-01 : f32
    %201 = vector.broadcast %cst_85 : f32 to vector<8x128xf32>
    %202 = arith.mulf %201, %200 : vector<8x128xf32>
    %cst_86 = arith.constant 5.000000e-01 : f32
    %203 = vector.broadcast %cst_86 : f32 to vector<8x128xf32>
    %204 = arith.addf %202, %203 : vector<8x128xf32>
    %205 = vector.extract_strided_slice %194 {offsets = [0, 256], sizes = [8, 128], strides = [1, 1]} : vector<8x512xf32> to vector<8x128xf32>
    %cst_87 = arith.constant 5.000000e-01 : f32
    %206 = vector.broadcast %cst_87 : f32 to vector<8x128xf32>
    %207 = arith.mulf %206, %205 : vector<8x128xf32>
    %cst_88 = arith.constant 5.000000e-01 : f32
    %208 = vector.broadcast %cst_88 : f32 to vector<8x128xf32>
    %209 = arith.addf %207, %208 : vector<8x128xf32>
    %210 = vector.extract_strided_slice %194 {offsets = [0, 384], sizes = [8, 128], strides = [1, 1]} : vector<8x512xf32> to vector<8x128xf32>
    %211 = arith.mulf %204, %187 : vector<8x128xf32>
    %212 = arith.mulf %199, %210 : vector<8x128xf32>
    %213 = arith.addf %211, %212 : vector<8x128xf32>
    %214 = math.tanh %213 : vector<8x128xf32>
    %215 = arith.mulf %209, %214 : vector<8x128xf32>
    %c56_89 = arith.constant 56 : index
    %c0_90 = arith.constant 0 : index
    %216 = vector.load %arg11[%c56_89, %c0_90] : memref<64x128xf32, #tpu.memory_space<vmem>>, vector<8x128xf32>
    tpu.vector_store %arg11[%c56_89, %c0_90], %215 {strides = array<i32>} : memref<64x128xf32, #tpu.memory_space<vmem>>, vector<8x128xf32>,
    %c0_91 = arith.constant 0 : index
    %c0_92 = arith.constant 0 : index
    %217 = vector.load %arg11[%c0_91, %c0_92] : memref<64x128xf32, #tpu.memory_space<vmem>>, vector<64x128xf32>
    %c0_93 = arith.constant 0 : index
    %c0_94 = arith.constant 0 : index
    %218 = vector.load %arg4[%c0_93, %c0_94] : memref<128x512xf32, #tpu.memory_space<vmem>>, vector<128x512xf32>
    %cst_95 = arith.constant dense<0.000000e+00> : vector<64x512xf32>
    %219 = tpu.matmul %217, %218, %cst_95 {dimension_numbers = #tpu.dot_dimension_numbers<[1], [0], [0], [1], [0, 0, 1, 1], [], []>} : vector<64x128xf32>, vector<128x512xf32>, vector<64x512xf32> -> vector<64x512xf32>
    %c0_96 = arith.constant 0 : index
    %c0_97 = arith.constant 0 : index
    %220 = vector.load %arg6[%c0_96, %c0_97] : memref<1x512xf32, #tpu.memory_space<vmem>>, vector<1x512xf32>
    %221 = vector.broadcast %220 : vector<1x512xf32> to vector<64x512xf32>
    %222 = arith.addf %219, %221 : vector<64x512xf32>
    %c0_98 = arith.constant 0 : index
    %c0_99 = arith.constant 0 : index
    %223 = vector.load %arg10[%c0_98, %c0_99] : memref<64x512xf32, #tpu.memory_space<vmem>>, vector<64x512xf32>
    tpu.vector_store %arg10[%c0_98, %c0_99], %222 {strides = array<i32>} : memref<64x512xf32, #tpu.memory_space<vmem>>, vector<64x512xf32>,
    %c0_100 = arith.constant 0 : index
    %c0_101 = arith.constant 0 : index
    %224 = vector.load %arg5[%c0_100, %c0_101] : memref<128x512xf32, #tpu.memory_space<vmem>>, vector<128x512xf32>
    %c0_102 = arith.constant 0 : index
    %c0_103 = arith.constant 0 : index
    %225 = vector.load %arg10[%c0_102, %c0_103] : memref<64x512xf32, #tpu.memory_space<vmem>>, vector<8x512xf32>
    %cst_104 = arith.constant dense<0.000000e+00> : vector<8x512xf32>
    %226 = tpu.matmul %0, %224, %cst_104 {dimension_numbers = #tpu.dot_dimension_numbers<[1], [0], [0], [1], [0, 0, 1, 1], [], []>} : vector<8x128xf32>, vector<128x512xf32>, vector<8x512xf32> -> vector<8x512xf32>
    %227 = arith.addf %225, %226 : vector<8x512xf32>
    %228 = math.tanh %227 : vector<8x512xf32>
    %229 = vector.extract_strided_slice %228 {offsets = [0, 0], sizes = [8, 128], strides = [1, 1]} : vector<8x512xf32> to vector<8x128xf32>
    %cst_105 = arith.constant 5.000000e-01 : f32
    %230 = vector.broadcast %cst_105 : f32 to vector<8x128xf32>
    %231 = arith.mulf %230, %229 : vector<8x128xf32>
    %cst_106 = arith.constant 5.000000e-01 : f32
    %232 = vector.broadcast %cst_106 : f32 to vector<8x128xf32>
    %233 = arith.addf %231, %232 : vector<8x128xf32>
    %234 = vector.extract_strided_slice %228 {offsets = [0, 128], sizes = [8, 128], strides = [1, 1]} : vector<8x512xf32> to vector<8x128xf32>
    %cst_107 = arith.constant 5.000000e-01 : f32
    %235 = vector.broadcast %cst_107 : f32 to vector<8x128xf32>
    %236 = arith.mulf %235, %234 : vector<8x128xf32>
    %cst_108 = arith.constant 5.000000e-01 : f32
    %237 = vector.broadcast %cst_108 : f32 to vector<8x128xf32>
    %238 = arith.addf %236, %237 : vector<8x128xf32>
    %239 = vector.extract_strided_slice %228 {offsets = [0, 256], sizes = [8, 128], strides = [1, 1]} : vector<8x512xf32> to vector<8x128xf32>
    %cst_109 = arith.constant 5.000000e-01 : f32
    %240 = vector.broadcast %cst_109 : f32 to vector<8x128xf32>
    %241 = arith.mulf %240, %239 : vector<8x128xf32>
    %cst_110 = arith.constant 5.000000e-01 : f32
    %242 = vector.broadcast %cst_110 : f32 to vector<8x128xf32>
    %243 = arith.addf %241, %242 : vector<8x128xf32>
    %244 = vector.extract_strided_slice %228 {offsets = [0, 384], sizes = [8, 128], strides = [1, 1]} : vector<8x512xf32> to vector<8x128xf32>
    %245 = arith.mulf %238, %0 : vector<8x128xf32>
    %246 = arith.mulf %233, %244 : vector<8x128xf32>
    %247 = arith.addf %245, %246 : vector<8x128xf32>
    %248 = math.tanh %247 : vector<8x128xf32>
    %249 = arith.mulf %243, %248 : vector<8x128xf32>
    %c8_111 = arith.constant 8 : index
    %c0_112 = arith.constant 0 : index
    %250 = vector.load %arg10[%c8_111, %c0_112] : memref<64x512xf32, #tpu.memory_space<vmem>>, vector<8x512xf32>
    %cst_113 = arith.constant dense<0.000000e+00> : vector<8x512xf32>
    %251 = tpu.matmul %249, %224, %cst_113 {dimension_numbers = #tpu.dot_dimension_numbers<[1], [0], [0], [1], [0, 0, 1, 1], [], []>} : vector<8x128xf32>, vector<128x512xf32>, vector<8x512xf32> -> vector<8x512xf32>
    %252 = arith.addf %250, %251 : vector<8x512xf32>
    %253 = math.tanh %252 : vector<8x512xf32>
    %254 = vector.extract_strided_slice %253 {offsets = [0, 0], sizes = [8, 128], strides = [1, 1]} : vector<8x512xf32> to vector<8x128xf32>
    %cst_114 = arith.constant 5.000000e-01 : f32
    %255 = vector.broadcast %cst_114 : f32 to vector<8x128xf32>
    %256 = arith.mulf %255, %254 : vector<8x128xf32>
    %cst_115 = arith.constant 5.000000e-01 : f32
    %257 = vector.broadcast %cst_115 : f32 to vector<8x128xf32>
    %258 = arith.addf %256, %257 : vector<8x128xf32>
    %259 = vector.extract_strided_slice %253 {offsets = [0, 128], sizes = [8, 128], strides = [1, 1]} : vector<8x512xf32> to vector<8x128xf32>
    %cst_116 = arith.constant 5.000000e-01 : f32
    %260 = vector.broadcast %cst_116 : f32 to vector<8x128xf32>
    %261 = arith.mulf %260, %259 : vector<8x128xf32>
    %cst_117 = arith.constant 5.000000e-01 : f32
    %262 = vector.broadcast %cst_117 : f32 to vector<8x128xf32>
    %263 = arith.addf %261, %262 : vector<8x128xf32>
    %264 = vector.extract_strided_slice %253 {offsets = [0, 256], sizes = [8, 128], strides = [1, 1]} : vector<8x512xf32> to vector<8x128xf32>
    %cst_118 = arith.constant 5.000000e-01 : f32
    %265 = vector.broadcast %cst_118 : f32 to vector<8x128xf32>
    %266 = arith.mulf %265, %264 : vector<8x128xf32>
    %cst_119 = arith.constant 5.000000e-01 : f32
    %267 = vector.broadcast %cst_119 : f32 to vector<8x128xf32>
    %268 = arith.addf %266, %267 : vector<8x128xf32>
    %269 = vector.extract_strided_slice %253 {offsets = [0, 384], sizes = [8, 128], strides = [1, 1]} : vector<8x512xf32> to vector<8x128xf32>
    %270 = arith.mulf %263, %247 : vector<8x128xf32>
    %271 = arith.mulf %258, %269 : vector<8x128xf32>
    %272 = arith.addf %270, %271 : vector<8x128xf32>
    %273 = math.tanh %272 : vector<8x128xf32>
    %274 = arith.mulf %268, %273 : vector<8x128xf32>
    %c16_120 = arith.constant 16 : index
    %c0_121 = arith.constant 0 : index
    %275 = vector.load %arg10[%c16_120, %c0_121] : memref<64x512xf32, #tpu.memory_space<vmem>>, vector<8x512xf32>
    %cst_122 = arith.constant dense<0.000000e+00> : vector<8x512xf32>
    %276 = tpu.matmul %274, %224, %cst_122 {dimension_numbers = #tpu.dot_dimension_numbers<[1], [0], [0], [1], [0, 0, 1, 1], [], []>} : vector<8x128xf32>, vector<128x512xf32>, vector<8x512xf32> -> vector<8x512xf32>
    %277 = arith.addf %275, %276 : vector<8x512xf32>
    %278 = math.tanh %277 : vector<8x512xf32>
    %279 = vector.extract_strided_slice %278 {offsets = [0, 0], sizes = [8, 128], strides = [1, 1]} : vector<8x512xf32> to vector<8x128xf32>
    %cst_123 = arith.constant 5.000000e-01 : f32
    %280 = vector.broadcast %cst_123 : f32 to vector<8x128xf32>
    %281 = arith.mulf %280, %279 : vector<8x128xf32>
    %cst_124 = arith.constant 5.000000e-01 : f32
    %282 = vector.broadcast %cst_124 : f32 to vector<8x128xf32>
    %283 = arith.addf %281, %282 : vector<8x128xf32>
    %284 = vector.extract_strided_slice %278 {offsets = [0, 128], sizes = [8, 128], strides = [1, 1]} : vector<8x512xf32> to vector<8x128xf32>
    %cst_125 = arith.constant 5.000000e-01 : f32
    %285 = vector.broadcast %cst_125 : f32 to vector<8x128xf32>
    %286 = arith.mulf %285, %284 : vector<8x128xf32>
    %cst_126 = arith.constant 5.000000e-01 : f32
    %287 = vector.broadcast %cst_126 : f32 to vector<8x128xf32>
    %288 = arith.addf %286, %287 : vector<8x128xf32>
    %289 = vector.extract_strided_slice %278 {offsets = [0, 256], sizes = [8, 128], strides = [1, 1]} : vector<8x512xf32> to vector<8x128xf32>
    %cst_127 = arith.constant 5.000000e-01 : f32
    %290 = vector.broadcast %cst_127 : f32 to vector<8x128xf32>
    %291 = arith.mulf %290, %289 : vector<8x128xf32>
    %cst_128 = arith.constant 5.000000e-01 : f32
    %292 = vector.broadcast %cst_128 : f32 to vector<8x128xf32>
    %293 = arith.addf %291, %292 : vector<8x128xf32>
    %294 = vector.extract_strided_slice %278 {offsets = [0, 384], sizes = [8, 128], strides = [1, 1]} : vector<8x512xf32> to vector<8x128xf32>
    %295 = arith.mulf %288, %272 : vector<8x128xf32>
    %296 = arith.mulf %283, %294 : vector<8x128xf32>
    %297 = arith.addf %295, %296 : vector<8x128xf32>
    %298 = math.tanh %297 : vector<8x128xf32>
    %299 = arith.mulf %293, %298 : vector<8x128xf32>
    %c24_129 = arith.constant 24 : index
    %c0_130 = arith.constant 0 : index
    %300 = vector.load %arg10[%c24_129, %c0_130] : memref<64x512xf32, #tpu.memory_space<vmem>>, vector<8x512xf32>
    %cst_131 = arith.constant dense<0.000000e+00> : vector<8x512xf32>
    %301 = tpu.matmul %299, %224, %cst_131 {dimension_numbers = #tpu.dot_dimension_numbers<[1], [0], [0], [1], [0, 0, 1, 1], [], []>} : vector<8x128xf32>, vector<128x512xf32>, vector<8x512xf32> -> vector<8x512xf32>
    %302 = arith.addf %300, %301 : vector<8x512xf32>
    %303 = math.tanh %302 : vector<8x512xf32>
    %304 = vector.extract_strided_slice %303 {offsets = [0, 0], sizes = [8, 128], strides = [1, 1]} : vector<8x512xf32> to vector<8x128xf32>
    %cst_132 = arith.constant 5.000000e-01 : f32
    %305 = vector.broadcast %cst_132 : f32 to vector<8x128xf32>
    %306 = arith.mulf %305, %304 : vector<8x128xf32>
    %cst_133 = arith.constant 5.000000e-01 : f32
    %307 = vector.broadcast %cst_133 : f32 to vector<8x128xf32>
    %308 = arith.addf %306, %307 : vector<8x128xf32>
    %309 = vector.extract_strided_slice %303 {offsets = [0, 128], sizes = [8, 128], strides = [1, 1]} : vector<8x512xf32> to vector<8x128xf32>
    %cst_134 = arith.constant 5.000000e-01 : f32
    %310 = vector.broadcast %cst_134 : f32 to vector<8x128xf32>
    %311 = arith.mulf %310, %309 : vector<8x128xf32>
    %cst_135 = arith.constant 5.000000e-01 : f32
    %312 = vector.broadcast %cst_135 : f32 to vector<8x128xf32>
    %313 = arith.addf %311, %312 : vector<8x128xf32>
    %314 = vector.extract_strided_slice %303 {offsets = [0, 256], sizes = [8, 128], strides = [1, 1]} : vector<8x512xf32> to vector<8x128xf32>
    %cst_136 = arith.constant 5.000000e-01 : f32
    %315 = vector.broadcast %cst_136 : f32 to vector<8x128xf32>
    %316 = arith.mulf %315, %314 : vector<8x128xf32>
    %cst_137 = arith.constant 5.000000e-01 : f32
    %317 = vector.broadcast %cst_137 : f32 to vector<8x128xf32>
    %318 = arith.addf %316, %317 : vector<8x128xf32>
    %319 = vector.extract_strided_slice %303 {offsets = [0, 384], sizes = [8, 128], strides = [1, 1]} : vector<8x512xf32> to vector<8x128xf32>
    %320 = arith.mulf %313, %297 : vector<8x128xf32>
    %321 = arith.mulf %308, %319 : vector<8x128xf32>
    %322 = arith.addf %320, %321 : vector<8x128xf32>
    %323 = math.tanh %322 : vector<8x128xf32>
    %324 = arith.mulf %318, %323 : vector<8x128xf32>
    %c32_138 = arith.constant 32 : index
    %c0_139 = arith.constant 0 : index
    %325 = vector.load %arg10[%c32_138, %c0_139] : memref<64x512xf32, #tpu.memory_space<vmem>>, vector<8x512xf32>
    %cst_140 = arith.constant dense<0.000000e+00> : vector<8x512xf32>
    %326 = tpu.matmul %324, %224, %cst_140 {dimension_numbers = #tpu.dot_dimension_numbers<[1], [0], [0], [1], [0, 0, 1, 1], [], []>} : vector<8x128xf32>, vector<128x512xf32>, vector<8x512xf32> -> vector<8x512xf32>
    %327 = arith.addf %325, %326 : vector<8x512xf32>
    %328 = math.tanh %327 : vector<8x512xf32>
    %329 = vector.extract_strided_slice %328 {offsets = [0, 0], sizes = [8, 128], strides = [1, 1]} : vector<8x512xf32> to vector<8x128xf32>
    %cst_141 = arith.constant 5.000000e-01 : f32
    %330 = vector.broadcast %cst_141 : f32 to vector<8x128xf32>
    %331 = arith.mulf %330, %329 : vector<8x128xf32>
    %cst_142 = arith.constant 5.000000e-01 : f32
    %332 = vector.broadcast %cst_142 : f32 to vector<8x128xf32>
    %333 = arith.addf %331, %332 : vector<8x128xf32>
    %334 = vector.extract_strided_slice %328 {offsets = [0, 128], sizes = [8, 128], strides = [1, 1]} : vector<8x512xf32> to vector<8x128xf32>
    %cst_143 = arith.constant 5.000000e-01 : f32
    %335 = vector.broadcast %cst_143 : f32 to vector<8x128xf32>
    %336 = arith.mulf %335, %334 : vector<8x128xf32>
    %cst_144 = arith.constant 5.000000e-01 : f32
    %337 = vector.broadcast %cst_144 : f32 to vector<8x128xf32>
    %338 = arith.addf %336, %337 : vector<8x128xf32>
    %339 = vector.extract_strided_slice %328 {offsets = [0, 256], sizes = [8, 128], strides = [1, 1]} : vector<8x512xf32> to vector<8x128xf32>
    %cst_145 = arith.constant 5.000000e-01 : f32
    %340 = vector.broadcast %cst_145 : f32 to vector<8x128xf32>
    %341 = arith.mulf %340, %339 : vector<8x128xf32>
    %cst_146 = arith.constant 5.000000e-01 : f32
    %342 = vector.broadcast %cst_146 : f32 to vector<8x128xf32>
    %343 = arith.addf %341, %342 : vector<8x128xf32>
    %344 = vector.extract_strided_slice %328 {offsets = [0, 384], sizes = [8, 128], strides = [1, 1]} : vector<8x512xf32> to vector<8x128xf32>
    %345 = arith.mulf %338, %322 : vector<8x128xf32>
    %346 = arith.mulf %333, %344 : vector<8x128xf32>
    %347 = arith.addf %345, %346 : vector<8x128xf32>
    %348 = math.tanh %347 : vector<8x128xf32>
    %349 = arith.mulf %343, %348 : vector<8x128xf32>
    %c40_147 = arith.constant 40 : index
    %c0_148 = arith.constant 0 : index
    %350 = vector.load %arg10[%c40_147, %c0_148] : memref<64x512xf32, #tpu.memory_space<vmem>>, vector<8x512xf32>
    %cst_149 = arith.constant dense<0.000000e+00> : vector<8x512xf32>
    %351 = tpu.matmul %349, %224, %cst_149 {dimension_numbers = #tpu.dot_dimension_numbers<[1], [0], [0], [1], [0, 0, 1, 1], [], []>} : vector<8x128xf32>, vector<128x512xf32>, vector<8x512xf32> -> vector<8x512xf32>
    %352 = arith.addf %350, %351 : vector<8x512xf32>
    %353 = math.tanh %352 : vector<8x512xf32>
    %354 = vector.extract_strided_slice %353 {offsets = [0, 0], sizes = [8, 128], strides = [1, 1]} : vector<8x512xf32> to vector<8x128xf32>
    %cst_150 = arith.constant 5.000000e-01 : f32
    %355 = vector.broadcast %cst_150 : f32 to vector<8x128xf32>
    %356 = arith.mulf %355, %354 : vector<8x128xf32>
    %cst_151 = arith.constant 5.000000e-01 : f32
    %357 = vector.broadcast %cst_151 : f32 to vector<8x128xf32>
    %358 = arith.addf %356, %357 : vector<8x128xf32>
    %359 = vector.extract_strided_slice %353 {offsets = [0, 128], sizes = [8, 128], strides = [1, 1]} : vector<8x512xf32> to vector<8x128xf32>
    %cst_152 = arith.constant 5.000000e-01 : f32
    %360 = vector.broadcast %cst_152 : f32 to vector<8x128xf32>
    %361 = arith.mulf %360, %359 : vector<8x128xf32>
    %cst_153 = arith.constant 5.000000e-01 : f32
    %362 = vector.broadcast %cst_153 : f32 to vector<8x128xf32>
    %363 = arith.addf %361, %362 : vector<8x128xf32>
    %364 = vector.extract_strided_slice %353 {offsets = [0, 256], sizes = [8, 128], strides = [1, 1]} : vector<8x512xf32> to vector<8x128xf32>
    %cst_154 = arith.constant 5.000000e-01 : f32
    %365 = vector.broadcast %cst_154 : f32 to vector<8x128xf32>
    %366 = arith.mulf %365, %364 : vector<8x128xf32>
    %cst_155 = arith.constant 5.000000e-01 : f32
    %367 = vector.broadcast %cst_155 : f32 to vector<8x128xf32>
    %368 = arith.addf %366, %367 : vector<8x128xf32>
    %369 = vector.extract_strided_slice %353 {offsets = [0, 384], sizes = [8, 128], strides = [1, 1]} : vector<8x512xf32> to vector<8x128xf32>
    %370 = arith.mulf %363, %347 : vector<8x128xf32>
    %371 = arith.mulf %358, %369 : vector<8x128xf32>
    %372 = arith.addf %370, %371 : vector<8x128xf32>
    %373 = math.tanh %372 : vector<8x128xf32>
    %374 = arith.mulf %368, %373 : vector<8x128xf32>
    %c48_156 = arith.constant 48 : index
    %c0_157 = arith.constant 0 : index
    %375 = vector.load %arg10[%c48_156, %c0_157] : memref<64x512xf32, #tpu.memory_space<vmem>>, vector<8x512xf32>
    %cst_158 = arith.constant dense<0.000000e+00> : vector<8x512xf32>
    %376 = tpu.matmul %374, %224, %cst_158 {dimension_numbers = #tpu.dot_dimension_numbers<[1], [0], [0], [1], [0, 0, 1, 1], [], []>} : vector<8x128xf32>, vector<128x512xf32>, vector<8x512xf32> -> vector<8x512xf32>
    %377 = arith.addf %375, %376 : vector<8x512xf32>
    %378 = math.tanh %377 : vector<8x512xf32>
    %379 = vector.extract_strided_slice %378 {offsets = [0, 0], sizes = [8, 128], strides = [1, 1]} : vector<8x512xf32> to vector<8x128xf32>
    %cst_159 = arith.constant 5.000000e-01 : f32
    %380 = vector.broadcast %cst_159 : f32 to vector<8x128xf32>
    %381 = arith.mulf %380, %379 : vector<8x128xf32>
    %cst_160 = arith.constant 5.000000e-01 : f32
    %382 = vector.broadcast %cst_160 : f32 to vector<8x128xf32>
    %383 = arith.addf %381, %382 : vector<8x128xf32>
    %384 = vector.extract_strided_slice %378 {offsets = [0, 128], sizes = [8, 128], strides = [1, 1]} : vector<8x512xf32> to vector<8x128xf32>
    %cst_161 = arith.constant 5.000000e-01 : f32
    %385 = vector.broadcast %cst_161 : f32 to vector<8x128xf32>
    %386 = arith.mulf %385, %384 : vector<8x128xf32>
    %cst_162 = arith.constant 5.000000e-01 : f32
    %387 = vector.broadcast %cst_162 : f32 to vector<8x128xf32>
    %388 = arith.addf %386, %387 : vector<8x128xf32>
    %389 = vector.extract_strided_slice %378 {offsets = [0, 256], sizes = [8, 128], strides = [1, 1]} : vector<8x512xf32> to vector<8x128xf32>
    %cst_163 = arith.constant 5.000000e-01 : f32
    %390 = vector.broadcast %cst_163 : f32 to vector<8x128xf32>
    %391 = arith.mulf %390, %389 : vector<8x128xf32>
    %cst_164 = arith.constant 5.000000e-01 : f32
    %392 = vector.broadcast %cst_164 : f32 to vector<8x128xf32>
    %393 = arith.addf %391, %392 : vector<8x128xf32>
    %394 = vector.extract_strided_slice %378 {offsets = [0, 384], sizes = [8, 128], strides = [1, 1]} : vector<8x512xf32> to vector<8x128xf32>
    %395 = arith.mulf %388, %372 : vector<8x128xf32>
    %396 = arith.mulf %383, %394 : vector<8x128xf32>
    %397 = arith.addf %395, %396 : vector<8x128xf32>
    %398 = math.tanh %397 : vector<8x128xf32>
    %399 = arith.mulf %393, %398 : vector<8x128xf32>
    %c56_165 = arith.constant 56 : index
    %c0_166 = arith.constant 0 : index
    %400 = vector.load %arg10[%c56_165, %c0_166] : memref<64x512xf32, #tpu.memory_space<vmem>>, vector<8x512xf32>
    %cst_167 = arith.constant dense<0.000000e+00> : vector<8x512xf32>
    %401 = tpu.matmul %399, %224, %cst_167 {dimension_numbers = #tpu.dot_dimension_numbers<[1], [0], [0], [1], [0, 0, 1, 1], [], []>} : vector<8x128xf32>, vector<128x512xf32>, vector<8x512xf32> -> vector<8x512xf32>
    %402 = arith.addf %400, %401 : vector<8x512xf32>
    %403 = math.tanh %402 : vector<8x512xf32>
    %404 = vector.extract_strided_slice %403 {offsets = [0, 0], sizes = [8, 128], strides = [1, 1]} : vector<8x512xf32> to vector<8x128xf32>
    %cst_168 = arith.constant 5.000000e-01 : f32
    %405 = vector.broadcast %cst_168 : f32 to vector<8x128xf32>
    %406 = arith.mulf %405, %404 : vector<8x128xf32>
    %cst_169 = arith.constant 5.000000e-01 : f32
    %407 = vector.broadcast %cst_169 : f32 to vector<8x128xf32>
    %408 = arith.addf %406, %407 : vector<8x128xf32>
    %409 = vector.extract_strided_slice %403 {offsets = [0, 128], sizes = [8, 128], strides = [1, 1]} : vector<8x512xf32> to vector<8x128xf32>
    %cst_170 = arith.constant 5.000000e-01 : f32
    %410 = vector.broadcast %cst_170 : f32 to vector<8x128xf32>
    %411 = arith.mulf %410, %409 : vector<8x128xf32>
    %cst_171 = arith.constant 5.000000e-01 : f32
    %412 = vector.broadcast %cst_171 : f32 to vector<8x128xf32>
    %413 = arith.addf %411, %412 : vector<8x128xf32>
    %414 = vector.extract_strided_slice %403 {offsets = [0, 256], sizes = [8, 128], strides = [1, 1]} : vector<8x512xf32> to vector<8x128xf32>
    %cst_172 = arith.constant 5.000000e-01 : f32
    %415 = vector.broadcast %cst_172 : f32 to vector<8x128xf32>
    %416 = arith.mulf %415, %414 : vector<8x128xf32>
    %cst_173 = arith.constant 5.000000e-01 : f32
    %417 = vector.broadcast %cst_173 : f32 to vector<8x128xf32>
    %418 = arith.addf %416, %417 : vector<8x128xf32>
    %419 = vector.extract_strided_slice %403 {offsets = [0, 384], sizes = [8, 128], strides = [1, 1]} : vector<8x512xf32> to vector<8x128xf32>
    %420 = arith.mulf %413, %397 : vector<8x128xf32>
    %421 = arith.mulf %408, %419 : vector<8x128xf32>
    %422 = arith.addf %420, %421 : vector<8x128xf32>
    %423 = math.tanh %422 : vector<8x128xf32>
    %424 = arith.mulf %418, %423 : vector<8x128xf32>
    %c0_174 = arith.constant 0 : index
    %c0_175 = arith.constant 0 : index
    %425 = vector.load %arg7[%c0_174, %c0_175] : memref<128x128xf32, #tpu.memory_space<vmem>>, vector<128x128xf32>
    %cst_176 = arith.constant dense<0.000000e+00> : vector<8x128xf32>
    %426 = tpu.matmul %424, %425, %cst_176 {dimension_numbers = #tpu.dot_dimension_numbers<[1], [0], [0], [1], [0, 0, 1, 1], [], []>} : vector<8x128xf32>, vector<128x128xf32>, vector<8x128xf32> -> vector<8x128xf32>
    %c0_177 = arith.constant 0 : index
    %c0_178 = arith.constant 0 : index
    %427 = vector.load %arg8[%c0_177, %c0_178] : memref<1x128xf32, #tpu.memory_space<vmem>>, vector<1x128xf32>
    %428 = vector.broadcast %427 : vector<1x128xf32> to vector<8x128xf32>
    %429 = arith.addf %426, %428 : vector<8x128xf32>
    %c0_179 = arith.constant 0 : index
    %c0_180 = arith.constant 0 : index
    %430 = vector.load %arg9[%c0_179, %c0_180] : memref<8x128xf32, #tpu.memory_space<vmem>>, vector<8x128xf32>
    tpu.vector_store %arg9[%c0_179, %c0_180], %429 {strides = array<i32>} : memref<8x128xf32, #tpu.memory_space<vmem>>, vector<8x128xf32>,
    return
  }
}

</mosaic_0001>

<llo_original>
// kernel: tpu_custom_call.1
$region0: #{tpu_custom_call.1}
  #allocation0 [shape = 'u32[]', space=smem, size = 0x4, offset = 0x4, fixed_abs, tag = 'smem constant byte address 0x4 - core index']
  #allocation1 [shape = 'u32[144,128]{1,0:T(1,128)}', space=vmem, size = 0x12000, scoped, tag = 'internal scratch']
  #allocation2 [shape = 'f32[64,512]{1,0:T(8,128)}', space=vmem, size = 0x20000, scoped, tag = 'scratch operand']
  #allocation3 [shape = 'f32[64,128]{1,0:T(8,128)}', space=vmem, size = 0x8000, scoped, tag = 'scratch operand']
  %s0 = inlined_call_operand.hbm [shape: f32[64,128], index: 0, kind: input, shape index: {}]
  %s1 = inlined_call_operand.hbm [shape: f32[128,512], index: 1, kind: input, shape index: {}]
  %s2 = inlined_call_operand.hbm [shape: f32[128,512], index: 2, kind: input, shape index: {}]
  %s3 = inlined_call_operand.vmem [shape: f32[1,512], index: 3, kind: input, shape index: {}]
  %s4 = inlined_call_operand.hbm [shape: f32[128,512], index: 4, kind: input, shape index: {}]
  %s5 = inlined_call_operand.hbm [shape: f32[128,512], index: 5, kind: input, shape index: {}]
  %s6 = inlined_call_operand.vmem [shape: f32[1,512], index: 6, kind: input, shape index: {}]
  %s7 = inlined_call_operand.hbm [shape: f32[128,128], index: 7, kind: input, shape index: {}]
  %s8 = inlined_call_operand.vmem [shape: f32[1,128], index: 8, kind: input, shape index: {}]
  %s9 = inlined_call_operand.hbm [shape: f32[8,128], index: 9, kind: output, shape index: {}]
  %s10 = sld [smem:[#allocation0]]
  $region70: #{tpu_custom_call.1} parent=0
    _
  %s12 = ssub.s32 1, %s10
  %s13 = scalar_select 0, %s12, %s10
  $region1: #{tpu_custom_call.1} parent=0
    #allocation4 [shape = 'u8[32768]{0}', space=vmem, size = 0x8000, scoped, tag = 'input window, operand 0, single buffered']
    #allocation5 [shape = 's32[1]{0}', space=sflag, size = 0x4, scoped, tag = 'scoped memory for tpu_custom_call.1']
    #allocation6 [shape = 's32[1]{0}', space=sflag, size = 0x4, scoped, tag = 'scoped memory for tpu_custom_call.1']
    #allocation7 [shape = 'u8[262144]{0}', space=vmem, size = 0x40000, scoped, tag = 'input window, operand 1, single buffered']
    #allocation8 [shape = 's32[1]{0}', space=sflag, size = 0x4, scoped, tag = 'scoped memory for tpu_custom_call.1']
    #allocation9 [shape = 'u8[262144]{0}', space=vmem, size = 0x40000, scoped, tag = 'input window, operand 2, single buffered']
    #allocation10 [shape = 'u8[262144]{0}', space=vmem, size = 0x40000, scoped, tag = 'input window, operand 4, single buffered']
    #allocation11 [shape = 's32[1]{0}', space=sflag, size = 0x4, scoped, tag = 'scoped memory for tpu_custom_call.1']
    #allocation12 [shape = 'u8[262144]{0}', space=vmem, size = 0x40000, scoped, tag = 'input window, operand 5, single buffered']
    #allocation13 [shape = 'u8[65536]{0}', space=vmem, size = 0x10000, scoped, tag = 'input window, operand 7, single buffered']
    #allocation14 [shape = 's32[1]{0}', space=sflag, size = 0x4, scoped, tag = 'scoped memory for tpu_custom_call.1']
    #allocation15 [shape = 'u8[4096]{0}', space=vmem, size = 0x1000, scoped, tag = 'output window, operand 0, single buffered']
    %14 = vsyncpa [#allocation5], 0
    %15 = vsyncpa [#allocation8], 0
    %16 = vsyncpa [#allocation11], 0
    %17 = vsyncpa [#allocation14], 0
    %18 = vsyncpa [#allocation6], 0
    // Predicated region
    $region2: #{tpu_custom_call.1} parent=1 // pred_check
      _
    $region3: #{tpu_custom_call.1} parent=1 // pred_check_branch
      %20 = sbr.rel (0) target = $region5
    $region4: #{tpu_custom_call.1} parent=1 // pred_region
      %s22 = ssub.s32 1024, 1024
      %23 = vsyncadd [#allocation5], %s22
      %s24 = sshll.u32 [#allocation4], 4
      %s25 = int_to_ptr.vmem [resolvable:$true] %s24
      %30 = dma.hbm_to_vmem [thread:$0]  %s0, 1024, %s25, [#allocation5], 128, 128, 8
    $region5: #{tpu_custom_call.1} parent=1 // pred_fallthru
      _
    // Predicated region
    $region6: #{tpu_custom_call.1} parent=1 // pred_check
      _
    $region7: #{tpu_custom_call.1} parent=1 // pred_check_branch
      %32 = sbr.rel (0) target = $region9
    $region8: #{tpu_custom_call.1} parent=1 // pred_region
      %s34 = ssub.s32 8192, 8192
      %35 = vsyncadd [#allocation8], %s34
      %s36 = sshll.u32 [#allocation7], 4
      %s37 = int_to_ptr.vmem [resolvable:$true] %s36
      %42 = dma.hbm_to_vmem [thread:$0]  %s1, 8192, %s37, [#allocation8], 512, 512, 32
    $region9: #{tpu_custom_call.1} parent=1 // pred_fallthru
      _
    // Predicated region
    $region10: #{tpu_custom_call.1} parent=1 // pred_check
      _
    $region11: #{tpu_custom_call.1} parent=1 // pred_check_branch
      %44 = sbr.rel (0) target = $region13
    $region12: #{tpu_custom_call.1} parent=1 // pred_region
      %s46 = ssub.s32 8192, 8192
      %47 = vsyncadd [#allocation8], %s46
      %s48 = sshll.u32 [#allocation9], 4
      %s49 = int_to_ptr.vmem [resolvable:$true] %s48
      %54 = dma.hbm_to_vmem [thread:$0]  %s2, 8192, %s49, [#allocation8], 512, 512, 32
    $region13: #{tpu_custom_call.1} parent=1 // pred_fallthru
      _
    // Predicated region
    $region14: #{tpu_custom_call.1} parent=1 // pred_check
      _
    $region15: #{tpu_custom_call.1} parent=1 // pred_check_branch
      %56 = sbr.rel (0) target = $region17
    $region16: #{tpu_custom_call.1} parent=1 // pred_region
      _
    $region17: #{tpu_custom_call.1} parent=1 // pred_fallthru
      _
    // Predicated region
    $region18: #{tpu_custom_call.1} parent=1 // pred_check
      _
    $region19: #{tpu_custom_call.1} parent=1 // pred_check_branch
      %58 = sbr.rel (0) target = $region21
    $region20: #{tpu_custom_call.1} parent=1 // pred_region
      %s60 = ssub.s32 8192, 8192
      %61 = vsyncadd [#allocation11], %s60
      %s62 = sshll.u32 [#allocation10], 4
      %s63 = int_to_ptr.vmem [resolvable:$true] %s62
      %68 = dma.hbm_to_vmem [thread:$0]  %s4, 8192, %s63, [#allocation11], 512, 512, 32
    $region21: #{tpu_custom_call.1} parent=1 // pred_fallthru
      _
    // Predicated region
    $region22: #{tpu_custom_call.1} parent=1 // pred_check
      _
    $region23: #{tpu_custom_call.1} parent=1 // pred_check_branch
      %70 = sbr.rel (0) target = $region25
    $region24: #{tpu_custom_call.1} parent=1 // pred_region
      %s72 = ssub.s32 8192, 8192
      %73 = vsyncadd [#allocation11], %s72
      %s74 = sshll.u32 [#allocation12], 4
      %s75 = int_to_ptr.vmem [resolvable:$true] %s74
      %80 = dma.hbm_to_vmem [thread:$0]  %s5, 8192, %s75, [#allocation11], 512, 512, 32
    $region25: #{tpu_custom_call.1} parent=1 // pred_fallthru
      _
    // Predicated region
    $region26: #{tpu_custom_call.1} parent=1 // pred_check
      _
    $region27: #{tpu_custom_call.1} parent=1 // pred_check_branch
      %82 = sbr.rel (0) target = $region29
    $region28: #{tpu_custom_call.1} parent=1 // pred_region
      _
    $region29: #{tpu_custom_call.1} parent=1 // pred_fallthru
      _
    // Predicated region
    $region30: #{tpu_custom_call.1} parent=1 // pred_check
      _
    $region31: #{tpu_custom_call.1} parent=1 // pred_check_branch
      %84 = sbr.rel (0) target = $region33
    $region32: #{tpu_custom_call.1} parent=1 // pred_region
      %s86 = ssub.s32 2048, 2048
      %87 = vsyncadd [#allocation14], %s86
      %s88 = sshll.u32 [#allocation13], 4
      %s89 = int_to_ptr.vmem [resolvable:$true] %s88
      %94 = dma.hbm_to_vmem [thread:$0]  %s7, 2048, %s89, [#allocation14], 128, 128, 8
    $region33: #{tpu_custom_call.1} parent=1 // pred_fallthru
      _
    // Predicated region
    $region34: #{tpu_custom_call.1} parent=1 // pred_check
      _
    $region35: #{tpu_custom_call.1} parent=1 // pred_check_branch
      %96 = sbr.rel (0) target = $region37
    $region36: #{tpu_custom_call.1} parent=1 // pred_region
      _
    $region37: #{tpu_custom_call.1} parent=1 // pred_fallthru
      _
    // Predicated region
    $region38: #{tpu_custom_call.1} parent=1 // pred_check
      _
    $region39: #{tpu_custom_call.1} parent=1 // pred_check_branch
      %98 = sbr.rel (0) target = $region41
    $region40: #{tpu_custom_call.1} parent=1 // pred_region
      %99 = dma.done [#allocation5], 1024
    $region41: #{tpu_custom_call.1} parent=1 // pred_fallthru
      _
    // Predicated region
    $region42: #{tpu_custom_call.1} parent=1 // pred_check
      _
    $region43: #{tpu_custom_call.1} parent=1 // pred_check_branch
      %101 = sbr.rel (0) target = $region45
    $region44: #{tpu_custom_call.1} parent=1 // pred_region
      %102 = dma.done [#allocation8], 8192
    $region45: #{tpu_custom_call.1} parent=1 // pred_fallthru
      _
    // Predicated region
    $region46: #{tpu_custom_call.1} parent=1 // pred_check
      _
    $region47: #{tpu_custom_call.1} parent=1 // pred_check_branch
      %104 = sbr.rel (0) target = $region49
    $region48: #{tpu_custom_call.1} parent=1 // pred_region
      %105 = dma.done [#allocation8], 8192
    $region49: #{tpu_custom_call.1} parent=1 // pred_fallthru
      _
    // Predicated region
    $region50: #{tpu_custom_call.1} parent=1 // pred_check
      _
    $region51: #{tpu_custom_call.1} parent=1 // pred_check_branch
      %107 = sbr.rel (0) target = $region53
    $region52: #{tpu_custom_call.1} parent=1 // pred_region
      %108 = dma.done [#allocation11], 8192
    $region53: #{tpu_custom_call.1} parent=1 // pred_fallthru
      _
    // Predicated region
    $region54: #{tpu_custom_call.1} parent=1 // pred_check
      _
    $region55: #{tpu_custom_call.1} parent=1 // pred_check_branch
      %110 = sbr.rel (0) target = $region57
    $region56: #{tpu_custom_call.1} parent=1 // pred_region
      %111 = dma.done [#allocation11], 8192
    $region57: #{tpu_custom_call.1} parent=1 // pred_fallthru
      _
    // Predicated region
    $region58: #{tpu_custom_call.1} parent=1 // pred_check
      _
    $region59: #{tpu_custom_call.1} parent=1 // pred_check_branch
      %113 = sbr.rel (0) target = $region61
    $region60: #{tpu_custom_call.1} parent=1 // pred_region
      %114 = dma.done [#allocation14], 2048
    $region61: #{tpu_custom_call.1} parent=1 // pred_fallthru
      _
    %v115 = vld [vmem:[#allocation4] sm:$0xff]
    %v116 = vld [vmem:[#allocation4 + $0x8] sm:$0xff]
    %v117 = vld [vmem:[#allocation4 + $0x10] sm:$0xff]
    %v118 = vld [vmem:[#allocation4 + $0x18] sm:$0xff]
    %v119 = vld [vmem:[#allocation4 + $0x20] sm:$0xff]
    %v120 = vld [vmem:[#allocation4 + $0x28] sm:$0xff]
    %v121 = vld [vmem:[#allocation4 + $0x30] sm:$0xff]
    %v122 = vld [vmem:[#allocation4 + $0x38] sm:$0xff]
    %v123 = vld [vmem:[#allocation7] sm:$0xff]
    %v124 = vld [vmem:[#allocation7 + $0x8] sm:$0xff]
    %v125 = vld [vmem:[#allocation7 + $0x10] sm:$0xff]
    %v126 = vld [vmem:[#allocation7 + $0x18] sm:$0xff]
    %v127 = vld [vmem:[#allocation7 + $0x20] sm:$0xff]
    %v128 = vld [vmem:[#allocation7 + $0x28] sm:$0xff]
    %v129 = vld [vmem:[#allocation7 + $0x30] sm:$0xff]
    %v130 = vld [vmem:[#allocation7 + $0x38] sm:$0xff]
    %v131 = vld [vmem:[#allocation7 + $0x40] sm:$0xff]
    %v132 = vld [vmem:[#allocation7 + $0x48] sm:$0xff]
    %v133 = vld [vmem:[#allocation7 + $0x50] sm:$0xff]
    %v134 = vld [vmem:[#allocation7 + $0x58] sm:$0xff]
    %v135 = vld [vmem:[#allocation7 + $0x60] sm:$0xff]
    %v136 = vld [vmem:[#allocation7 + $0x68] sm:$0xff]
    %v137 = vld [vmem:[#allocation7 + $0x70] sm:$0xff]
    %v138 = vld [vmem:[#allocation7 + $0x78] sm:$0xff]
    %v139 = vld [vmem:[#allocation7 + $0x80] sm:$0xff]
    %v140 = vld [vmem:[#allocation7 + $0x88] sm:$0xff]
    %v141 = vld [vmem:[#allocation7 + $0x90] sm:$0xff]
    %v142 = vld [vmem:[#allocation7 + $0x98] sm:$0xff]
    %v143 = vld [vmem:[#allocation7 + $0xa0] sm:$0xff]
    %v144 = vld [vmem:[#allocation7 + $0xa8] sm:$0xff]
    %v145 = vld [vmem:[#allocation7 + $0xb0] sm:$0xff]
    %v146 = vld [vmem:[#allocation7 + $0xb8] sm:$0xff]
    %v147 = vld [vmem:[#allocation7 + $0xc0] sm:$0xff]
    %v148 = vld [vmem:[#allocation7 + $0xc8] sm:$0xff]
    %v149 = vld [vmem:[#allocation7 + $0xd0] sm:$0xff]
    %v150 = vld [vmem:[#allocation7 + $0xd8] sm:$0xff]
    %v151 = vld [vmem:[#allocation7 + $0xe0] sm:$0xff]
    %v152 = vld [vmem:[#allocation7 + $0xe8] sm:$0xff]
    %v153 = vld [vmem:[#allocation7 + $0xf0] sm:$0xff]
    %v154 = vld [vmem:[#allocation7 + $0xf8] sm:$0xff]
    %v155 = vld [vmem:[#allocation7 + $0x100] sm:$0xff]
    %v156 = vld [vmem:[#allocation7 + $0x108] sm:$0xff]
    %v157 = vld [vmem:[#allocation7 + $0x110] sm:$0xff]
    %v158 = vld [vmem:[#allocation7 + $0x118] sm:$0xff]
    %v159 = vld [vmem:[#allocation7 + $0x120] sm:$0xff]
    %v160 = vld [vmem:[#allocation7 + $0x128] sm:$0xff]
    %v161 = vld [vmem:[#allocation7 + $0x130] sm:$0xff]
    %v162 = vld [vmem:[#allocation7 + $0x138] sm:$0xff]
    %v163 = vld [vmem:[#allocation7 + $0x140] sm:$0xff]
    %v164 = vld [vmem:[#allocation7 + $0x148] sm:$0xff]
    %v165 = vld [vmem:[#allocation7 + $0x150] sm:$0xff]
    %v166 = vld [vmem:[#allocation7 + $0x158] sm:$0xff]
    %v167 = vld [vmem:[#allocation7 + $0x160] sm:$0xff]
    %v168 = vld [vmem:[#allocation7 + $0x168] sm:$0xff]
    %v169 = vld [vmem:[#allocation7 + $0x170] sm:$0xff]
    %v170 = vld [vmem:[#allocation7 + $0x178] sm:$0xff]
    %v171 = vld [vmem:[#allocation7 + $0x180] sm:$0xff]
    %v172 = vld [vmem:[#allocation7 + $0x188] sm:$0xff]
    %v173 = vld [vmem:[#allocation7 + $0x190] sm:$0xff]
    %v174 = vld [vmem:[#allocation7 + $0x198] sm:$0xff]
    %v175 = vld [vmem:[#allocation7 + $0x1a0] sm:$0xff]
    %v176 = vld [vmem:[#allocation7 + $0x1a8] sm:$0xff]
    %v177 = vld [vmem:[#allocation7 + $0x1b0] sm:$0xff]
    %v178 = vld [vmem:[#allocation7 + $0x1b8] sm:$0xff]
    %v179 = vld [vmem:[#allocation7 + $0x1c0] sm:$0xff]
    %v180 = vld [vmem:[#allocation7 + $0x1c8] sm:$0xff]
    %v181 = vld [vmem:[#allocation7 + $0x1d0] sm:$0xff]
    %v182 = vld [vmem:[#allocation7 + $0x1d8] sm:$0xff]
    %v183 = vld [vmem:[#allocation7 + $0x1e0] sm:$0xff]
    %v184 = vld [vmem:[#allocation7 + $0x1e8] sm:$0xff]
    %v185 = vld [vmem:[#allocation7 + $0x1f0] sm:$0xff]
    %v186 = vld [vmem:[#allocation7 + $0x1f8] sm:$0xff]
    %v187 = vld [vmem:[%s3] sm:$0xf]
    %v189 = vlaneseq
    %v190 = vshrl.u32 %v189, 7
    %v191 = vsub.s32 0, %v190
    %v192 = vrot.slane %v187, %v191
    %v193 = vlaneseq
    %v194 = vshrl.u32 %v193, 7
    %v195 = vsub.s32 1, %v194
    %v196 = vrot.slane %v187, %v195
    %v197 = vlaneseq
    %v198 = vshrl.u32 %v197, 7
    %v199 = vsub.s32 2, %v198
    %v200 = vrot.slane %v187, %v199
    %v201 = vlaneseq
    %v202 = vshrl.u32 %v201, 7
    %v203 = vsub.s32 3, %v202
    %v204 = vrot.slane %v187, %v203
    %209 = vmatprep.subr.mxu0 %v184
    %210 = vmatpush1.msra.mxu0 %v183
    %211 = vmatprep.subr.mxu0 %v180
    %212 = vmatpush1.msra.mxu0 %v179
    %213 = vmatprep.subr.mxu0 %v176
    %214 = vmatpush1.msra.mxu0 %v175
    %215 = vmatprep.subr.mxu0 %v172
    %216 = vmatpush1.msra.mxu0 %v171
    %217 = vmatprep.subr.mxu0 %v168
    %218 = vmatpush1.msra.mxu0 %v167
    %219 = vmatprep.subr.mxu0 %v164
    %220 = vmatpush1.msra.mxu0 %v163
    %221 = vmatprep.subr.mxu0 %v160
    %222 = vmatpush1.msra.mxu0 %v159
    %223 = vmatprep.subr.mxu0 %v156
    %224 = vmatpush1.msra.mxu0 %v155
    %225 = vmatprep.subr.mxu0 %v152
    %226 = vmatpush1.msra.mxu0 %v151
    %227 = vmatprep.subr.mxu0 %v148
    %228 = vmatpush1.msra.mxu0 %v147
    %229 = vmatprep.subr.mxu0 %v144
    %230 = vmatpush1.msra.mxu0 %v143
    %231 = vmatprep.subr.mxu0 %v140
    %232 = vmatpush1.msra.mxu0 %v139
    %233 = vmatprep.subr.mxu0 %v136
    %234 = vmatpush1.msra.mxu0 %v135
    %235 = vmatprep.subr.mxu0 %v132
    %236 = vmatpush1.msra.mxu0 %v131
    %237 = vmatprep.subr.mxu0 %v128
    %238 = vmatpush1.msra.mxu0 %v127
    %239 = vmatprep.subr.mxu0 %v124
    %240 = vmatpush1.msra.mxu0 %v123
    %241 = vmatprep.subr.mxu0 0.0
    %242 = vmatpush2.msra.mxu0 0.0
    %243 = vmatprep.subr.mxu0 0.0
    %244 = vmatpush2.msra.mxu0 0.0
    %245 = vmatprep.subr.mxu0 0.0
    %246 = vmatpush2.msra.mxu0 0.0
    %247 = vmatprep.subr.mxu0 0.0
    %248 = vmatpush2.msra.mxu0 0.0
    %249 = vmatprep.subr.mxu0 0.0
    %250 = vmatpush2.msra.mxu0 0.0
    %251 = vmatprep.subr.mxu0 0.0
    %252 = vmatpush2.msra.mxu0 0.0
    %253 = vmatprep.subr.mxu0 0.0
    %254 = vmatpush2.msra.mxu0 0.0
    %255 = vmatprep.subr.mxu0 0.0
    %256 = vmatpush2.msra.mxu0 0.0
    %257 = vmatprep.subr.mxu0 0.0
    %258 = vmatpush2.msra.mxu0 0.0
    %259 = vmatprep.subr.mxu0 0.0
    %260 = vmatpush2.msra.mxu0 0.0
    %261 = vmatprep.subr.mxu0 0.0
    %262 = vmatpush2.msra.mxu0 0.0
    %263 = vmatprep.subr.mxu0 0.0
    %264 = vmatpush2.msra.mxu0 0.0
    %265 = vmatprep.subr.mxu0 0.0
    %266 = vmatpush2.msra.mxu0 0.0
    %267 = vmatprep.subr.mxu0 0.0
    %268 = vmatpush2.msra.mxu0 0.0
    %269 = vmatprep.subr.mxu0 0.0
    %270 = vmatpush2.msra.mxu0 0.0
    %271 = vmatprep.subr.mxu0 0.0
    %272 = vmatpush2.msra.mxu0 0.0
    %273 = vmatprep.mubr.f32.mxu0 0.0
    %274 = vmatmul.mubr.f32.gmra.mxu0 %v115
    %v275 = vpop.f32.mrf.mxu0
    %v276 = vadd.f32 %v192, %v275
    %v277 = vpop.f32.mrf.mxu0
    %v278 = vadd.f32 %v196, %v277
    %279 = vmatprep.mubr.f32.mxu0 0.0
    %280 = vmatmul.mubr.f32.gmra.mxu0 %v116
    %v281 = vpop.f32.mrf.mxu0
    %v282 = vadd.f32 %v192, %v281
    %v283 = vpop.f32.mrf.mxu0
    %v284 = vadd.f32 %v196, %v283
    %285 = vmatprep.mubr.f32.mxu0 0.0
    %286 = vmatmul.mubr.f32.gmra.mxu0 %v117
    %v287 = vpop.f32.mrf.mxu0
    %v288 = vadd.f32 %v192, %v287
    %v289 = vpop.f32.mrf.mxu0
    %v290 = vadd.f32 %v196, %v289
    %291 = vmatprep.mubr.f32.mxu0 0.0
    %292 = vmatmul.mubr.f32.gmra.mxu0 %v118
    %v293 = vpop.f32.mrf.mxu0
    %v294 = vadd.f32 %v192, %v293
    %v295 = vpop.f32.mrf.mxu0
    %v296 = vadd.f32 %v196, %v295
    %297 = vmatprep.mubr.f32.mxu0 0.0
    %298 = vmatmul.mubr.f32.gmra.mxu0 %v119
    %v299 = vpop.f32.mrf.mxu0
    %v300 = vadd.f32 %v192, %v299
    %v301 = vpop.f32.mrf.mxu0
    %v302 = vadd.f32 %v196, %v301
    %303 = vmatprep.mubr.f32.mxu0 0.0
    %304 = vmatmul.mubr.f32.gmra.mxu0 %v120
    %v305 = vpop.f32.mrf.mxu0
    %v306 = vadd.f32 %v192, %v305
    %v307 = vpop.f32.mrf.mxu0
    %v308 = vadd.f32 %v196, %v307
    %309 = vmatprep.mubr.f32.mxu0 0.0
    %310 = vmatmul.mubr.f32.gmra.mxu0 %v121
    %v311 = vpop.f32.mrf.mxu0
    %v312 = vadd.f32 %v192, %v311
    %v313 = vpop.f32.mrf.mxu0
    %v314 = vadd.f32 %v196, %v313
    %315 = vmatprep.mubr.f32.mxu0 0.0
    %316 = vmatmul.mubr.f32.gmra.mxu0 %v122
    %v317 = vpop.f32.mrf.mxu0
    %v318 = vadd.f32 %v192, %v317
    %v319 = vpop.f32.mrf.mxu0
    %v320 = vadd.f32 %v196, %v319
    %321 = vdwg.mxu0
    %322 = vmatprep.subr.mxu0 %v186
    %323 = vmatpush1.msra.mxu0 %v185
    %324 = vmatprep.subr.mxu0 %v182
    %325 = vmatpush1.msra.mxu0 %v181
    %326 = vmatprep.subr.mxu0 %v178
    %327 = vmatpush1.msra.mxu0 %v177
    %328 = vmatprep.subr.mxu0 %v174
    %329 = vmatpush1.msra.mxu0 %v173
    %330 = vmatprep.subr.mxu0 %v170
    %331 = vmatpush1.msra.mxu0 %v169
    %332 = vmatprep.subr.mxu0 %v166
    %333 = vmatpush1.msra.mxu0 %v165
    %334 = vmatprep.subr.mxu0 %v162
    %335 = vmatpush1.msra.mxu0 %v161
    %336 = vmatprep.subr.mxu0 %v158
    %337 = vmatpush1.msra.mxu0 %v157
    %338 = vmatprep.subr.mxu0 %v154
    %339 = vmatpush1.msra.mxu0 %v153
    %340 = vmatprep.subr.mxu0 %v150
    %341 = vmatpush1.msra.mxu0 %v149
    %342 = vmatprep.subr.mxu0 %v146
    %343 = vmatpush1.msra.mxu0 %v145
    %344 = vmatprep.subr.mxu0 %v142
    %345 = vmatpush1.msra.mxu0 %v141
    %346 = vmatprep.subr.mxu0 %v138
    %347 = vmatpush1.msra.mxu0 %v137
    %348 = vmatprep.subr.mxu0 %v134
    %349 = vmatpush1.msra.mxu0 %v133
    %350 = vmatprep.subr.mxu0 %v130
    %351 = vmatpush1.msra.mxu0 %v129
    %352 = vmatprep.subr.mxu0 %v126
    %353 = vmatpush1.msra.mxu0 %v125
    %354 = vmatprep.subr.mxu0 0.0
    %355 = vmatpush2.msra.mxu0 0.0
    %356 = vmatprep.subr.mxu0 0.0
    %357 = vmatpush2.msra.mxu0 0.0
    %358 = vmatprep.subr.mxu0 0.0
    %359 = vmatpush2.msra.mxu0 0.0
    %360 = vmatprep.subr.mxu0 0.0
    %361 = vmatpush2.msra.mxu0 0.0
    %362 = vmatprep.subr.mxu0 0.0
    %363 = vmatpush2.msra.mxu0 0.0
    %364 = vmatprep.subr.mxu0 0.0
    %365 = vmatpush2.msra.mxu0 0.0
    %366 = vmatprep.subr.mxu0 0.0
    %367 = vmatpush2.msra.mxu0 0.0
    %368 = vmatprep.subr.mxu0 0.0
    %369 = vmatpush2.msra.mxu0 0.0
    %370 = vmatprep.subr.mxu0 0.0
    %371 = vmatpush2.msra.mxu0 0.0
    %372 = vmatprep.subr.mxu0 0.0
    %373 = vmatpush2.msra.mxu0 0.0
    %374 = vmatprep.subr.mxu0 0.0
    %375 = vmatpush2.msra.mxu0 0.0
    %376 = vmatprep.subr.mxu0 0.0
    %377 = vmatpush2.msra.mxu0 0.0
    %378 = vmatprep.subr.mxu0 0.0
    %379 = vmatpush2.msra.mxu0 0.0
    %380 = vmatprep.subr.mxu0 0.0
    %381 = vmatpush2.msra.mxu0 0.0
    %382 = vmatprep.subr.mxu0 0.0
    %383 = vmatpush2.msra.mxu0 0.0
    %384 = vmatprep.subr.mxu0 0.0
    %385 = vmatpush2.msra.mxu0 0.0
    %386 = vmatprep.mubr.f32.mxu0 0.0
    %387 = vmatmul.mubr.f32.gmra.mxu0 %v115
    %v388 = vpop.f32.mrf.mxu0
    %v389 = vadd.f32 %v200, %v388
    %v390 = vpop.f32.mrf.mxu0
    %v391 = vadd.f32 %v204, %v390
    %392 = vmatprep.mubr.f32.mxu0 0.0
    %393 = vmatmul.mubr.f32.gmra.mxu0 %v116
    %v394 = vpop.f32.mrf.mxu0
    %v395 = vadd.f32 %v200, %v394
    %v396 = vpop.f32.mrf.mxu0
    %v397 = vadd.f32 %v204, %v396
    %398 = vmatprep.mubr.f32.mxu0 0.0
    %399 = vmatmul.mubr.f32.gmra.mxu0 %v117
    %v400 = vpop.f32.mrf.mxu0
    %v401 = vadd.f32 %v200, %v400
    %v402 = vpop.f32.mrf.mxu0
    %v403 = vadd.f32 %v204, %v402
    %404 = vmatprep.mubr.f32.mxu0 0.0
    %405 = vmatmul.mubr.f32.gmra.mxu0 %v118
    %v406 = vpop.f32.mrf.mxu0
    %v407 = vadd.f32 %v200, %v406
    %v408 = vpop.f32.mrf.mxu0
    %v409 = vadd.f32 %v204, %v408
    %410 = vmatprep.mubr.f32.mxu0 0.0
    %411 = vmatmul.mubr.f32.gmra.mxu0 %v119
    %v412 = vpop.f32.mrf.mxu0
    %v413 = vadd.f32 %v200, %v412
    %v414 = vpop.f32.mrf.mxu0
    %v415 = vadd.f32 %v204, %v414
    %416 = vmatprep.mubr.f32.mxu0 0.0
    %417 = vmatmul.mubr.f32.gmra.mxu0 %v120
    %v418 = vpop.f32.mrf.mxu0
    %v419 = vadd.f32 %v200, %v418
    %v420 = vpop.f32.mrf.mxu0
    %v421 = vadd.f32 %v204, %v420
    %422 = vmatprep.mubr.f32.mxu0 0.0
    %423 = vmatmul.mubr.f32.gmra.mxu0 %v121
    %v424 = vpop.f32.mrf.mxu0
    %v425 = vadd.f32 %v200, %v424
    %v426 = vpop.f32.mrf.mxu0
    %v427 = vadd.f32 %v204, %v426
    %428 = vmatprep.mubr.f32.mxu0 0.0
    %429 = vmatmul.mubr.f32.gmra.mxu0 %v122
    %v430 = vpop.f32.mrf.mxu0
    %v431 = vadd.f32 %v200, %v430
    %v432 = vpop.f32.mrf.mxu0
    %v433 = vadd.f32 %v204, %v432
    %434 = vdwg.mxu0
    %435 = vst [vmem:[#allocation2] sm:$0xff] %v276
    %436 = vst [vmem:[#allocation2 + $0x8] sm:$0xff] %v278
    %437 = vst [vmem:[#allocation2 + $0x10] sm:$0xff] %v389
    %438 = vst [vmem:[#allocation2 + $0x18] sm:$0xff] %v391
    %439 = vst [vmem:[#allocation2 + $0x20] sm:$0xff] %v282
    %440 = vst [vmem:[#allocation2 + $0x28] sm:$0xff] %v284
    %441 = vst [vmem:[#allocation2 + $0x30] sm:$0xff] %v395
    %442 = vst [vmem:[#allocation2 + $0x38] sm:$0xff] %v397
    %443 = vst [vmem:[#allocation2 + $0x40] sm:$0xff] %v288
    %444 = vst [vmem:[#allocation2 + $0x48] sm:$0xff] %v290
    %445 = vst [vmem:[#allocation2 + $0x50] sm:$0xff] %v401
    %446 = vst [vmem:[#allocation2 + $0x58] sm:$0xff] %v403
    %447 = vst [vmem:[#allocation2 + $0x60] sm:$0xff] %v294
    %448 = vst [vmem:[#allocation2 + $0x68] sm:$0xff] %v296
    %449 = vst [vmem:[#allocation2 + $0x70] sm:$0xff] %v407
    %450 = vst [vmem:[#allocation2 + $0x78] sm:$0xff] %v409
    %451 = vst [vmem:[#allocation2 + $0x80] sm:$0xff] %v300
    %452 = vst [vmem:[#allocation2 + $0x88] sm:$0xff] %v302
    %453 = vst [vmem:[#allocation2 + $0x90] sm:$0xff] %v413
    %454 = vst [vmem:[#allocation2 + $0x98] sm:$0xff] %v415
    %455 = vst [vmem:[#allocation2 + $0xa0] sm:$0xff] %v306
    %456 = vst [vmem:[#allocation2 + $0xa8] sm:$0xff] %v308
    %457 = vst [vmem:[#allocation2 + $0xb0] sm:$0xff] %v419
    %458 = vst [vmem:[#allocation2 + $0xb8] sm:$0xff] %v421
    %459 = vst [vmem:[#allocation2 + $0xc0] sm:$0xff] %v312
    %460 = vst [vmem:[#allocation2 + $0xc8] sm:$0xff] %v314
    %461 = vst [vmem:[#allocation2 + $0xd0] sm:$0xff] %v425
    %462 = vst [vmem:[#allocation2 + $0xd8] sm:$0xff] %v427
    %463 = vst [vmem:[#allocation2 + $0xe0] sm:$0xff] %v318
    %464 = vst [vmem:[#allocation2 + $0xe8] sm:$0xff] %v320
    %465 = vst [vmem:[#allocation2 + $0xf0] sm:$0xff] %v431
    %466 = vst [vmem:[#allocation2 + $0xf8] sm:$0xff] %v433
    %v467 = vld [vmem:[#allocation9] sm:$0xff]
    %v468 = vld [vmem:[#allocation9 + $0x8] sm:$0xff]
    %v469 = vld [vmem:[#allocation9 + $0x10] sm:$0xff]
    %v470 = vld [vmem:[#allocation9 + $0x18] sm:$0xff]
    %v471 = vld [vmem:[#allocation9 + $0x20] sm:$0xff]
    %v472 = vld [vmem:[#allocation9 + $0x28] sm:$0xff]
    %v473 = vld [vmem:[#allocation9 + $0x30] sm:$0xff]
    %v474 = vld [vmem:[#allocation9 + $0x38] sm:$0xff]
    %v475 = vld [vmem:[#allocation9 + $0x40] sm:$0xff]
    %v476 = vld [vmem:[#allocation9 + $0x48] sm:$0xff]
    %v477 = vld [vmem:[#allocation9 + $0x50] sm:$0xff]
    %v478 = vld [vmem:[#allocation9 + $0x58] sm:$0xff]
    %v479 = vld [vmem:[#allocation9 + $0x60] sm:$0xff]
    %v480 = vld [vmem:[#allocation9 + $0x68] sm:$0xff]
    %v481 = vld [vmem:[#allocation9 + $0x70] sm:$0xff]
    %v482 = vld [vmem:[#allocation9 + $0x78] sm:$0xff]
    %v483 = vld [vmem:[#allocation9 + $0x80] sm:$0xff]
    %v484 = vld [vmem:[#allocation9 + $0x88] sm:$0xff]
    %v485 = vld [vmem:[#allocation9 + $0x90] sm:$0xff]
    %v486 = vld [vmem:[#allocation9 + $0x98] sm:$0xff]
    %v487 = vld [vmem:[#allocation9 + $0xa0] sm:$0xff]
    %v488 = vld [vmem:[#allocation9 + $0xa8] sm:$0xff]
    %v489 = vld [vmem:[#allocation9 + $0xb0] sm:$0xff]
    %v490 = vld [vmem:[#allocation9 + $0xb8] sm:$0xff]
    %v491 = vld [vmem:[#allocation9 + $0xc0] sm:$0xff]
    %v492 = vld [vmem:[#allocation9 + $0xc8] sm:$0xff]
    %v493 = vld [vmem:[#allocation9 + $0xd0] sm:$0xff]
    %v494 = vld [vmem:[#allocation9 + $0xd8] sm:$0xff]
    %v495 = vld [vmem:[#allocation9 + $0xe0] sm:$0xff]
    %v496 = vld [vmem:[#allocation9 + $0xe8] sm:$0xff]
    %v497 = vld [vmem:[#allocation9 + $0xf0] sm:$0xff]
    %v498 = vld [vmem:[#allocation9 + $0xf8] sm:$0xff]
    %v499 = vld [vmem:[#allocation9 + $0x100] sm:$0xff]
    %v500 = vld [vmem:[#allocation9 + $0x108] sm:$0xff]
    %v501 = vld [vmem:[#allocation9 + $0x110] sm:$0xff]
    %v502 = vld [vmem:[#allocation9 + $0x118] sm:$0xff]
    %v503 = vld [vmem:[#allocation9 + $0x120] sm:$0xff]
    %v504 = vld [vmem:[#allocation9 + $0x128] sm:$0xff]
    %v505 = vld [vmem:[#allocation9 + $0x130] sm:$0xff]
    %v506 = vld [vmem:[#allocation9 + $0x138] sm:$0xff]
    %v507 = vld [vmem:[#allocation9 + $0x140] sm:$0xff]
    %v508 = vld [vmem:[#allocation9 + $0x148] sm:$0xff]
    %v509 = vld [vmem:[#allocation9 + $0x150] sm:$0xff]
    %v510 = vld [vmem:[#allocation9 + $0x158] sm:$0xff]
    %v511 = vld [vmem:[#allocation9 + $0x160] sm:$0xff]
    %v512 = vld [vmem:[#allocation9 + $0x168] sm:$0xff]
    %v513 = vld [vmem:[#allocation9 + $0x170] sm:$0xff]
    %v514 = vld [vmem:[#allocation9 + $0x178] sm:$0xff]
    %v515 = vld [vmem:[#allocation9 + $0x180] sm:$0xff]
    %v516 = vld [vmem:[#allocation9 + $0x188] sm:$0xff]
    %v517 = vld [vmem:[#allocation9 + $0x190] sm:$0xff]
    %v518 = vld [vmem:[#allocation9 + $0x198] sm:$0xff]
    %v519 = vld [vmem:[#allocation9 + $0x1a0] sm:$0xff]
    %v520 = vld [vmem:[#allocation9 + $0x1a8] sm:$0xff]
    %v521 = vld [vmem:[#allocation9 + $0x1b0] sm:$0xff]
    %v522 = vld [vmem:[#allocation9 + $0x1b8] sm:$0xff]
    %v523 = vld [vmem:[#allocation9 + $0x1c0] sm:$0xff]
    %v524 = vld [vmem:[#allocation9 + $0x1c8] sm:$0xff]
    %v525 = vld [vmem:[#allocation9 + $0x1d0] sm:$0xff]
    %v526 = vld [vmem:[#allocation9 + $0x1d8] sm:$0xff]
    %v527 = vld [vmem:[#allocation9 + $0x1e0] sm:$0xff]
    %v528 = vld [vmem:[#allocation9 + $0x1e8] sm:$0xff]
    %v529 = vld [vmem:[#allocation9 + $0x1f0] sm:$0xff]
    %v530 = vld [vmem:[#allocation9 + $0x1f8] sm:$0xff]
    %v531 = vld [vmem:[#allocation2] sm:$0xff]
    %v532 = vld [vmem:[#allocation2 + $0x8] sm:$0xff]
    %v533 = vld [vmem:[#allocation2 + $0x10] sm:$0xff]
    %v534 = vld [vmem:[#allocation2 + $0x18] sm:$0xff]
    %535 = vmatprep.subr.mxu0 %v528
    %536 = vmatpush1.msra.mxu0 %v527
    %537 = vmatprep.subr.mxu0 %v524
    %538 = vmatpush1.msra.mxu0 %v523
    %539 = vmatprep.subr.mxu0 %v520
    %540 = vmatpush1.msra.mxu0 %v519
    %541 = vmatprep.subr.mxu0 %v516
    %542 = vmatpush1.msra.mxu0 %v515
    %543 = vmatprep.subr.mxu0 %v512
    %544 = vmatpush1.msra.mxu0 %v511
    %545 = vmatprep.subr.mxu0 %v508
    %546 = vmatpush1.msra.mxu0 %v507
    %547 = vmatprep.subr.mxu0 %v504
    %548 = vmatpush1.msra.mxu0 %v503
    %549 = vmatprep.subr.mxu0 %v500
    %550 = vmatpush1.msra.mxu0 %v499
    %551 = vmatprep.subr.mxu0 %v496
    %552 = vmatpush1.msra.mxu0 %v495
    %553 = vmatprep.subr.mxu0 %v492
    %554 = vmatpush1.msra.mxu0 %v491
    %555 = vmatprep.subr.mxu0 %v488
    %556 = vmatpush1.msra.mxu0 %v487
    %557 = vmatprep.subr.mxu0 %v484
    %558 = vmatpush1.msra.mxu0 %v483
    %559 = vmatprep.subr.mxu0 %v480
    %560 = vmatpush1.msra.mxu0 %v479
    %561 = vmatprep.subr.mxu0 %v476
    %562 = vmatpush1.msra.mxu0 %v475
    %563 = vmatprep.subr.mxu0 %v472
    %564 = vmatpush1.msra.mxu0 %v471
    %565 = vmatprep.subr.mxu0 %v468
    %566 = vmatpush1.msra.mxu0 %v467
    %567 = vmatprep.subr.mxu0 0.0
    %568 = vmatpush2.msra.mxu0 0.0
    %569 = vmatprep.subr.mxu0 0.0
    %570 = vmatpush2.msra.mxu0 0.0
    %571 = vmatprep.subr.mxu0 0.0
    %572 = vmatpush2.msra.mxu0 0.0
    %573 = vmatprep.subr.mxu0 0.0
    %574 = vmatpush2.msra.mxu0 0.0
    %575 = vmatprep.subr.mxu0 0.0
    %576 = vmatpush2.msra.mxu0 0.0
    %577 = vmatprep.subr.mxu0 0.0
    %578 = vmatpush2.msra.mxu0 0.0
    %579 = vmatprep.subr.mxu0 0.0
    %580 = vmatpush2.msra.mxu0 0.0
    %581 = vmatprep.subr.mxu0 0.0
    %582 = vmatpush2.msra.mxu0 0.0
    %583 = vmatprep.subr.mxu0 0.0
    %584 = vmatpush2.msra.mxu0 0.0
    %585 = vmatprep.subr.mxu0 0.0
    %586 = vmatpush2.msra.mxu0 0.0
    %587 = vmatprep.subr.mxu0 0.0
    %588 = vmatpush2.msra.mxu0 0.0
    %589 = vmatprep.subr.mxu0 0.0
    %590 = vmatpush2.msra.mxu0 0.0
    %591 = vmatprep.subr.mxu0 0.0
    %592 = vmatpush2.msra.mxu0 0.0
    %593 = vmatprep.subr.mxu0 0.0
    %594 = vmatpush2.msra.mxu0 0.0
    %595 = vmatprep.subr.mxu0 0.0
    %596 = vmatpush2.msra.mxu0 0.0
    %597 = vmatprep.subr.mxu0 0.0
    %598 = vmatpush2.msra.mxu0 0.0
    %599 = vmatprep.mubr.f32.mxu0 0.0
    %600 = vmatmul.mubr.f32.gmra.mxu0 0.0
    %v601 = vpop.f32.mrf.mxu0
    %v602 = vadd.f32 0.0, %v601
    %v603 = vpop.f32.mrf.mxu0
    %v604 = vadd.f32 0.0, %v603
    %605 = vdwg.mxu0
    %606 = vmatprep.subr.mxu0 %v530
    %607 = vmatpush1.msra.mxu0 %v529
    %608 = vmatprep.subr.mxu0 %v526
    %609 = vmatpush1.msra.mxu0 %v525
    %610 = vmatprep.subr.mxu0 %v522
    %611 = vmatpush1.msra.mxu0 %v521
    %612 = vmatprep.subr.mxu0 %v518
    %613 = vmatpush1.msra.mxu0 %v517
    %614 = vmatprep.subr.mxu0 %v514
    %615 = vmatpush1.msra.mxu0 %v513
    %616 = vmatprep.subr.mxu0 %v510
    %617 = vmatpush1.msra.mxu0 %v509
    %618 = vmatprep.subr.mxu0 %v506
    %619 = vmatpush1.msra.mxu0 %v505
    %620 = vmatprep.subr.mxu0 %v502
    %621 = vmatpush1.msra.mxu0 %v501
    %622 = vmatprep.subr.mxu0 %v498
    %623 = vmatpush1.msra.mxu0 %v497
    %624 = vmatprep.subr.mxu0 %v494
    %625 = vmatpush1.msra.mxu0 %v493
    %626 = vmatprep.subr.mxu0 %v490
    %627 = vmatpush1.msra.mxu0 %v489
    %628 = vmatprep.subr.mxu0 %v486
    %629 = vmatpush1.msra.mxu0 %v485
    %630 = vmatprep.subr.mxu0 %v482
    %631 = vmatpush1.msra.mxu0 %v481
    %632 = vmatprep.subr.mxu0 %v478
    %633 = vmatpush1.msra.mxu0 %v477
    %634 = vmatprep.subr.mxu0 %v474
    %635 = vmatpush1.msra.mxu0 %v473
    %636 = vmatprep.subr.mxu0 %v470
    %637 = vmatpush1.msra.mxu0 %v469
    %638 = vmatprep.subr.mxu0 0.0
    %639 = vmatpush2.msra.mxu0 0.0
    %640 = vmatprep.subr.mxu0 0.0
    %641 = vmatpush2.msra.mxu0 0.0
    %642 = vmatprep.subr.mxu0 0.0
    %643 = vmatpush2.msra.mxu0 0.0
    %644 = vmatprep.subr.mxu0 0.0
    %645 = vmatpush2.msra.mxu0 0.0
    %646 = vmatprep.subr.mxu0 0.0
    %647 = vmatpush2.msra.mxu0 0.0
    %648 = vmatprep.subr.mxu0 0.0
    %649 = vmatpush2.msra.mxu0 0.0
    %650 = vmatprep.subr.mxu0 0.0
    %651 = vmatpush2.msra.mxu0 0.0
    %652 = vmatprep.subr.mxu0 0.0
    %653 = vmatpush2.msra.mxu0 0.0
    %654 = vmatprep.subr.mxu0 0.0
    %655 = vmatpush2.msra.mxu0 0.0
    %656 = vmatprep.subr.mxu0 0.0
    %657 = vmatpush2.msra.mxu0 0.0
    %658 = vmatprep.subr.mxu0 0.0
    %659 = vmatpush2.msra.mxu0 0.0
    %660 = vmatprep.subr.mxu0 0.0
    %661 = vmatpush2.msra.mxu0 0.0
    %662 = vmatprep.subr.mxu0 0.0
    %663 = vmatpush2.msra.mxu0 0.0
    %664 = vmatprep.subr.mxu0 0.0
    %665 = vmatpush2.msra.mxu0 0.0
    %666 = vmatprep.subr.mxu0 0.0
    %667 = vmatpush2.msra.mxu0 0.0
    %668 = vmatprep.subr.mxu0 0.0
    %669 = vmatpush2.msra.mxu0 0.0
    %670 = vmatprep.mubr.f32.mxu0 0.0
    %671 = vmatmul.mubr.f32.gmra.mxu0 0.0
    %v672 = vpop.f32.mrf.mxu0
    %v673 = vadd.f32 0.0, %v672
    %v674 = vpop.f32.mrf.mxu0
    %v675 = vadd.f32 0.0, %v674
    %676 = vdwg.mxu0
    %v677 = vadd.f32 %v531, %v602
    %v678 = vadd.f32 %v532, %v604
    %v679 = vadd.f32 %v533, %v673
    %v680 = vadd.f32 %v534, %v675
    %v681 = vtanh.pop %v677
    %v682 = vtanh.pop %v678
    %v683 = vtanh.pop %v679
    %v684 = vtanh.pop %v680
    %v685 = vmul.f32 %v681, 0.5
    %v686 = vadd.f32 %v685, 0.5
    %v687 = vmul.f32 %v682, 0.5
    %v688 = vadd.f32 %v687, 0.5
    %v689 = vmul.f32 %v683, 0.5
    %v690 = vadd.f32 %v689, 0.5
    %v691 = vmul.f32 %v688, 0.0
    %v692 = vmul.f32 %v686, %v684
    %v693 = vadd.f32 %v691, %v692
    %v694 = vtanh.pop %v693
    %v695 = vmul.f32 %v690, %v694
    %696 = vst [vmem:[#allocation3] sm:$0xff] %v695
    %v697 = vld [vmem:[#allocation2 + $0x20] sm:$0xff]
    %v698 = vld [vmem:[#allocation2 + $0x28] sm:$0xff]
    %v699 = vld [vmem:[#allocation2 + $0x30] sm:$0xff]
    %v700 = vld [vmem:[#allocation2 + $0x38] sm:$0xff]
    %701 = vmatprep.subr.mxu0 %v528
    %702 = vmatpush1.msra.mxu0 %v527
    %703 = vmatprep.subr.mxu0 %v524
    %704 = vmatpush1.msra.mxu0 %v523
    %705 = vmatprep.subr.mxu0 %v520
    %706 = vmatpush1.msra.mxu0 %v519
    %707 = vmatprep.subr.mxu0 %v516
    %708 = vmatpush1.msra.mxu0 %v515
    %709 = vmatprep.subr.mxu0 %v512
    %710 = vmatpush1.msra.mxu0 %v511
    %711 = vmatprep.subr.mxu0 %v508
    %712 = vmatpush1.msra.mxu0 %v507
    %713 = vmatprep.subr.mxu0 %v504
    %714 = vmatpush1.msra.mxu0 %v503
    %715 = vmatprep.subr.mxu0 %v500
    %716 = vmatpush1.msra.mxu0 %v499
    %717 = vmatprep.subr.mxu0 %v496
    %718 = vmatpush1.msra.mxu0 %v495
    %719 = vmatprep.subr.mxu0 %v492
    %720 = vmatpush1.msra.mxu0 %v491
    %721 = vmatprep.subr.mxu0 %v488
    %722 = vmatpush1.msra.mxu0 %v487
    %723 = vmatprep.subr.mxu0 %v484
    %724 = vmatpush1.msra.mxu0 %v483
    %725 = vmatprep.subr.mxu0 %v480
    %726 = vmatpush1.msra.mxu0 %v479
    %727 = vmatprep.subr.mxu0 %v476
    %728 = vmatpush1.msra.mxu0 %v475
    %729 = vmatprep.subr.mxu0 %v472
    %730 = vmatpush1.msra.mxu0 %v471
    %731 = vmatprep.subr.mxu0 %v468
    %732 = vmatpush1.msra.mxu0 %v467
    %733 = vmatprep.subr.mxu0 0.0
    %734 = vmatpush2.msra.mxu0 0.0
    %735 = vmatprep.subr.mxu0 0.0
    %736 = vmatpush2.msra.mxu0 0.0
    %737 = vmatprep.subr.mxu0 0.0
    %738 = vmatpush2.msra.mxu0 0.0
    %739 = vmatprep.subr.mxu0 0.0
    %740 = vmatpush2.msra.mxu0 0.0
    %741 = vmatprep.subr.mxu0 0.0
    %742 = vmatpush2.msra.mxu0 0.0
    %743 = vmatprep.subr.mxu0 0.0
    %744 = vmatpush2.msra.mxu0 0.0
    %745 = vmatprep.subr.mxu0 0.0
    %746 = vmatpush2.msra.mxu0 0.0
    %747 = vmatprep.subr.mxu0 0.0
    %748 = vmatpush2.msra.mxu0 0.0
    %749 = vmatprep.subr.mxu0 0.0
    %750 = vmatpush2.msra.mxu0 0.0
    %751 = vmatprep.subr.mxu0 0.0
    %752 = vmatpush2.msra.mxu0 0.0
    %753 = vmatprep.subr.mxu0 0.0
    %754 = vmatpush2.msra.mxu0 0.0
    %755 = vmatprep.subr.mxu0 0.0
    %756 = vmatpush2.msra.mxu0 0.0
    %757 = vmatprep.subr.mxu0 0.0
    %758 = vmatpush2.msra.mxu0 0.0
    %759 = vmatprep.subr.mxu0 0.0
    %760 = vmatpush2.msra.mxu0 0.0
    %761 = vmatprep.subr.mxu0 0.0
    %762 = vmatpush2.msra.mxu0 0.0
    %763 = vmatprep.subr.mxu0 0.0
    %764 = vmatpush2.msra.mxu0 0.0
    %765 = vmatprep.mubr.f32.mxu0 0.0
    %766 = vmatmul.mubr.f32.gmra.mxu0 %v695
    %v767 = vpop.f32.mrf.mxu0
    %v768 = vadd.f32 0.0, %v767
    %v769 = vpop.f32.mrf.mxu0
    %v770 = vadd.f32 0.0, %v769
    %771 = vdwg.mxu0
    %772 = vmatprep.subr.mxu0 %v530
    %773 = vmatpush1.msra.mxu0 %v529
    %774 = vmatprep.subr.mxu0 %v526
    %775 = vmatpush1.msra.mxu0 %v525
    %776 = vmatprep.subr.mxu0 %v522
    %777 = vmatpush1.msra.mxu0 %v521
    %778 = vmatprep.subr.mxu0 %v518
    %779 = vmatpush1.msra.mxu0 %v517
    %780 = vmatprep.subr.mxu0 %v514
    %781 = vmatpush1.msra.mxu0 %v513
    %782 = vmatprep.subr.mxu0 %v510
    %783 = vmatpush1.msra.mxu0 %v509
    %784 = vmatprep.subr.mxu0 %v506
    %785 = vmatpush1.msra.mxu0 %v505
    %786 = vmatprep.subr.mxu0 %v502
    %787 = vmatpush1.msra.mxu0 %v501
    %788 = vmatprep.subr.mxu0 %v498
    %789 = vmatpush1.msra.mxu0 %v497
    %790 = vmatprep.subr.mxu0 %v494
    %791 = vmatpush1.msra.mxu0 %v493
    %792 = vmatprep.subr.mxu0 %v490
    %793 = vmatpush1.msra.mxu0 %v489
    %794 = vmatprep.subr.mxu0 %v486
    %795 = vmatpush1.msra.mxu0 %v485
    %796 = vmatprep.subr.mxu0 %v482
    %797 = vmatpush1.msra.mxu0 %v481
    %798 = vmatprep.subr.mxu0 %v478
    %799 = vmatpush1.msra.mxu0 %v477
    %800 = vmatprep.subr.mxu0 %v474
    %801 = vmatpush1.msra.mxu0 %v473
    %802 = vmatprep.subr.mxu0 %v470
    %803 = vmatpush1.msra.mxu0 %v469
    %804 = vmatprep.subr.mxu0 0.0
    %805 = vmatpush2.msra.mxu0 0.0
    %806 = vmatprep.subr.mxu0 0.0
    %807 = vmatpush2.msra.mxu0 0.0
    %808 = vmatprep.subr.mxu0 0.0
    %809 = vmatpush2.msra.mxu0 0.0
    %810 = vmatprep.subr.mxu0 0.0
    %811 = vmatpush2.msra.mxu0 0.0
    %812 = vmatprep.subr.mxu0 0.0
    %813 = vmatpush2.msra.mxu0 0.0
    %814 = vmatprep.subr.mxu0 0.0
    %815 = vmatpush2.msra.mxu0 0.0
    %816 = vmatprep.subr.mxu0 0.0
    %817 = vmatpush2.msra.mxu0 0.0
    %818 = vmatprep.subr.mxu0 0.0
    %819 = vmatpush2.msra.mxu0 0.0
    %820 = vmatprep.subr.mxu0 0.0
    %821 = vmatpush2.msra.mxu0 0.0
    %822 = vmatprep.subr.mxu0 0.0
    %823 = vmatpush2.msra.mxu0 0.0
    %824 = vmatprep.subr.mxu0 0.0
    %825 = vmatpush2.msra.mxu0 0.0
    %826 = vmatprep.subr.mxu0 0.0
    %827 = vmatpush2.msra.mxu0 0.0
    %828 = vmatprep.subr.mxu0 0.0
    %829 = vmatpush2.msra.mxu0 0.0
    %830 = vmatprep.subr.mxu0 0.0
    %831 = vmatpush2.msra.mxu0 0.0
    %832 = vmatprep.subr.mxu0 0.0
    %833 = vmatpush2.msra.mxu0 0.0
    %834 = vmatprep.subr.mxu0 0.0
    %835 = vmatpush2.msra.mxu0 0.0
    %836 = vmatprep.mubr.f32.mxu0 0.0
    %837 = vmatmul.mubr.f32.gmra.mxu0 %v695
    %v838 = vpop.f32.mrf.mxu0
    %v839 = vadd.f32 0.0, %v838
    %v840 = vpop.f32.mrf.mxu0
    %v841 = vadd.f32 0.0, %v840
    %842 = vdwg.mxu0
    %v843 = vadd.f32 %v697, %v768
    %v844 = vadd.f32 %v698, %v770
    %v845 = vadd.f32 %v699, %v839
    %v846 = vadd.f32 %v700, %v841
    %v847 = vtanh.pop %v843
    %v848 = vtanh.pop %v844
    %v849 = vtanh.pop %v845
    %v850 = vtanh.pop %v846
    %v851 = vmul.f32 %v847, 0.5
    %v852 = vadd.f32 %v851, 0.5
    %v853 = vmul.f32 %v848, 0.5
    %v854 = vadd.f32 %v853, 0.5
    %v855 = vmul.f32 %v849, 0.5
    %v856 = vadd.f32 %v855, 0.5
    %v857 = vmul.f32 %v854, %v693
    %v858 = vmul.f32 %v852, %v850
    %v859 = vadd.f32 %v857, %v858
    %v860 = vtanh.pop %v859
    %v861 = vmul.f32 %v856, %v860
    %862 = vst [vmem:[#allocation3 + $0x8] sm:$0xff] %v861
    %v863 = vld [vmem:[#allocation2 + $0x40] sm:$0xff]
    %v864 = vld [vmem:[#allocation2 + $0x48] sm:$0xff]
    %v865 = vld [vmem:[#allocation2 + $0x50] sm:$0xff]
    %v866 = vld [vmem:[#allocation2 + $0x58] sm:$0xff]
    %867 = vmatprep.subr.mxu0 %v528
    %868 = vmatpush1.msra.mxu0 %v527
    %869 = vmatprep.subr.mxu0 %v524
    %870 = vmatpush1.msra.mxu0 %v523
    %871 = vmatprep.subr.mxu0 %v520
    %872 = vmatpush1.msra.mxu0 %v519
    %873 = vmatprep.subr.mxu0 %v516
    %874 = vmatpush1.msra.mxu0 %v515
    %875 = vmatprep.subr.mxu0 %v512
    %876 = vmatpush1.msra.mxu0 %v511
    %877 = vmatprep.subr.mxu0 %v508
    %878 = vmatpush1.msra.mxu0 %v507
    %879 = vmatprep.subr.mxu0 %v504
    %880 = vmatpush1.msra.mxu0 %v503
    %881 = vmatprep.subr.mxu0 %v500
    %882 = vmatpush1.msra.mxu0 %v499
    %883 = vmatprep.subr.mxu0 %v496
    %884 = vmatpush1.msra.mxu0 %v495
    %885 = vmatprep.subr.mxu0 %v492
    %886 = vmatpush1.msra.mxu0 %v491
    %887 = vmatprep.subr.mxu0 %v488
    %888 = vmatpush1.msra.mxu0 %v487
    %889 = vmatprep.subr.mxu0 %v484
    %890 = vmatpush1.msra.mxu0 %v483
    %891 = vmatprep.subr.mxu0 %v480
    %892 = vmatpush1.msra.mxu0 %v479
    %893 = vmatprep.subr.mxu0 %v476
    %894 = vmatpush1.msra.mxu0 %v475
    %895 = vmatprep.subr.mxu0 %v472
    %896 = vmatpush1.msra.mxu0 %v471
    %897 = vmatprep.subr.mxu0 %v468
    %898 = vmatpush1.msra.mxu0 %v467
    %899 = vmatprep.subr.mxu0 0.0
    %900 = vmatpush2.msra.mxu0 0.0
    %901 = vmatprep.subr.mxu0 0.0
    %902 = vmatpush2.msra.mxu0 0.0
    %903 = vmatprep.subr.mxu0 0.0
    %904 = vmatpush2.msra.mxu0 0.0
    %905 = vmatprep.subr.mxu0 0.0
    %906 = vmatpush2.msra.mxu0 0.0
    %907 = vmatprep.subr.mxu0 0.0
    %908 = vmatpush2.msra.mxu0 0.0
    %909 = vmatprep.subr.mxu0 0.0
    %910 = vmatpush2.msra.mxu0 0.0
    %911 = vmatprep.subr.mxu0 0.0
    %912 = vmatpush2.msra.mxu0 0.0
    %913 = vmatprep.subr.mxu0 0.0
    %914 = vmatpush2.msra.mxu0 0.0
    %915 = vmatprep.subr.mxu0 0.0
    %916 = vmatpush2.msra.mxu0 0.0
    %917 = vmatprep.subr.mxu0 0.0
    %918 = vmatpush2.msra.mxu0 0.0
    %919 = vmatprep.subr.mxu0 0.0
    %920 = vmatpush2.msra.mxu0 0.0
    %921 = vmatprep.subr.mxu0 0.0
    %922 = vmatpush2.msra.mxu0 0.0
    %923 = vmatprep.subr.mxu0 0.0
    %924 = vmatpush2.msra.mxu0 0.0
    %925 = vmatprep.subr.mxu0 0.0
    %926 = vmatpush2.msra.mxu0 0.0
    %927 = vmatprep.subr.mxu0 0.0
    %928 = vmatpush2.msra.mxu0 0.0
    %929 = vmatprep.subr.mxu0 0.0
    %930 = vmatpush2.msra.mxu0 0.0
    %931 = vmatprep.mubr.f32.mxu0 0.0
    %932 = vmatmul.mubr.f32.gmra.mxu0 %v861
    %v933 = vpop.f32.mrf.mxu0
    %v934 = vadd.f32 0.0, %v933
    %v935 = vpop.f32.mrf.mxu0
    %v936 = vadd.f32 0.0, %v935
    %937 = vdwg.mxu0
    %938 = vmatprep.subr.mxu0 %v530
    %939 = vmatpush1.msra.mxu0 %v529
    %940 = vmatprep.subr.mxu0 %v526
    %941 = vmatpush1.msra.mxu0 %v525
    %942 = vmatprep.subr.mxu0 %v522
    %943 = vmatpush1.msra.mxu0 %v521
    %944 = vmatprep.subr.mxu0 %v518
    %945 = vmatpush1.msra.mxu0 %v517
    %946 = vmatprep.subr.mxu0 %v514
    %947 = vmatpush1.msra.mxu0 %v513
    %948 = vmatprep.subr.mxu0 %v510
    %949 = vmatpush1.msra.mxu0 %v509
    %950 = vmatprep.subr.mxu0 %v506
    %951 = vmatpush1.msra.mxu0 %v505
    %952 = vmatprep.subr.mxu0 %v502
    %953 = vmatpush1.msra.mxu0 %v501
    %954 = vmatprep.subr.mxu0 %v498
    %955 = vmatpush1.msra.mxu0 %v497
    %956 = vmatprep.subr.mxu0 %v494
    %957 = vmatpush1.msra.mxu0 %v493
    %958 = vmatprep.subr.mxu0 %v490
    %959 = vmatpush1.msra.mxu0 %v489
    %960 = vmatprep.subr.mxu0 %v486
    %961 = vmatpush1.msra.mxu0 %v485
    %962 = vmatprep.subr.mxu0 %v482
    %963 = vmatpush1.msra.mxu0 %v481
    %964 = vmatprep.subr.mxu0 %v478
    %965 = vmatpush1.msra.mxu0 %v477
    %966 = vmatprep.subr.mxu0 %v474
    %967 = vmatpush1.msra.mxu0 %v473
    %968 = vmatprep.subr.mxu0 %v470
    %969 = vmatpush1.msra.mxu0 %v469
    %970 = vmatprep.subr.mxu0 0.0
    %971 = vmatpush2.msra.mxu0 0.0
    %972 = vmatprep.subr.mxu0 0.0
    %973 = vmatpush2.msra.mxu0 0.0
    %974 = vmatprep.subr.mxu0 0.0
    %975 = vmatpush2.msra.mxu0 0.0
    %976 = vmatprep.subr.mxu0 0.0
    %977 = vmatpush2.msra.mxu0 0.0
    %978 = vmatprep.subr.mxu0 0.0
    %979 = vmatpush2.msra.mxu0 0.0
    %980 = vmatprep.subr.mxu0 0.0
    %981 = vmatpush2.msra.mxu0 0.0
    %982 = vmatprep.subr.mxu0 0.0
    %983 = vmatpush2.msra.mxu0 0.0
    %984 = vmatprep.subr.mxu0 0.0
    %985 = vmatpush2.msra.mxu0 0.0
    %986 = vmatprep.subr.mxu0 0.0
    %987 = vmatpush2.msra.mxu0 0.0
    %988 = vmatprep.subr.mxu0 0.0
    %989 = vmatpush2.msra.mxu0 0.0
    %990 = vmatprep.subr.mxu0 0.0
    %991 = vmatpush2.msra.mxu0 0.0
    %992 = vmatprep.subr.mxu0 0.0
    %993 = vmatpush2.msra.mxu0 0.0
    %994 = vmatprep.subr.mxu0 0.0
    %995 = vmatpush2.msra.mxu0 0.0
    %996 = vmatprep.subr.mxu0 0.0
    %997 = vmatpush2.msra.mxu0 0.0
    %998 = vmatprep.subr.mxu0 0.0
    %999 = vmatpush2.msra.mxu0 0.0
    %1000 = vmatprep.subr.mxu0 0.0
    %1001 = vmatpush2.msra.mxu0 0.0
    %1002 = vmatprep.mubr.f32.mxu0 0.0
    %1003 = vmatmul.mubr.f32.gmra.mxu0 %v861
    %v1004 = vpop.f32.mrf.mxu0
    %v1005 = vadd.f32 0.0, %v1004
    %v1006 = vpop.f32.mrf.mxu0
    %v1007 = vadd.f32 0.0, %v1006
    %1008 = vdwg.mxu0
    %v1009 = vadd.f32 %v863, %v934
    %v1010 = vadd.f32 %v864, %v936
    %v1011 = vadd.f32 %v865, %v1005
    %v1012 = vadd.f32 %v866, %v1007
    %v1013 = vtanh.pop %v1009
    %v1014 = vtanh.pop %v1010
    %v1015 = vtanh.pop %v1011
    %v1016 = vtanh.pop %v1012
    %v1017 = vmul.f32 %v1013, 0.5
    %v1018 = vadd.f32 %v1017, 0.5
    %v1019 = vmul.f32 %v1014, 0.5
    %v1020 = vadd.f32 %v1019, 0.5
    %v1021 = vmul.f32 %v1015, 0.5
    %v1022 = vadd.f32 %v1021, 0.5
    %v1023 = vmul.f32 %v1020, %v859
    %v1024 = vmul.f32 %v1018, %v1016
    %v1025 = vadd.f32 %v1023, %v1024
    %v1026 = vtanh.pop %v1025
    %v1027 = vmul.f32 %v1022, %v1026
    %1028 = vst [vmem:[#allocation3 + $0x10] sm:$0xff] %v1027
    %v1029 = vld [vmem:[#allocation2 + $0x60] sm:$0xff]
    %v1030 = vld [vmem:[#allocation2 + $0x68] sm:$0xff]
    %v1031 = vld [vmem:[#allocation2 + $0x70] sm:$0xff]
    %v1032 = vld [vmem:[#allocation2 + $0x78] sm:$0xff]
    %1033 = vmatprep.subr.mxu0 %v528
    %1034 = vmatpush1.msra.mxu0 %v527
    %1035 = vmatprep.subr.mxu0 %v524
    %1036 = vmatpush1.msra.mxu0 %v523
    %1037 = vmatprep.subr.mxu0 %v520
    %1038 = vmatpush1.msra.mxu0 %v519
    %1039 = vmatprep.subr.mxu0 %v516
    %1040 = vmatpush1.msra.mxu0 %v515
    %1041 = vmatprep.subr.mxu0 %v512
    %1042 = vmatpush1.msra.mxu0 %v511
    %1043 = vmatprep.subr.mxu0 %v508
    %1044 = vmatpush1.msra.mxu0 %v507
    %1045 = vmatprep.subr.mxu0 %v504
    %1046 = vmatpush1.msra.mxu0 %v503
    %1047 = vmatprep.subr.mxu0 %v500
    %1048 = vmatpush1.msra.mxu0 %v499
    %1049 = vmatprep.subr.mxu0 %v496
    %1050 = vmatpush1.msra.mxu0 %v495
    %1051 = vmatprep.subr.mxu0 %v492
    %1052 = vmatpush1.msra.mxu0 %v491
    %1053 = vmatprep.subr.mxu0 %v488
    %1054 = vmatpush1.msra.mxu0 %v487
    %1055 = vmatprep.subr.mxu0 %v484
    %1056 = vmatpush1.msra.mxu0 %v483
    %1057 = vmatprep.subr.mxu0 %v480
    %1058 = vmatpush1.msra.mxu0 %v479
    %1059 = vmatprep.subr.mxu0 %v476
    %1060 = vmatpush1.msra.mxu0 %v475
    %1061 = vmatprep.subr.mxu0 %v472
    %1062 = vmatpush1.msra.mxu0 %v471
    %1063 = vmatprep.subr.mxu0 %v468
    %1064 = vmatpush1.msra.mxu0 %v467
    %1065 = vmatprep.subr.mxu0 0.0
    %1066 = vmatpush2.msra.mxu0 0.0
    %1067 = vmatprep.subr.mxu0 0.0
    %1068 = vmatpush2.msra.mxu0 0.0
    %1069 = vmatprep.subr.mxu0 0.0
    %1070 = vmatpush2.msra.mxu0 0.0
    %1071 = vmatprep.subr.mxu0 0.0
    %1072 = vmatpush2.msra.mxu0 0.0
    %1073 = vmatprep.subr.mxu0 0.0
    %1074 = vmatpush2.msra.mxu0 0.0
    %1075 = vmatprep.subr.mxu0 0.0
    %1076 = vmatpush2.msra.mxu0 0.0
    %1077 = vmatprep.subr.mxu0 0.0
    %1078 = vmatpush2.msra.mxu0 0.0
    %1079 = vmatprep.subr.mxu0 0.0
    %1080 = vmatpush2.msra.mxu0 0.0
    %1081 = vmatprep.subr.mxu0 0.0
    %1082 = vmatpush2.msra.mxu0 0.0
    %1083 = vmatprep.subr.mxu0 0.0
    %1084 = vmatpush2.msra.mxu0 0.0
    %1085 = vmatprep.subr.mxu0 0.0
    %1086 = vmatpush2.msra.mxu0 0.0
    %1087 = vmatprep.subr.mxu0 0.0
    %1088 = vmatpush2.msra.mxu0 0.0
    %1089 = vmatprep.subr.mxu0 0.0
    %1090 = vmatpush2.msra.mxu0 0.0
    %1091 = vmatprep.subr.mxu0 0.0
    %1092 = vmatpush2.msra.mxu0 0.0
    %1093 = vmatprep.subr.mxu0 0.0
    %1094 = vmatpush2.msra.mxu0 0.0
    %1095 = vmatprep.subr.mxu0 0.0
    %1096 = vmatpush2.msra.mxu0 0.0
    %1097 = vmatprep.mubr.f32.mxu0 0.0
    %1098 = vmatmul.mubr.f32.gmra.mxu0 %v1027
    %v1099 = vpop.f32.mrf.mxu0
    %v1100 = vadd.f32 0.0, %v1099
    %v1101 = vpop.f32.mrf.mxu0
    %v1102 = vadd.f32 0.0, %v1101
    %1103 = vdwg.mxu0
    %1104 = vmatprep.subr.mxu0 %v530
    %1105 = vmatpush1.msra.mxu0 %v529
    %1106 = vmatprep.subr.mxu0 %v526
    %1107 = vmatpush1.msra.mxu0 %v525
    %1108 = vmatprep.subr.mxu0 %v522
    %1109 = vmatpush1.msra.mxu0 %v521
    %1110 = vmatprep.subr.mxu0 %v518
    %1111 = vmatpush1.msra.mxu0 %v517
    %1112 = vmatprep.subr.mxu0 %v514
    %1113 = vmatpush1.msra.mxu0 %v513
    %1114 = vmatprep.subr.mxu0 %v510
    %1115 = vmatpush1.msra.mxu0 %v509
    %1116 = vmatprep.subr.mxu0 %v506
    %1117 = vmatpush1.msra.mxu0 %v505
    %1118 = vmatprep.subr.mxu0 %v502
    %1119 = vmatpush1.msra.mxu0 %v501
    %1120 = vmatprep.subr.mxu0 %v498
    %1121 = vmatpush1.msra.mxu0 %v497
    %1122 = vmatprep.subr.mxu0 %v494
    %1123 = vmatpush1.msra.mxu0 %v493
    %1124 = vmatprep.subr.mxu0 %v490
    %1125 = vmatpush1.msra.mxu0 %v489
    %1126 = vmatprep.subr.mxu0 %v486
    %1127 = vmatpush1.msra.mxu0 %v485
    %1128 = vmatprep.subr.mxu0 %v482
    %1129 = vmatpush1.msra.mxu0 %v481
    %1130 = vmatprep.subr.mxu0 %v478
    %1131 = vmatpush1.msra.mxu0 %v477
    %1132 = vmatprep.subr.mxu0 %v474
    %1133 = vmatpush1.msra.mxu0 %v473
    %1134 = vmatprep.subr.mxu0 %v470
    %1135 = vmatpush1.msra.mxu0 %v469
    %1136 = vmatprep.subr.mxu0 0.0
    %1137 = vmatpush2.msra.mxu0 0.0
    %1138 = vmatprep.subr.mxu0 0.0
    %1139 = vmatpush2.msra.mxu0 0.0
    %1140 = vmatprep.subr.mxu0 0.0
    %1141 = vmatpush2.msra.mxu0 0.0
    %1142 = vmatprep.subr.mxu0 0.0
    %1143 = vmatpush2.msra.mxu0 0.0
    %1144 = vmatprep.subr.mxu0 0.0
    %1145 = vmatpush2.msra.mxu0 0.0
    %1146 = vmatprep.subr.mxu0 0.0
    %1147 = vmatpush2.msra.mxu0 0.0
    %1148 = vmatprep.subr.mxu0 0.0
    %1149 = vmatpush2.msra.mxu0 0.0
    %1150 = vmatprep.subr.mxu0 0.0
    %1151 = vmatpush2.msra.mxu0 0.0
    %1152 = vmatprep.subr.mxu0 0.0
    %1153 = vmatpush2.msra.mxu0 0.0
    %1154 = vmatprep.subr.mxu0 0.0
    %1155 = vmatpush2.msra.mxu0 0.0
    %1156 = vmatprep.subr.mxu0 0.0
    %1157 = vmatpush2.msra.mxu0 0.0
    %1158 = vmatprep.subr.mxu0 0.0
    %1159 = vmatpush2.msra.mxu0 0.0
    %1160 = vmatprep.subr.mxu0 0.0
    %1161 = vmatpush2.msra.mxu0 0.0
    %1162 = vmatprep.subr.mxu0 0.0
    %1163 = vmatpush2.msra.mxu0 0.0
    %1164 = vmatprep.subr.mxu0 0.0
    %1165 = vmatpush2.msra.mxu0 0.0
    %1166 = vmatprep.subr.mxu0 0.0
    %1167 = vmatpush2.msra.mxu0 0.0
    %1168 = vmatprep.mubr.f32.mxu0 0.0
    %1169 = vmatmul.mubr.f32.gmra.mxu0 %v1027
    %v1170 = vpop.f32.mrf.mxu0
    %v1171 = vadd.f32 0.0, %v1170
    %v1172 = vpop.f32.mrf.mxu0
    %v1173 = vadd.f32 0.0, %v1172
    %1174 = vdwg.mxu0
    %v1175 = vadd.f32 %v1029, %v1100
    %v1176 = vadd.f32 %v1030, %v1102
    %v1177 = vadd.f32 %v1031, %v1171
    %v1178 = vadd.f32 %v1032, %v1173
    %v1179 = vtanh.pop %v1175
    %v1180 = vtanh.pop %v1176
    %v1181 = vtanh.pop %v1177
    %v1182 = vtanh.pop %v1178
    %v1183 = vmul.f32 %v1179, 0.5
    %v1184 = vadd.f32 %v1183, 0.5
    %v1185 = vmul.f32 %v1180, 0.5
    %v1186 = vadd.f32 %v1185, 0.5
    %v1187 = vmul.f32 %v1181, 0.5
    %v1188 = vadd.f32 %v1187, 0.5
    %v1189 = vmul.f32 %v1186, %v1025
    %v1190 = vmul.f32 %v1184, %v1182
    %v1191 = vadd.f32 %v1189, %v1190
    %v1192 = vtanh.pop %v1191
    %v1193 = vmul.f32 %v1188, %v1192
    %1194 = vst [vmem:[#allocation3 + $0x18] sm:$0xff] %v1193
    %v1195 = vld [vmem:[#allocation2 + $0x80] sm:$0xff]
    %v1196 = vld [vmem:[#allocation2 + $0x88] sm:$0xff]
    %v1197 = vld [vmem:[#allocation2 + $0x90] sm:$0xff]
    %v1198 = vld [vmem:[#allocation2 + $0x98] sm:$0xff]
    %1199 = vmatprep.subr.mxu0 %v528
    %1200 = vmatpush1.msra.mxu0 %v527
    %1201 = vmatprep.subr.mxu0 %v524
    %1202 = vmatpush1.msra.mxu0 %v523
    %1203 = vmatprep.subr.mxu0 %v520
    %1204 = vmatpush1.msra.mxu0 %v519
    %1205 = vmatprep.subr.mxu0 %v516
    %1206 = vmatpush1.msra.mxu0 %v515
    %1207 = vmatprep.subr.mxu0 %v512
    %1208 = vmatpush1.msra.mxu0 %v511
    %1209 = vmatprep.subr.mxu0 %v508
    %1210 = vmatpush1.msra.mxu0 %v507
    %1211 = vmatprep.subr.mxu0 %v504
    %1212 = vmatpush1.msra.mxu0 %v503
    %1213 = vmatprep.subr.mxu0 %v500
    %1214 = vmatpush1.msra.mxu0 %v499
    %1215 = vmatprep.subr.mxu0 %v496
    %1216 = vmatpush1.msra.mxu0 %v495
    %1217 = vmatprep.subr.mxu0 %v492
    %1218 = vmatpush1.msra.mxu0 %v491
    %1219 = vmatprep.subr.mxu0 %v488
    %1220 = vmatpush1.msra.mxu0 %v487
    %1221 = vmatprep.subr.mxu0 %v484
    %1222 = vmatpush1.msra.mxu0 %v483
    %1223 = vmatprep.subr.mxu0 %v480
    %1224 = vmatpush1.msra.mxu0 %v479
    %1225 = vmatprep.subr.mxu0 %v476
    %1226 = vmatpush1.msra.mxu0 %v475
    %1227 = vmatprep.subr.mxu0 %v472
    %1228 = vmatpush1.msra.mxu0 %v471
    %1229 = vmatprep.subr.mxu0 %v468
    %1230 = vmatpush1.msra.mxu0 %v467
    %1231 = vmatprep.subr.mxu0 0.0
    %1232 = vmatpush2.msra.mxu0 0.0
    %1233 = vmatprep.subr.mxu0 0.0
    %1234 = vmatpush2.msra.mxu0 0.0
    %1235 = vmatprep.subr.mxu0 0.0
    %1236 = vmatpush2.msra.mxu0 0.0
    %1237 = vmatprep.subr.mxu0 0.0
    %1238 = vmatpush2.msra.mxu0 0.0
    %1239 = vmatprep.subr.mxu0 0.0
    %1240 = vmatpush2.msra.mxu0 0.0
    %1241 = vmatprep.subr.mxu0 0.0
    %1242 = vmatpush2.msra.mxu0 0.0
    %1243 = vmatprep.subr.mxu0 0.0
    %1244 = vmatpush2.msra.mxu0 0.0
    %1245 = vmatprep.subr.mxu0 0.0
    %1246 = vmatpush2.msra.mxu0 0.0
    %1247 = vmatprep.subr.mxu0 0.0
    %1248 = vmatpush2.msra.mxu0 0.0
    %1249 = vmatprep.subr.mxu0 0.0
    %1250 = vmatpush2.msra.mxu0 0.0
    %1251 = vmatprep.subr.mxu0 0.0
    %1252 = vmatpush2.msra.mxu0 0.0
    %1253 = vmatprep.subr.mxu0 0.0
    %1254 = vmatpush2.msra.mxu0 0.0
    %1255 = vmatprep.subr.mxu0 0.0
    %1256 = vmatpush2.msra.mxu0 0.0
    %1257 = vmatprep.subr.mxu0 0.0
    %1258 = vmatpush2.msra.mxu0 0.0
    %1259 = vmatprep.subr.mxu0 0.0
    %1260 = vmatpush2.msra.mxu0 0.0
    %1261 = vmatprep.subr.mxu0 0.0
    %1262 = vmatpush2.msra.mxu0 0.0
    %1263 = vmatprep.mubr.f32.mxu0 0.0
    %1264 = vmatmul.mubr.f32.gmra.mxu0 %v1193
    %v1265 = vpop.f32.mrf.mxu0
    %v1266 = vadd.f32 0.0, %v1265
    %v1267 = vpop.f32.mrf.mxu0
    %v1268 = vadd.f32 0.0, %v1267
    %1269 = vdwg.mxu0
    %1270 = vmatprep.subr.mxu0 %v530
    %1271 = vmatpush1.msra.mxu0 %v529
    %1272 = vmatprep.subr.mxu0 %v526
    %1273 = vmatpush1.msra.mxu0 %v525
    %1274 = vmatprep.subr.mxu0 %v522
    %1275 = vmatpush1.msra.mxu0 %v521
    %1276 = vmatprep.subr.mxu0 %v518
    %1277 = vmatpush1.msra.mxu0 %v517
    %1278 = vmatprep.subr.mxu0 %v514
    %1279 = vmatpush1.msra.mxu0 %v513
    %1280 = vmatprep.subr.mxu0 %v510
    %1281 = vmatpush1.msra.mxu0 %v509
    %1282 = vmatprep.subr.mxu0 %v506
    %1283 = vmatpush1.msra.mxu0 %v505
    %1284 = vmatprep.subr.mxu0 %v502
    %1285 = vmatpush1.msra.mxu0 %v501
    %1286 = vmatprep.subr.mxu0 %v498
    %1287 = vmatpush1.msra.mxu0 %v497
    %1288 = vmatprep.subr.mxu0 %v494
    %1289 = vmatpush1.msra.mxu0 %v493
    %1290 = vmatprep.subr.mxu0 %v490
    %1291 = vmatpush1.msra.mxu0 %v489
    %1292 = vmatprep.subr.mxu0 %v486
    %1293 = vmatpush1.msra.mxu0 %v485
    %1294 = vmatprep.subr.mxu0 %v482
    %1295 = vmatpush1.msra.mxu0 %v481
    %1296 = vmatprep.subr.mxu0 %v478
    %1297 = vmatpush1.msra.mxu0 %v477
    %1298 = vmatprep.subr.mxu0 %v474
    %1299 = vmatpush1.msra.mxu0 %v473
    %1300 = vmatprep.subr.mxu0 %v470
    %1301 = vmatpush1.msra.mxu0 %v469
    %1302 = vmatprep.subr.mxu0 0.0
    %1303 = vmatpush2.msra.mxu0 0.0
    %1304 = vmatprep.subr.mxu0 0.0
    %1305 = vmatpush2.msra.mxu0 0.0
    %1306 = vmatprep.subr.mxu0 0.0
    %1307 = vmatpush2.msra.mxu0 0.0
    %1308 = vmatprep.subr.mxu0 0.0
    %1309 = vmatpush2.msra.mxu0 0.0
    %1310 = vmatprep.subr.mxu0 0.0
    %1311 = vmatpush2.msra.mxu0 0.0
    %1312 = vmatprep.subr.mxu0 0.0
    %1313 = vmatpush2.msra.mxu0 0.0
    %1314 = vmatprep.subr.mxu0 0.0
    %1315 = vmatpush2.msra.mxu0 0.0
    %1316 = vmatprep.subr.mxu0 0.0
    %1317 = vmatpush2.msra.mxu0 0.0
    %1318 = vmatprep.subr.mxu0 0.0
    %1319 = vmatpush2.msra.mxu0 0.0
    %1320 = vmatprep.subr.mxu0 0.0
    %1321 = vmatpush2.msra.mxu0 0.0
    %1322 = vmatprep.subr.mxu0 0.0
    %1323 = vmatpush2.msra.mxu0 0.0
    %1324 = vmatprep.subr.mxu0 0.0
    %1325 = vmatpush2.msra.mxu0 0.0
    %1326 = vmatprep.subr.mxu0 0.0
    %1327 = vmatpush2.msra.mxu0 0.0
    %1328 = vmatprep.subr.mxu0 0.0
    %1329 = vmatpush2.msra.mxu0 0.0
    %1330 = vmatprep.subr.mxu0 0.0
    %1331 = vmatpush2.msra.mxu0 0.0
    %1332 = vmatprep.subr.mxu0 0.0
    %1333 = vmatpush2.msra.mxu0 0.0
    %1334 = vmatprep.mubr.f32.mxu0 0.0
    %1335 = vmatmul.mubr.f32.gmra.mxu0 %v1193
    %v1336 = vpop.f32.mrf.mxu0
    %v1337 = vadd.f32 0.0, %v1336
    %v1338 = vpop.f32.mrf.mxu0
    %v1339 = vadd.f32 0.0, %v1338
    %1340 = vdwg.mxu0
    %v1341 = vadd.f32 %v1195, %v1266
    %v1342 = vadd.f32 %v1196, %v1268
    %v1343 = vadd.f32 %v1197, %v1337
    %v1344 = vadd.f32 %v1198, %v1339
    %v1345 = vtanh.pop %v1341
    %v1346 = vtanh.pop %v1342
    %v1347 = vtanh.pop %v1343
    %v1348 = vtanh.pop %v1344
    %v1349 = vmul.f32 %v1345, 0.5
    %v1350 = vadd.f32 %v1349, 0.5
    %v1351 = vmul.f32 %v1346, 0.5
    %v1352 = vadd.f32 %v1351, 0.5
    %v1353 = vmul.f32 %v1347, 0.5
    %v1354 = vadd.f32 %v1353, 0.5
    %v1355 = vmul.f32 %v1352, %v1191
    %v1356 = vmul.f32 %v1350, %v1348
    %v1357 = vadd.f32 %v1355, %v1356
    %v1358 = vtanh.pop %v1357
    %v1359 = vmul.f32 %v1354, %v1358
    %1360 = vst [vmem:[#allocation3 + $0x20] sm:$0xff] %v1359
    %v1361 = vld [vmem:[#allocation2 + $0xa0] sm:$0xff]
    %v1362 = vld [vmem:[#allocation2 + $0xa8] sm:$0xff]
    %v1363 = vld [vmem:[#allocation2 + $0xb0] sm:$0xff]
    %v1364 = vld [vmem:[#allocation2 + $0xb8] sm:$0xff]
    %1365 = vmatprep.subr.mxu0 %v528
    %1366 = vmatpush1.msra.mxu0 %v527
    %1367 = vmatprep.subr.mxu0 %v524
    %1368 = vmatpush1.msra.mxu0 %v523
    %1369 = vmatprep.subr.mxu0 %v520
    %1370 = vmatpush1.msra.mxu0 %v519
    %1371 = vmatprep.subr.mxu0 %v516
    %1372 = vmatpush1.msra.mxu0 %v515
    %1373 = vmatprep.subr.mxu0 %v512
    %1374 = vmatpush1.msra.mxu0 %v511
    %1375 = vmatprep.subr.mxu0 %v508
    %1376 = vmatpush1.msra.mxu0 %v507
    %1377 = vmatprep.subr.mxu0 %v504
    %1378 = vmatpush1.msra.mxu0 %v503
    %1379 = vmatprep.subr.mxu0 %v500
    %1380 = vmatpush1.msra.mxu0 %v499
    %1381 = vmatprep.subr.mxu0 %v496
    %1382 = vmatpush1.msra.mxu0 %v495
    %1383 = vmatprep.subr.mxu0 %v492
    %1384 = vmatpush1.msra.mxu0 %v491
    %1385 = vmatprep.subr.mxu0 %v488
    %1386 = vmatpush1.msra.mxu0 %v487
    %1387 = vmatprep.subr.mxu0 %v484
    %1388 = vmatpush1.msra.mxu0 %v483
    %1389 = vmatprep.subr.mxu0 %v480
    %1390 = vmatpush1.msra.mxu0 %v479
    %1391 = vmatprep.subr.mxu0 %v476
    %1392 = vmatpush1.msra.mxu0 %v475
    %1393 = vmatprep.subr.mxu0 %v472
    %1394 = vmatpush1.msra.mxu0 %v471
    %1395 = vmatprep.subr.mxu0 %v468
    %1396 = vmatpush1.msra.mxu0 %v467
    %1397 = vmatprep.subr.mxu0 0.0
    %1398 = vmatpush2.msra.mxu0 0.0
    %1399 = vmatprep.subr.mxu0 0.0
    %1400 = vmatpush2.msra.mxu0 0.0
    %1401 = vmatprep.subr.mxu0 0.0
    %1402 = vmatpush2.msra.mxu0 0.0
    %1403 = vmatprep.subr.mxu0 0.0
    %1404 = vmatpush2.msra.mxu0 0.0
    %1405 = vmatprep.subr.mxu0 0.0
    %1406 = vmatpush2.msra.mxu0 0.0
    %1407 = vmatprep.subr.mxu0 0.0
    %1408 = vmatpush2.msra.mxu0 0.0
    %1409 = vmatprep.subr.mxu0 0.0
    %1410 = vmatpush2.msra.mxu0 0.0
    %1411 = vmatprep.subr.mxu0 0.0
    %1412 = vmatpush2.msra.mxu0 0.0
    %1413 = vmatprep.subr.mxu0 0.0
    %1414 = vmatpush2.msra.mxu0 0.0
    %1415 = vmatprep.subr.mxu0 0.0
    %1416 = vmatpush2.msra.mxu0 0.0
    %1417 = vmatprep.subr.mxu0 0.0
    %1418 = vmatpush2.msra.mxu0 0.0
    %1419 = vmatprep.subr.mxu0 0.0
    %1420 = vmatpush2.msra.mxu0 0.0
    %1421 = vmatprep.subr.mxu0 0.0
    %1422 = vmatpush2.msra.mxu0 0.0
    %1423 = vmatprep.subr.mxu0 0.0
    %1424 = vmatpush2.msra.mxu0 0.0
    %1425 = vmatprep.subr.mxu0 0.0
    %1426 = vmatpush2.msra.mxu0 0.0
    %1427 = vmatprep.subr.mxu0 0.0
    %1428 = vmatpush2.msra.mxu0 0.0
    %1429 = vmatprep.mubr.f32.mxu0 0.0
    %1430 = vmatmul.mubr.f32.gmra.mxu0 %v1359
    %v1431 = vpop.f32.mrf.mxu0
    %v1432 = vadd.f32 0.0, %v1431
    %v1433 = vpop.f32.mrf.mxu0
    %v1434 = vadd.f32 0.0, %v1433
    %1435 = vdwg.mxu0
    %1436 = vmatprep.subr.mxu0 %v530
    %1437 = vmatpush1.msra.mxu0 %v529
    %1438 = vmatprep.subr.mxu0 %v526
    %1439 = vmatpush1.msra.mxu0 %v525
    %1440 = vmatprep.subr.mxu0 %v522
    %1441 = vmatpush1.msra.mxu0 %v521
    %1442 = vmatprep.subr.mxu0 %v518
    %1443 = vmatpush1.msra.mxu0 %v517
    %1444 = vmatprep.subr.mxu0 %v514
    %1445 = vmatpush1.msra.mxu0 %v513
    %1446 = vmatprep.subr.mxu0 %v510
    %1447 = vmatpush1.msra.mxu0 %v509
    %1448 = vmatprep.subr.mxu0 %v506
    %1449 = vmatpush1.msra.mxu0 %v505
    %1450 = vmatprep.subr.mxu0 %v502
    %1451 = vmatpush1.msra.mxu0 %v501
    %1452 = vmatprep.subr.mxu0 %v498
    %1453 = vmatpush1.msra.mxu0 %v497
    %1454 = vmatprep.subr.mxu0 %v494
    %1455 = vmatpush1.msra.mxu0 %v493
    %1456 = vmatprep.subr.mxu0 %v490
    %1457 = vmatpush1.msra.mxu0 %v489
    %1458 = vmatprep.subr.mxu0 %v486
    %1459 = vmatpush1.msra.mxu0 %v485
    %1460 = vmatprep.subr.mxu0 %v482
    %1461 = vmatpush1.msra.mxu0 %v481
    %1462 = vmatprep.subr.mxu0 %v478
    %1463 = vmatpush1.msra.mxu0 %v477
    %1464 = vmatprep.subr.mxu0 %v474
    %1465 = vmatpush1.msra.mxu0 %v473
    %1466 = vmatprep.subr.mxu0 %v470
    %1467 = vmatpush1.msra.mxu0 %v469
    %1468 = vmatprep.subr.mxu0 0.0
    %1469 = vmatpush2.msra.mxu0 0.0
    %1470 = vmatprep.subr.mxu0 0.0
    %1471 = vmatpush2.msra.mxu0 0.0
    %1472 = vmatprep.subr.mxu0 0.0
    %1473 = vmatpush2.msra.mxu0 0.0
    %1474 = vmatprep.subr.mxu0 0.0
    %1475 = vmatpush2.msra.mxu0 0.0
    %1476 = vmatprep.subr.mxu0 0.0
    %1477 = vmatpush2.msra.mxu0 0.0
    %1478 = vmatprep.subr.mxu0 0.0
    %1479 = vmatpush2.msra.mxu0 0.0
    %1480 = vmatprep.subr.mxu0 0.0
    %1481 = vmatpush2.msra.mxu0 0.0
    %1482 = vmatprep.subr.mxu0 0.0
    %1483 = vmatpush2.msra.mxu0 0.0
    %1484 = vmatprep.subr.mxu0 0.0
    %1485 = vmatpush2.msra.mxu0 0.0
    %1486 = vmatprep.subr.mxu0 0.0
    %1487 = vmatpush2.msra.mxu0 0.0
    %1488 = vmatprep.subr.mxu0 0.0
    %1489 = vmatpush2.msra.mxu0 0.0
    %1490 = vmatprep.subr.mxu0 0.0
    %1491 = vmatpush2.msra.mxu0 0.0
    %1492 = vmatprep.subr.mxu0 0.0
    %1493 = vmatpush2.msra.mxu0 0.0
    %1494 = vmatprep.subr.mxu0 0.0
    %1495 = vmatpush2.msra.mxu0 0.0
    %1496 = vmatprep.subr.mxu0 0.0
    %1497 = vmatpush2.msra.mxu0 0.0
    %1498 = vmatprep.subr.mxu0 0.0
    %1499 = vmatpush2.msra.mxu0 0.0
    %1500 = vmatprep.mubr.f32.mxu0 0.0
    %1501 = vmatmul.mubr.f32.gmra.mxu0 %v1359
    %v1502 = vpop.f32.mrf.mxu0
    %v1503 = vadd.f32 0.0, %v1502
    %v1504 = vpop.f32.mrf.mxu0
    %v1505 = vadd.f32 0.0, %v1504
    %1506 = vdwg.mxu0
    %v1507 = vadd.f32 %v1361, %v1432
    %v1508 = vadd.f32 %v1362, %v1434
    %v1509 = vadd.f32 %v1363, %v1503
    %v1510 = vadd.f32 %v1364, %v1505
    %v1511 = vtanh.pop %v1507
    %v1512 = vtanh.pop %v1508
    %v1513 = vtanh.pop %v1509
    %v1514 = vtanh.pop %v1510
    %v1515 = vmul.f32 %v1511, 0.5
    %v1516 = vadd.f32 %v1515, 0.5
    %v1517 = vmul.f32 %v1512, 0.5
    %v1518 = vadd.f32 %v1517, 0.5
    %v1519 = vmul.f32 %v1513, 0.5
    %v1520 = vadd.f32 %v1519, 0.5
    %v1521 = vmul.f32 %v1518, %v1357
    %v1522 = vmul.f32 %v1516, %v1514
    %v1523 = vadd.f32 %v1521, %v1522
    %v1524 = vtanh.pop %v1523
    %v1525 = vmul.f32 %v1520, %v1524
    %1526 = vst [vmem:[#allocation3 + $0x28] sm:$0xff] %v1525
    %v1527 = vld [vmem:[#allocation2 + $0xc0] sm:$0xff]
    %v1528 = vld [vmem:[#allocation2 + $0xc8] sm:$0xff]
    %v1529 = vld [vmem:[#allocation2 + $0xd0] sm:$0xff]
    %v1530 = vld [vmem:[#allocation2 + $0xd8] sm:$0xff]
    %1531 = vmatprep.subr.mxu0 %v528
    %1532 = vmatpush1.msra.mxu0 %v527
    %1533 = vmatprep.subr.mxu0 %v524
    %1534 = vmatpush1.msra.mxu0 %v523
    %1535 = vmatprep.subr.mxu0 %v520
    %1536 = vmatpush1.msra.mxu0 %v519
    %1537 = vmatprep.subr.mxu0 %v516
    %1538 = vmatpush1.msra.mxu0 %v515
    %1539 = vmatprep.subr.mxu0 %v512
    %1540 = vmatpush1.msra.mxu0 %v511
    %1541 = vmatprep.subr.mxu0 %v508
    %1542 = vmatpush1.msra.mxu0 %v507
    %1543 = vmatprep.subr.mxu0 %v504
    %1544 = vmatpush1.msra.mxu0 %v503
    %1545 = vmatprep.subr.mxu0 %v500
    %1546 = vmatpush1.msra.mxu0 %v499
    %1547 = vmatprep.subr.mxu0 %v496
    %1548 = vmatpush1.msra.mxu0 %v495
    %1549 = vmatprep.subr.mxu0 %v492
    %1550 = vmatpush1.msra.mxu0 %v491
    %1551 = vmatprep.subr.mxu0 %v488
    %1552 = vmatpush1.msra.mxu0 %v487
    %1553 = vmatprep.subr.mxu0 %v484
    %1554 = vmatpush1.msra.mxu0 %v483
    %1555 = vmatprep.subr.mxu0 %v480
    %1556 = vmatpush1.msra.mxu0 %v479
    %1557 = vmatprep.subr.mxu0 %v476
    %1558 = vmatpush1.msra.mxu0 %v475
    %1559 = vmatprep.subr.mxu0 %v472
    %1560 = vmatpush1.msra.mxu0 %v471
    %1561 = vmatprep.subr.mxu0 %v468
    %1562 = vmatpush1.msra.mxu0 %v467
    %1563 = vmatprep.subr.mxu0 0.0
    %1564 = vmatpush2.msra.mxu0 0.0
    %1565 = vmatprep.subr.mxu0 0.0
    %1566 = vmatpush2.msra.mxu0 0.0
    %1567 = vmatprep.subr.mxu0 0.0
    %1568 = vmatpush2.msra.mxu0 0.0
    %1569 = vmatprep.subr.mxu0 0.0
    %1570 = vmatpush2.msra.mxu0 0.0
    %1571 = vmatprep.subr.mxu0 0.0
    %1572 = vmatpush2.msra.mxu0 0.0
    %1573 = vmatprep.subr.mxu0 0.0
    %1574 = vmatpush2.msra.mxu0 0.0
    %1575 = vmatprep.subr.mxu0 0.0
    %1576 = vmatpush2.msra.mxu0 0.0
    %1577 = vmatprep.subr.mxu0 0.0
    %1578 = vmatpush2.msra.mxu0 0.0
    %1579 = vmatprep.subr.mxu0 0.0
    %1580 = vmatpush2.msra.mxu0 0.0
    %1581 = vmatprep.subr.mxu0 0.0
    %1582 = vmatpush2.msra.mxu0 0.0
    %1583 = vmatprep.subr.mxu0 0.0
    %1584 = vmatpush2.msra.mxu0 0.0
    %1585 = vmatprep.subr.mxu0 0.0
    %1586 = vmatpush2.msra.mxu0 0.0
    %1587 = vmatprep.subr.mxu0 0.0
    %1588 = vmatpush2.msra.mxu0 0.0
    %1589 = vmatprep.subr.mxu0 0.0
    %1590 = vmatpush2.msra.mxu0 0.0
    %1591 = vmatprep.subr.mxu0 0.0
    %1592 = vmatpush2.msra.mxu0 0.0
    %1593 = vmatprep.subr.mxu0 0.0
    %1594 = vmatpush2.msra.mxu0 0.0
    %1595 = vmatprep.mubr.f32.mxu0 0.0
    %1596 = vmatmul.mubr.f32.gmra.mxu0 %v1525
    %v1597 = vpop.f32.mrf.mxu0
    %v1598 = vadd.f32 0.0, %v1597
    %v1599 = vpop.f32.mrf.mxu0
    %v1600 = vadd.f32 0.0, %v1599
    %1601 = vdwg.mxu0
    %1602 = vmatprep.subr.mxu0 %v530
    %1603 = vmatpush1.msra.mxu0 %v529
    %1604 = vmatprep.subr.mxu0 %v526
    %1605 = vmatpush1.msra.mxu0 %v525
    %1606 = vmatprep.subr.mxu0 %v522
    %1607 = vmatpush1.msra.mxu0 %v521
    %1608 = vmatprep.subr.mxu0 %v518
    %1609 = vmatpush1.msra.mxu0 %v517
    %1610 = vmatprep.subr.mxu0 %v514
    %1611 = vmatpush1.msra.mxu0 %v513
    %1612 = vmatprep.subr.mxu0 %v510
    %1613 = vmatpush1.msra.mxu0 %v509
    %1614 = vmatprep.subr.mxu0 %v506
    %1615 = vmatpush1.msra.mxu0 %v505
    %1616 = vmatprep.subr.mxu0 %v502
    %1617 = vmatpush1.msra.mxu0 %v501
    %1618 = vmatprep.subr.mxu0 %v498
    %1619 = vmatpush1.msra.mxu0 %v497
    %1620 = vmatprep.subr.mxu0 %v494
    %1621 = vmatpush1.msra.mxu0 %v493
    %1622 = vmatprep.subr.mxu0 %v490
    %1623 = vmatpush1.msra.mxu0 %v489
    %1624 = vmatprep.subr.mxu0 %v486
    %1625 = vmatpush1.msra.mxu0 %v485
    %1626 = vmatprep.subr.mxu0 %v482
    %1627 = vmatpush1.msra.mxu0 %v481
    %1628 = vmatprep.subr.mxu0 %v478
    %1629 = vmatpush1.msra.mxu0 %v477
    %1630 = vmatprep.subr.mxu0 %v474
    %1631 = vmatpush1.msra.mxu0 %v473
    %1632 = vmatprep.subr.mxu0 %v470
    %1633 = vmatpush1.msra.mxu0 %v469
    %1634 = vmatprep.subr.mxu0 0.0
    %1635 = vmatpush2.msra.mxu0 0.0
    %1636 = vmatprep.subr.mxu0 0.0
    %1637 = vmatpush2.msra.mxu0 0.0
    %1638 = vmatprep.subr.mxu0 0.0
    %1639 = vmatpush2.msra.mxu0 0.0
    %1640 = vmatprep.subr.mxu0 0.0
    %1641 = vmatpush2.msra.mxu0 0.0
    %1642 = vmatprep.subr.mxu0 0.0
    %1643 = vmatpush2.msra.mxu0 0.0
    %1644 = vmatprep.subr.mxu0 0.0
    %1645 = vmatpush2.msra.mxu0 0.0
    %1646 = vmatprep.subr.mxu0 0.0
    %1647 = vmatpush2.msra.mxu0 0.0
    %1648 = vmatprep.subr.mxu0 0.0
    %1649 = vmatpush2.msra.mxu0 0.0
    %1650 = vmatprep.subr.mxu0 0.0
    %1651 = vmatpush2.msra.mxu0 0.0
    %1652 = vmatprep.subr.mxu0 0.0
    %1653 = vmatpush2.msra.mxu0 0.0
    %1654 = vmatprep.subr.mxu0 0.0
    %1655 = vmatpush2.msra.mxu0 0.0
    %1656 = vmatprep.subr.mxu0 0.0
    %1657 = vmatpush2.msra.mxu0 0.0
    %1658 = vmatprep.subr.mxu0 0.0
    %1659 = vmatpush2.msra.mxu0 0.0
    %1660 = vmatprep.subr.mxu0 0.0
    %1661 = vmatpush2.msra.mxu0 0.0
    %1662 = vmatprep.subr.mxu0 0.0
    %1663 = vmatpush2.msra.mxu0 0.0
    %1664 = vmatprep.subr.mxu0 0.0
    %1665 = vmatpush2.msra.mxu0 0.0
    %1666 = vmatprep.mubr.f32.mxu0 0.0
    %1667 = vmatmul.mubr.f32.gmra.mxu0 %v1525
    %v1668 = vpop.f32.mrf.mxu0
    %v1669 = vadd.f32 0.0, %v1668
    %v1670 = vpop.f32.mrf.mxu0
    %v1671 = vadd.f32 0.0, %v1670
    %1672 = vdwg.mxu0
    %v1673 = vadd.f32 %v1527, %v1598
    %v1674 = vadd.f32 %v1528, %v1600
    %v1675 = vadd.f32 %v1529, %v1669
    %v1676 = vadd.f32 %v1530, %v1671
    %v1677 = vtanh.pop %v1673
    %v1678 = vtanh.pop %v1674
    %v1679 = vtanh.pop %v1675
    %v1680 = vtanh.pop %v1676
    %v1681 = vmul.f32 %v1677, 0.5
    %v1682 = vadd.f32 %v1681, 0.5
    %v1683 = vmul.f32 %v1678, 0.5
    %v1684 = vadd.f32 %v1683, 0.5
    %v1685 = vmul.f32 %v1679, 0.5
    %v1686 = vadd.f32 %v1685, 0.5
    %v1687 = vmul.f32 %v1684, %v1523
    %v1688 = vmul.f32 %v1682, %v1680
    %v1689 = vadd.f32 %v1687, %v1688
    %v1690 = vtanh.pop %v1689
    %v1691 = vmul.f32 %v1686, %v1690
    %1692 = vst [vmem:[#allocation3 + $0x30] sm:$0xff] %v1691
    %v1693 = vld [vmem:[#allocation2 + $0xe0] sm:$0xff]
    %v1694 = vld [vmem:[#allocation2 + $0xe8] sm:$0xff]
    %v1695 = vld [vmem:[#allocation2 + $0xf0] sm:$0xff]
    %v1696 = vld [vmem:[#allocation2 + $0xf8] sm:$0xff]
    %1697 = vmatprep.subr.mxu0 %v528
    %1698 = vmatpush1.msra.mxu0 %v527
    %1699 = vmatprep.subr.mxu0 %v524
    %1700 = vmatpush1.msra.mxu0 %v523
    %1701 = vmatprep.subr.mxu0 %v520
    %1702 = vmatpush1.msra.mxu0 %v519
    %1703 = vmatprep.subr.mxu0 %v516
    %1704 = vmatpush1.msra.mxu0 %v515
    %1705 = vmatprep.subr.mxu0 %v512
    %1706 = vmatpush1.msra.mxu0 %v511
    %1707 = vmatprep.subr.mxu0 %v508
    %1708 = vmatpush1.msra.mxu0 %v507
    %1709 = vmatprep.subr.mxu0 %v504
    %1710 = vmatpush1.msra.mxu0 %v503
    %1711 = vmatprep.subr.mxu0 %v500
    %1712 = vmatpush1.msra.mxu0 %v499
    %1713 = vmatprep.subr.mxu0 %v496
    %1714 = vmatpush1.msra.mxu0 %v495
    %1715 = vmatprep.subr.mxu0 %v492
    %1716 = vmatpush1.msra.mxu0 %v491
    %1717 = vmatprep.subr.mxu0 %v488
    %1718 = vmatpush1.msra.mxu0 %v487
    %1719 = vmatprep.subr.mxu0 %v484
    %1720 = vmatpush1.msra.mxu0 %v483
    %1721 = vmatprep.subr.mxu0 %v480
    %1722 = vmatpush1.msra.mxu0 %v479
    %1723 = vmatprep.subr.mxu0 %v476
    %1724 = vmatpush1.msra.mxu0 %v475
    %1725 = vmatprep.subr.mxu0 %v472
    %1726 = vmatpush1.msra.mxu0 %v471
    %1727 = vmatprep.subr.mxu0 %v468
    %1728 = vmatpush1.msra.mxu0 %v467
    %1729 = vmatprep.subr.mxu0 0.0
    %1730 = vmatpush2.msra.mxu0 0.0
    %1731 = vmatprep.subr.mxu0 0.0
    %1732 = vmatpush2.msra.mxu0 0.0
    %1733 = vmatprep.subr.mxu0 0.0
    %1734 = vmatpush2.msra.mxu0 0.0
    %1735 = vmatprep.subr.mxu0 0.0
    %1736 = vmatpush2.msra.mxu0 0.0
    %1737 = vmatprep.subr.mxu0 0.0
    %1738 = vmatpush2.msra.mxu0 0.0
    %1739 = vmatprep.subr.mxu0 0.0
    %1740 = vmatpush2.msra.mxu0 0.0
    %1741 = vmatprep.subr.mxu0 0.0
    %1742 = vmatpush2.msra.mxu0 0.0
    %1743 = vmatprep.subr.mxu0 0.0
    %1744 = vmatpush2.msra.mxu0 0.0
    %1745 = vmatprep.subr.mxu0 0.0
    %1746 = vmatpush2.msra.mxu0 0.0
    %1747 = vmatprep.subr.mxu0 0.0
    %1748 = vmatpush2.msra.mxu0 0.0
    %1749 = vmatprep.subr.mxu0 0.0
    %1750 = vmatpush2.msra.mxu0 0.0
    %1751 = vmatprep.subr.mxu0 0.0
    %1752 = vmatpush2.msra.mxu0 0.0
    %1753 = vmatprep.subr.mxu0 0.0
    %1754 = vmatpush2.msra.mxu0 0.0
    %1755 = vmatprep.subr.mxu0 0.0
    %1756 = vmatpush2.msra.mxu0 0.0
    %1757 = vmatprep.subr.mxu0 0.0
    %1758 = vmatpush2.msra.mxu0 0.0
    %1759 = vmatprep.subr.mxu0 0.0
    %1760 = vmatpush2.msra.mxu0 0.0
    %1761 = vmatprep.mubr.f32.mxu0 0.0
    %1762 = vmatmul.mubr.f32.gmra.mxu0 %v1691
    %v1763 = vpop.f32.mrf.mxu0
    %v1764 = vadd.f32 0.0, %v1763
    %v1765 = vpop.f32.mrf.mxu0
    %v1766 = vadd.f32 0.0, %v1765
    %1767 = vdwg.mxu0
    %1768 = vmatprep.subr.mxu0 %v530
    %1769 = vmatpush1.msra.mxu0 %v529
    %1770 = vmatprep.subr.mxu0 %v526
    %1771 = vmatpush1.msra.mxu0 %v525
    %1772 = vmatprep.subr.mxu0 %v522
    %1773 = vmatpush1.msra.mxu0 %v521
    %1774 = vmatprep.subr.mxu0 %v518
    %1775 = vmatpush1.msra.mxu0 %v517
    %1776 = vmatprep.subr.mxu0 %v514
    %1777 = vmatpush1.msra.mxu0 %v513
    %1778 = vmatprep.subr.mxu0 %v510
    %1779 = vmatpush1.msra.mxu0 %v509
    %1780 = vmatprep.subr.mxu0 %v506
    %1781 = vmatpush1.msra.mxu0 %v505
    %1782 = vmatprep.subr.mxu0 %v502
    %1783 = vmatpush1.msra.mxu0 %v501
    %1784 = vmatprep.subr.mxu0 %v498
    %1785 = vmatpush1.msra.mxu0 %v497
    %1786 = vmatprep.subr.mxu0 %v494
    %1787 = vmatpush1.msra.mxu0 %v493
    %1788 = vmatprep.subr.mxu0 %v490
    %1789 = vmatpush1.msra.mxu0 %v489
    %1790 = vmatprep.subr.mxu0 %v486
    %1791 = vmatpush1.msra.mxu0 %v485
    %1792 = vmatprep.subr.mxu0 %v482
    %1793 = vmatpush1.msra.mxu0 %v481
    %1794 = vmatprep.subr.mxu0 %v478
    %1795 = vmatpush1.msra.mxu0 %v477
    %1796 = vmatprep.subr.mxu0 %v474
    %1797 = vmatpush1.msra.mxu0 %v473
    %1798 = vmatprep.subr.mxu0 %v470
    %1799 = vmatpush1.msra.mxu0 %v469
    %1800 = vmatprep.subr.mxu0 0.0
    %1801 = vmatpush2.msra.mxu0 0.0
    %1802 = vmatprep.subr.mxu0 0.0
    %1803 = vmatpush2.msra.mxu0 0.0
    %1804 = vmatprep.subr.mxu0 0.0
    %1805 = vmatpush2.msra.mxu0 0.0
    %1806 = vmatprep.subr.mxu0 0.0
    %1807 = vmatpush2.msra.mxu0 0.0
    %1808 = vmatprep.subr.mxu0 0.0
    %1809 = vmatpush2.msra.mxu0 0.0
    %1810 = vmatprep.subr.mxu0 0.0
    %1811 = vmatpush2.msra.mxu0 0.0
    %1812 = vmatprep.subr.mxu0 0.0
    %1813 = vmatpush2.msra.mxu0 0.0
    %1814 = vmatprep.subr.mxu0 0.0
    %1815 = vmatpush2.msra.mxu0 0.0
    %1816 = vmatprep.subr.mxu0 0.0
    %1817 = vmatpush2.msra.mxu0 0.0
    %1818 = vmatprep.subr.mxu0 0.0
    %1819 = vmatpush2.msra.mxu0 0.0
    %1820 = vmatprep.subr.mxu0 0.0
    %1821 = vmatpush2.msra.mxu0 0.0
    %1822 = vmatprep.subr.mxu0 0.0
    %1823 = vmatpush2.msra.mxu0 0.0
    %1824 = vmatprep.subr.mxu0 0.0
    %1825 = vmatpush2.msra.mxu0 0.0
    %1826 = vmatprep.subr.mxu0 0.0
    %1827 = vmatpush2.msra.mxu0 0.0
    %1828 = vmatprep.subr.mxu0 0.0
    %1829 = vmatpush2.msra.mxu0 0.0
    %1830 = vmatprep.subr.mxu0 0.0
    %1831 = vmatpush2.msra.mxu0 0.0
    %1832 = vmatprep.mubr.f32.mxu0 0.0
    %1833 = vmatmul.mubr.f32.gmra.mxu0 %v1691
    %v1834 = vpop.f32.mrf.mxu0
    %v1835 = vadd.f32 0.0, %v1834
    %v1836 = vpop.f32.mrf.mxu0
    %v1837 = vadd.f32 0.0, %v1836
    %1838 = vdwg.mxu0
    %v1839 = vadd.f32 %v1693, %v1764
    %v1840 = vadd.f32 %v1694, %v1766
    %v1841 = vadd.f32 %v1695, %v1835
    %v1842 = vadd.f32 %v1696, %v1837
    %v1843 = vtanh.pop %v1839
    %v1844 = vtanh.pop %v1840
    %v1845 = vtanh.pop %v1841
    %v1846 = vtanh.pop %v1842
    %v1847 = vmul.f32 %v1843, 0.5
    %v1848 = vadd.f32 %v1847, 0.5
    %v1849 = vmul.f32 %v1844, 0.5
    %v1850 = vadd.f32 %v1849, 0.5
    %v1851 = vmul.f32 %v1845, 0.5
    %v1852 = vadd.f32 %v1851, 0.5
    %v1853 = vmul.f32 %v1850, %v1689
    %v1854 = vmul.f32 %v1848, %v1846
    %v1855 = vadd.f32 %v1853, %v1854
    %v1856 = vtanh.pop %v1855
    %v1857 = vmul.f32 %v1852, %v1856
    %1858 = vst [vmem:[#allocation3 + $0x38] sm:$0xff] %v1857
    %v1859 = vld [vmem:[#allocation3] sm:$0xff]
    %v1860 = vld [vmem:[#allocation3 + $0x8] sm:$0xff]
    %v1861 = vld [vmem:[#allocation3 + $0x10] sm:$0xff]
    %v1862 = vld [vmem:[#allocation3 + $0x18] sm:$0xff]
    %v1863 = vld [vmem:[#allocation3 + $0x20] sm:$0xff]
    %v1864 = vld [vmem:[#allocation3 + $0x28] sm:$0xff]
    %v1865 = vld [vmem:[#allocation3 + $0x30] sm:$0xff]
    %v1866 = vld [vmem:[#allocation3 + $0x38] sm:$0xff]
    %v1867 = vld [vmem:[#allocation10] sm:$0xff]
    %v1868 = vld [vmem:[#allocation10 + $0x8] sm:$0xff]
    %v1869 = vld [vmem:[#allocation10 + $0x10] sm:$0xff]
    %v1870 = vld [vmem:[#allocation10 + $0x18] sm:$0xff]
    %v1871 = vld [vmem:[#allocation10 + $0x20] sm:$0xff]
    %v1872 = vld [vmem:[#allocation10 + $0x28] sm:$0xff]
    %v1873 = vld [vmem:[#allocation10 + $0x30] sm:$0xff]
    %v1874 = vld [vmem:[#allocation10 + $0x38] sm:$0xff]
    %v1875 = vld [vmem:[#allocation10 + $0x40] sm:$0xff]
    %v1876 = vld [vmem:[#allocation10 + $0x48] sm:$0xff]
    %v1877 = vld [vmem:[#allocation10 + $0x50] sm:$0xff]
    %v1878 = vld [vmem:[#allocation10 + $0x58] sm:$0xff]
    %v1879 = vld [vmem:[#allocation10 + $0x60] sm:$0xff]
    %v1880 = vld [vmem:[#allocation10 + $0x68] sm:$0xff]
    %v1881 = vld [vmem:[#allocation10 + $0x70] sm:$0xff]
    %v1882 = vld [vmem:[#allocation10 + $0x78] sm:$0xff]
    %v1883 = vld [vmem:[#allocation10 + $0x80] sm:$0xff]
    %v1884 = vld [vmem:[#allocation10 + $0x88] sm:$0xff]
    %v1885 = vld [vmem:[#allocation10 + $0x90] sm:$0xff]
    %v1886 = vld [vmem:[#allocation10 + $0x98] sm:$0xff]
    %v1887 = vld [vmem:[#allocation10 + $0xa0] sm:$0xff]
    %v1888 = vld [vmem:[#allocation10 + $0xa8] sm:$0xff]
    %v1889 = vld [vmem:[#allocation10 + $0xb0] sm:$0xff]
    %v1890 = vld [vmem:[#allocation10 + $0xb8] sm:$0xff]
    %v1891 = vld [vmem:[#allocation10 + $0xc0] sm:$0xff]
    %v1892 = vld [vmem:[#allocation10 + $0xc8] sm:$0xff]
    %v1893 = vld [vmem:[#allocation10 + $0xd0] sm:$0xff]
    %v1894 = vld [vmem:[#allocation10 + $0xd8] sm:$0xff]
    %v1895 = vld [vmem:[#allocation10 + $0xe0] sm:$0xff]
    %v1896 = vld [vmem:[#allocation10 + $0xe8] sm:$0xff]
    %v1897 = vld [vmem:[#allocation10 + $0xf0] sm:$0xff]
    %v1898 = vld [vmem:[#allocation10 + $0xf8] sm:$0xff]
    %v1899 = vld [vmem:[#allocation10 + $0x100] sm:$0xff]
    %v1900 = vld [vmem:[#allocation10 + $0x108] sm:$0xff]
    %v1901 = vld [vmem:[#allocation10 + $0x110] sm:$0xff]
    %v1902 = vld [vmem:[#allocation10 + $0x118] sm:$0xff]
    %v1903 = vld [vmem:[#allocation10 + $0x120] sm:$0xff]
    %v1904 = vld [vmem:[#allocation10 + $0x128] sm:$0xff]
    %v1905 = vld [vmem:[#allocation10 + $0x130] sm:$0xff]
    %v1906 = vld [vmem:[#allocation10 + $0x138] sm:$0xff]
    %v1907 = vld [vmem:[#allocation10 + $0x140] sm:$0xff]
    %v1908 = vld [vmem:[#allocation10 + $0x148] sm:$0xff]
    %v1909 = vld [vmem:[#allocation10 + $0x150] sm:$0xff]
    %v1910 = vld [vmem:[#allocation10 + $0x158] sm:$0xff]
    %v1911 = vld [vmem:[#allocation10 + $0x160] sm:$0xff]
    %v1912 = vld [vmem:[#allocation10 + $0x168] sm:$0xff]
    %v1913 = vld [vmem:[#allocation10 + $0x170] sm:$0xff]
    %v1914 = vld [vmem:[#allocation10 + $0x178] sm:$0xff]
    %v1915 = vld [vmem:[#allocation10 + $0x180] sm:$0xff]
    %v1916 = vld [vmem:[#allocation10 + $0x188] sm:$0xff]
    %v1917 = vld [vmem:[#allocation10 + $0x190] sm:$0xff]
    %v1918 = vld [vmem:[#allocation10 + $0x198] sm:$0xff]
    %v1919 = vld [vmem:[#allocation10 + $0x1a0] sm:$0xff]
    %v1920 = vld [vmem:[#allocation10 + $0x1a8] sm:$0xff]
    %v1921 = vld [vmem:[#allocation10 + $0x1b0] sm:$0xff]
    %v1922 = vld [vmem:[#allocation10 + $0x1b8] sm:$0xff]
    %v1923 = vld [vmem:[#allocation10 + $0x1c0] sm:$0xff]
    %v1924 = vld [vmem:[#allocation10 + $0x1c8] sm:$0xff]
    %v1925 = vld [vmem:[#allocation10 + $0x1d0] sm:$0xff]
    %v1926 = vld [vmem:[#allocation10 + $0x1d8] sm:$0xff]
    %v1927 = vld [vmem:[#allocation10 + $0x1e0] sm:$0xff]
    %v1928 = vld [vmem:[#allocation10 + $0x1e8] sm:$0xff]
    %v1929 = vld [vmem:[#allocation10 + $0x1f0] sm:$0xff]
    %v1930 = vld [vmem:[#allocation10 + $0x1f8] sm:$0xff]
    %v1931 = vld [vmem:[%s6] sm:$0xf]
    %v1933 = vlaneseq
    %v1934 = vshrl.u32 %v1933, 7
    %v1935 = vsub.s32 0, %v1934
    %v1936 = vrot.slane %v1931, %v1935
    %v1937 = vlaneseq
    %v1938 = vshrl.u32 %v1937, 7
    %v1939 = vsub.s32 1, %v1938
    %v1940 = vrot.slane %v1931, %v1939
    %v1941 = vlaneseq
    %v1942 = vshrl.u32 %v1941, 7
    %v1943 = vsub.s32 2, %v1942
    %v1944 = vrot.slane %v1931, %v1943
    %v1945 = vlaneseq
    %v1946 = vshrl.u32 %v1945, 7
    %v1947 = vsub.s32 3, %v1946
    %v1948 = vrot.slane %v1931, %v1947
    %1953 = vmatprep.subr.mxu0 %v1928
    %1954 = vmatpush1.msra.mxu0 %v1927
    %1955 = vmatprep.subr.mxu0 %v1924
    %1956 = vmatpush1.msra.mxu0 %v1923
    %1957 = vmatprep.subr.mxu0 %v1920
    %1958 = vmatpush1.msra.mxu0 %v1919
    %1959 = vmatprep.subr.mxu0 %v1916
    %1960 = vmatpush1.msra.mxu0 %v1915
    %1961 = vmatprep.subr.mxu0 %v1912
    %1962 = vmatpush1.msra.mxu0 %v1911
    %1963 = vmatprep.subr.mxu0 %v1908
    %1964 = vmatpush1.msra.mxu0 %v1907
    %1965 = vmatprep.subr.mxu0 %v1904
    %1966 = vmatpush1.msra.mxu0 %v1903
    %1967 = vmatprep.subr.mxu0 %v1900
    %1968 = vmatpush1.msra.mxu0 %v1899
    %1969 = vmatprep.subr.mxu0 %v1896
    %1970 = vmatpush1.msra.mxu0 %v1895
    %1971 = vmatprep.subr.mxu0 %v1892
    %1972 = vmatpush1.msra.mxu0 %v1891
    %1973 = vmatprep.subr.mxu0 %v1888
    %1974 = vmatpush1.msra.mxu0 %v1887
    %1975 = vmatprep.subr.mxu0 %v1884
    %1976 = vmatpush1.msra.mxu0 %v1883
    %1977 = vmatprep.subr.mxu0 %v1880
    %1978 = vmatpush1.msra.mxu0 %v1879
    %1979 = vmatprep.subr.mxu0 %v1876
    %1980 = vmatpush1.msra.mxu0 %v1875
    %1981 = vmatprep.subr.mxu0 %v1872
    %1982 = vmatpush1.msra.mxu0 %v1871
    %1983 = vmatprep.subr.mxu0 %v1868
    %1984 = vmatpush1.msra.mxu0 %v1867
    %1985 = vmatprep.subr.mxu0 0.0
    %1986 = vmatpush2.msra.mxu0 0.0
    %1987 = vmatprep.subr.mxu0 0.0
    %1988 = vmatpush2.msra.mxu0 0.0
    %1989 = vmatprep.subr.mxu0 0.0
    %1990 = vmatpush2.msra.mxu0 0.0
    %1991 = vmatprep.subr.mxu0 0.0
    %1992 = vmatpush2.msra.mxu0 0.0
    %1993 = vmatprep.subr.mxu0 0.0
    %1994 = vmatpush2.msra.mxu0 0.0
    %1995 = vmatprep.subr.mxu0 0.0
    %1996 = vmatpush2.msra.mxu0 0.0
    %1997 = vmatprep.subr.mxu0 0.0
    %1998 = vmatpush2.msra.mxu0 0.0
    %1999 = vmatprep.subr.mxu0 0.0
    %2000 = vmatpush2.msra.mxu0 0.0
    %2001 = vmatprep.subr.mxu0 0.0
    %2002 = vmatpush2.msra.mxu0 0.0
    %2003 = vmatprep.subr.mxu0 0.0
    %2004 = vmatpush2.msra.mxu0 0.0
    %2005 = vmatprep.subr.mxu0 0.0
    %2006 = vmatpush2.msra.mxu0 0.0
    %2007 = vmatprep.subr.mxu0 0.0
    %2008 = vmatpush2.msra.mxu0 0.0
    %2009 = vmatprep.subr.mxu0 0.0
    %2010 = vmatpush2.msra.mxu0 0.0
    %2011 = vmatprep.subr.mxu0 0.0
    %2012 = vmatpush2.msra.mxu0 0.0
    %2013 = vmatprep.subr.mxu0 0.0
    %2014 = vmatpush2.msra.mxu0 0.0
    %2015 = vmatprep.subr.mxu0 0.0
    %2016 = vmatpush2.msra.mxu0 0.0
    %2017 = vmatprep.mubr.f32.mxu0 0.0
    %2018 = vmatmul.mubr.f32.gmra.mxu0 %v1859
    %v2019 = vpop.f32.mrf.mxu0
    %v2020 = vadd.f32 %v1936, %v2019
    %v2021 = vpop.f32.mrf.mxu0
    %v2022 = vadd.f32 %v1940, %v2021
    %2023 = vmatprep.mubr.f32.mxu0 0.0
    %2024 = vmatmul.mubr.f32.gmra.mxu0 %v1860
    %v2025 = vpop.f32.mrf.mxu0
    %v2026 = vadd.f32 %v1936, %v2025
    %v2027 = vpop.f32.mrf.mxu0
    %v2028 = vadd.f32 %v1940, %v2027
    %2029 = vmatprep.mubr.f32.mxu0 0.0
    %2030 = vmatmul.mubr.f32.gmra.mxu0 %v1861
    %v2031 = vpop.f32.mrf.mxu0
    %v2032 = vadd.f32 %v1936, %v2031
    %v2033 = vpop.f32.mrf.mxu0
    %v2034 = vadd.f32 %v1940, %v2033
    %2035 = vmatprep.mubr.f32.mxu0 0.0
    %2036 = vmatmul.mubr.f32.gmra.mxu0 %v1862
    %v2037 = vpop.f32.mrf.mxu0
    %v2038 = vadd.f32 %v1936, %v2037
    %v2039 = vpop.f32.mrf.mxu0
    %v2040 = vadd.f32 %v1940, %v2039
    %2041 = vmatprep.mubr.f32.mxu0 0.0
    %2042 = vmatmul.mubr.f32.gmra.mxu0 %v1863
    %v2043 = vpop.f32.mrf.mxu0
    %v2044 = vadd.f32 %v1936, %v2043
    %v2045 = vpop.f32.mrf.mxu0
    %v2046 = vadd.f32 %v1940, %v2045
    %2047 = vmatprep.mubr.f32.mxu0 0.0
    %2048 = vmatmul.mubr.f32.gmra.mxu0 %v1864
    %v2049 = vpop.f32.mrf.mxu0
    %v2050 = vadd.f32 %v1936, %v2049
    %v2051 = vpop.f32.mrf.mxu0
    %v2052 = vadd.f32 %v1940, %v2051
    %2053 = vmatprep.mubr.f32.mxu0 0.0
    %2054 = vmatmul.mubr.f32.gmra.mxu0 %v1865
    %v2055 = vpop.f32.mrf.mxu0
    %v2056 = vadd.f32 %v1936, %v2055
    %v2057 = vpop.f32.mrf.mxu0
    %v2058 = vadd.f32 %v1940, %v2057
    %2059 = vmatprep.mubr.f32.mxu0 0.0
    %2060 = vmatmul.mubr.f32.gmra.mxu0 %v1866
    %v2061 = vpop.f32.mrf.mxu0
    %v2062 = vadd.f32 %v1936, %v2061
    %v2063 = vpop.f32.mrf.mxu0
    %v2064 = vadd.f32 %v1940, %v2063
    %2065 = vdwg.mxu0
    %2066 = vmatprep.subr.mxu0 %v1930
    %2067 = vmatpush1.msra.mxu0 %v1929
    %2068 = vmatprep.subr.mxu0 %v1926
    %2069 = vmatpush1.msra.mxu0 %v1925
    %2070 = vmatprep.subr.mxu0 %v1922
    %2071 = vmatpush1.msra.mxu0 %v1921
    %2072 = vmatprep.subr.mxu0 %v1918
    %2073 = vmatpush1.msra.mxu0 %v1917
    %2074 = vmatprep.subr.mxu0 %v1914
    %2075 = vmatpush1.msra.mxu0 %v1913
    %2076 = vmatprep.subr.mxu0 %v1910
    %2077 = vmatpush1.msra.mxu0 %v1909
    %2078 = vmatprep.subr.mxu0 %v1906
    %2079 = vmatpush1.msra.mxu0 %v1905
    %2080 = vmatprep.subr.mxu0 %v1902
    %2081 = vmatpush1.msra.mxu0 %v1901
    %2082 = vmatprep.subr.mxu0 %v1898
    %2083 = vmatpush1.msra.mxu0 %v1897
    %2084 = vmatprep.subr.mxu0 %v1894
    %2085 = vmatpush1.msra.mxu0 %v1893
    %2086 = vmatprep.subr.mxu0 %v1890
    %2087 = vmatpush1.msra.mxu0 %v1889
    %2088 = vmatprep.subr.mxu0 %v1886
    %2089 = vmatpush1.msra.mxu0 %v1885
    %2090 = vmatprep.subr.mxu0 %v1882
    %2091 = vmatpush1.msra.mxu0 %v1881
    %2092 = vmatprep.subr.mxu0 %v1878
    %2093 = vmatpush1.msra.mxu0 %v1877
    %2094 = vmatprep.subr.mxu0 %v1874
    %2095 = vmatpush1.msra.mxu0 %v1873
    %2096 = vmatprep.subr.mxu0 %v1870
    %2097 = vmatpush1.msra.mxu0 %v1869
    %2098 = vmatprep.subr.mxu0 0.0
    %2099 = vmatpush2.msra.mxu0 0.0
    %2100 = vmatprep.subr.mxu0 0.0
    %2101 = vmatpush2.msra.mxu0 0.0
    %2102 = vmatprep.subr.mxu0 0.0
    %2103 = vmatpush2.msra.mxu0 0.0
    %2104 = vmatprep.subr.mxu0 0.0
    %2105 = vmatpush2.msra.mxu0 0.0
    %2106 = vmatprep.subr.mxu0 0.0
    %2107 = vmatpush2.msra.mxu0 0.0
    %2108 = vmatprep.subr.mxu0 0.0
    %2109 = vmatpush2.msra.mxu0 0.0
    %2110 = vmatprep.subr.mxu0 0.0
    %2111 = vmatpush2.msra.mxu0 0.0
    %2112 = vmatprep.subr.mxu0 0.0
    %2113 = vmatpush2.msra.mxu0 0.0
    %2114 = vmatprep.subr.mxu0 0.0
    %2115 = vmatpush2.msra.mxu0 0.0
    %2116 = vmatprep.subr.mxu0 0.0
    %2117 = vmatpush2.msra.mxu0 0.0
    %2118 = vmatprep.subr.mxu0 0.0
    %2119 = vmatpush2.msra.mxu0 0.0
    %2120 = vmatprep.subr.mxu0 0.0
    %2121 = vmatpush2.msra.mxu0 0.0
    %2122 = vmatprep.subr.mxu0 0.0
    %2123 = vmatpush2.msra.mxu0 0.0
    %2124 = vmatprep.subr.mxu0 0.0
    %2125 = vmatpush2.msra.mxu0 0.0
    %2126 = vmatprep.subr.mxu0 0.0
    %2127 = vmatpush2.msra.mxu0 0.0
    %2128 = vmatprep.subr.mxu0 0.0
    %2129 = vmatpush2.msra.mxu0 0.0
    %2130 = vmatprep.mubr.f32.mxu0 0.0
    %2131 = vmatmul.mubr.f32.gmra.mxu0 %v1859
    %v2132 = vpop.f32.mrf.mxu0
    %v2133 = vadd.f32 %v1944, %v2132
    %v2134 = vpop.f32.mrf.mxu0
    %v2135 = vadd.f32 %v1948, %v2134
    %2136 = vmatprep.mubr.f32.mxu0 0.0
    %2137 = vmatmul.mubr.f32.gmra.mxu0 %v1860
    %v2138 = vpop.f32.mrf.mxu0
    %v2139 = vadd.f32 %v1944, %v2138
    %v2140 = vpop.f32.mrf.mxu0
    %v2141 = vadd.f32 %v1948, %v2140
    %2142 = vmatprep.mubr.f32.mxu0 0.0
    %2143 = vmatmul.mubr.f32.gmra.mxu0 %v1861
    %v2144 = vpop.f32.mrf.mxu0
    %v2145 = vadd.f32 %v1944, %v2144
    %v2146 = vpop.f32.mrf.mxu0
    %v2147 = vadd.f32 %v1948, %v2146
    %2148 = vmatprep.mubr.f32.mxu0 0.0
    %2149 = vmatmul.mubr.f32.gmra.mxu0 %v1862
    %v2150 = vpop.f32.mrf.mxu0
    %v2151 = vadd.f32 %v1944, %v2150
    %v2152 = vpop.f32.mrf.mxu0
    %v2153 = vadd.f32 %v1948, %v2152
    %2154 = vmatprep.mubr.f32.mxu0 0.0
    %2155 = vmatmul.mubr.f32.gmra.mxu0 %v1863
    %v2156 = vpop.f32.mrf.mxu0
    %v2157 = vadd.f32 %v1944, %v2156
    %v2158 = vpop.f32.mrf.mxu0
    %v2159 = vadd.f32 %v1948, %v2158
    %2160 = vmatprep.mubr.f32.mxu0 0.0
    %2161 = vmatmul.mubr.f32.gmra.mxu0 %v1864
    %v2162 = vpop.f32.mrf.mxu0
    %v2163 = vadd.f32 %v1944, %v2162
    %v2164 = vpop.f32.mrf.mxu0
    %v2165 = vadd.f32 %v1948, %v2164
    %2166 = vmatprep.mubr.f32.mxu0 0.0
    %2167 = vmatmul.mubr.f32.gmra.mxu0 %v1865
    %v2168 = vpop.f32.mrf.mxu0
    %v2169 = vadd.f32 %v1944, %v2168
    %v2170 = vpop.f32.mrf.mxu0
    %v2171 = vadd.f32 %v1948, %v2170
    %2172 = vmatprep.mubr.f32.mxu0 0.0
    %2173 = vmatmul.mubr.f32.gmra.mxu0 %v1866
    %v2174 = vpop.f32.mrf.mxu0
    %v2175 = vadd.f32 %v1944, %v2174
    %v2176 = vpop.f32.mrf.mxu0
    %v2177 = vadd.f32 %v1948, %v2176
    %2178 = vdwg.mxu0
    %2179 = vst [vmem:[#allocation2] sm:$0xff] %v2020
    %2180 = vst [vmem:[#allocation2 + $0x8] sm:$0xff] %v2022
    %2181 = vst [vmem:[#allocation2 + $0x10] sm:$0xff] %v2133
    %2182 = vst [vmem:[#allocation2 + $0x18] sm:$0xff] %v2135
    %2183 = vst [vmem:[#allocation2 + $0x20] sm:$0xff] %v2026
    %2184 = vst [vmem:[#allocation2 + $0x28] sm:$0xff] %v2028
    %2185 = vst [vmem:[#allocation2 + $0x30] sm:$0xff] %v2139
    %2186 = vst [vmem:[#allocation2 + $0x38] sm:$0xff] %v2141
    %2187 = vst [vmem:[#allocation2 + $0x40] sm:$0xff] %v2032
    %2188 = vst [vmem:[#allocation2 + $0x48] sm:$0xff] %v2034
    %2189 = vst [vmem:[#allocation2 + $0x50] sm:$0xff] %v2145
    %2190 = vst [vmem:[#allocation2 + $0x58] sm:$0xff] %v2147
    %2191 = vst [vmem:[#allocation2 + $0x60] sm:$0xff] %v2038
    %2192 = vst [vmem:[#allocation2 + $0x68] sm:$0xff] %v2040
    %2193 = vst [vmem:[#allocation2 + $0x70] sm:$0xff] %v2151
    %2194 = vst [vmem:[#allocation2 + $0x78] sm:$0xff] %v2153
    %2195 = vst [vmem:[#allocation2 + $0x80] sm:$0xff] %v2044
    %2196 = vst [vmem:[#allocation2 + $0x88] sm:$0xff] %v2046
    %2197 = vst [vmem:[#allocation2 + $0x90] sm:$0xff] %v2157
    %2198 = vst [vmem:[#allocation2 + $0x98] sm:$0xff] %v2159
    %2199 = vst [vmem:[#allocation2 + $0xa0] sm:$0xff] %v2050
    %2200 = vst [vmem:[#allocation2 + $0xa8] sm:$0xff] %v2052
    %2201 = vst [vmem:[#allocation2 + $0xb0] sm:$0xff] %v2163
    %2202 = vst [vmem:[#allocation2 + $0xb8] sm:$0xff] %v2165
    %2203 = vst [vmem:[#allocation2 + $0xc0] sm:$0xff] %v2056
    %2204 = vst [vmem:[#allocation2 + $0xc8] sm:$0xff] %v2058
    %2205 = vst [vmem:[#allocation2 + $0xd0] sm:$0xff] %v2169
    %2206 = vst [vmem:[#allocation2 + $0xd8] sm:$0xff] %v2171
    %2207 = vst [vmem:[#allocation2 + $0xe0] sm:$0xff] %v2062
    %2208 = vst [vmem:[#allocation2 + $0xe8] sm:$0xff] %v2064
    %2209 = vst [vmem:[#allocation2 + $0xf0] sm:$0xff] %v2175
    %2210 = vst [vmem:[#allocation2 + $0xf8] sm:$0xff] %v2177
    %v2211 = vld [vmem:[#allocation12] sm:$0xff]
    %v2212 = vld [vmem:[#allocation12 + $0x8] sm:$0xff]
    %v2213 = vld [vmem:[#allocation12 + $0x10] sm:$0xff]
    %v2214 = vld [vmem:[#allocation12 + $0x18] sm:$0xff]
    %v2215 = vld [vmem:[#allocation12 + $0x20] sm:$0xff]
    %v2216 = vld [vmem:[#allocation12 + $0x28] sm:$0xff]
    %v2217 = vld [vmem:[#allocation12 + $0x30] sm:$0xff]
    %v2218 = vld [vmem:[#allocation12 + $0x38] sm:$0xff]
    %v2219 = vld [vmem:[#allocation12 + $0x40] sm:$0xff]
    %v2220 = vld [vmem:[#allocation12 + $0x48] sm:$0xff]
    %v2221 = vld [vmem:[#allocation12 + $0x50] sm:$0xff]
    %v2222 = vld [vmem:[#allocation12 + $0x58] sm:$0xff]
    %v2223 = vld [vmem:[#allocation12 + $0x60] sm:$0xff]
    %v2224 = vld [vmem:[#allocation12 + $0x68] sm:$0xff]
    %v2225 = vld [vmem:[#allocation12 + $0x70] sm:$0xff]
    %v2226 = vld [vmem:[#allocation12 + $0x78] sm:$0xff]
    %v2227 = vld [vmem:[#allocation12 + $0x80] sm:$0xff]
    %v2228 = vld [vmem:[#allocation12 + $0x88] sm:$0xff]
    %v2229 = vld [vmem:[#allocation12 + $0x90] sm:$0xff]
    %v2230 = vld [vmem:[#allocation12 + $0x98] sm:$0xff]
    %v2231 = vld [vmem:[#allocation12 + $0xa0] sm:$0xff]
    %v2232 = vld [vmem:[#allocation12 + $0xa8] sm:$0xff]
    %v2233 = vld [vmem:[#allocation12 + $0xb0] sm:$0xff]
    %v2234 = vld [vmem:[#allocation12 + $0xb8] sm:$0xff]
    %v2235 = vld [vmem:[#allocation12 + $0xc0] sm:$0xff]
    %v2236 = vld [vmem:[#allocation12 + $0xc8] sm:$0xff]
    %v2237 = vld [vmem:[#allocation12 + $0xd0] sm:$0xff]
    %v2238 = vld [vmem:[#allocation12 + $0xd8] sm:$0xff]
    %v2239 = vld [vmem:[#allocation12 + $0xe0] sm:$0xff]
    %v2240 = vld [vmem:[#allocation12 + $0xe8] sm:$0xff]
    %v2241 = vld [vmem:[#allocation12 + $0xf0] sm:$0xff]
    %v2242 = vld [vmem:[#allocation12 + $0xf8] sm:$0xff]
    %v2243 = vld [vmem:[#allocation12 + $0x100] sm:$0xff]
    %v2244 = vld [vmem:[#allocation12 + $0x108] sm:$0xff]
    %v2245 = vld [vmem:[#allocation12 + $0x110] sm:$0xff]
    %v2246 = vld [vmem:[#allocation12 + $0x118] sm:$0xff]
    %v2247 = vld [vmem:[#allocation12 + $0x120] sm:$0xff]
    %v2248 = vld [vmem:[#allocation12 + $0x128] sm:$0xff]
    %v2249 = vld [vmem:[#allocation12 + $0x130] sm:$0xff]
    %v2250 = vld [vmem:[#allocation12 + $0x138] sm:$0xff]
    %v2251 = vld [vmem:[#allocation12 + $0x140] sm:$0xff]
    %v2252 = vld [vmem:[#allocation12 + $0x148] sm:$0xff]
    %v2253 = vld [vmem:[#allocation12 + $0x150] sm:$0xff]
    %v2254 = vld [vmem:[#allocation12 + $0x158] sm:$0xff]
    %v2255 = vld [vmem:[#allocation12 + $0x160] sm:$0xff]
    %v2256 = vld [vmem:[#allocation12 + $0x168] sm:$0xff]
    %v2257 = vld [vmem:[#allocation12 + $0x170] sm:$0xff]
    %v2258 = vld [vmem:[#allocation12 + $0x178] sm:$0xff]
    %v2259 = vld [vmem:[#allocation12 + $0x180] sm:$0xff]
    %v2260 = vld [vmem:[#allocation12 + $0x188] sm:$0xff]
    %v2261 = vld [vmem:[#allocation12 + $0x190] sm:$0xff]
    %v2262 = vld [vmem:[#allocation12 + $0x198] sm:$0xff]
    %v2263 = vld [vmem:[#allocation12 + $0x1a0] sm:$0xff]
    %v2264 = vld [vmem:[#allocation12 + $0x1a8] sm:$0xff]
    %v2265 = vld [vmem:[#allocation12 + $0x1b0] sm:$0xff]
    %v2266 = vld [vmem:[#allocation12 + $0x1b8] sm:$0xff]
    %v2267 = vld [vmem:[#allocation12 + $0x1c0] sm:$0xff]
    %v2268 = vld [vmem:[#allocation12 + $0x1c8] sm:$0xff]
    %v2269 = vld [vmem:[#allocation12 + $0x1d0] sm:$0xff]
    %v2270 = vld [vmem:[#allocation12 + $0x1d8] sm:$0xff]
    %v2271 = vld [vmem:[#allocation12 + $0x1e0] sm:$0xff]
    %v2272 = vld [vmem:[#allocation12 + $0x1e8] sm:$0xff]
    %v2273 = vld [vmem:[#allocation12 + $0x1f0] sm:$0xff]
    %v2274 = vld [vmem:[#allocation12 + $0x1f8] sm:$0xff]
    %v2275 = vld [vmem:[#allocation2] sm:$0xff]
    %v2276 = vld [vmem:[#allocation2 + $0x8] sm:$0xff]
    %v2277 = vld [vmem:[#allocation2 + $0x10] sm:$0xff]
    %v2278 = vld [vmem:[#allocation2 + $0x18] sm:$0xff]
    %2279 = vmatprep.subr.mxu0 %v2272
    %2280 = vmatpush1.msra.mxu0 %v2271
    %2281 = vmatprep.subr.mxu0 %v2268
    %2282 = vmatpush1.msra.mxu0 %v2267
    %2283 = vmatprep.subr.mxu0 %v2264
    %2284 = vmatpush1.msra.mxu0 %v2263
    %2285 = vmatprep.subr.mxu0 %v2260
    %2286 = vmatpush1.msra.mxu0 %v2259
    %2287 = vmatprep.subr.mxu0 %v2256
    %2288 = vmatpush1.msra.mxu0 %v2255
    %2289 = vmatprep.subr.mxu0 %v2252
    %2290 = vmatpush1.msra.mxu0 %v2251
    %2291 = vmatprep.subr.mxu0 %v2248
    %2292 = vmatpush1.msra.mxu0 %v2247
    %2293 = vmatprep.subr.mxu0 %v2244
    %2294 = vmatpush1.msra.mxu0 %v2243
    %2295 = vmatprep.subr.mxu0 %v2240
    %2296 = vmatpush1.msra.mxu0 %v2239
    %2297 = vmatprep.subr.mxu0 %v2236
    %2298 = vmatpush1.msra.mxu0 %v2235
    %2299 = vmatprep.subr.mxu0 %v2232
    %2300 = vmatpush1.msra.mxu0 %v2231
    %2301 = vmatprep.subr.mxu0 %v2228
    %2302 = vmatpush1.msra.mxu0 %v2227
    %2303 = vmatprep.subr.mxu0 %v2224
    %2304 = vmatpush1.msra.mxu0 %v2223
    %2305 = vmatprep.subr.mxu0 %v2220
    %2306 = vmatpush1.msra.mxu0 %v2219
    %2307 = vmatprep.subr.mxu0 %v2216
    %2308 = vmatpush1.msra.mxu0 %v2215
    %2309 = vmatprep.subr.mxu0 %v2212
    %2310 = vmatpush1.msra.mxu0 %v2211
    %2311 = vmatprep.subr.mxu0 0.0
    %2312 = vmatpush2.msra.mxu0 0.0
    %2313 = vmatprep.subr.mxu0 0.0
    %2314 = vmatpush2.msra.mxu0 0.0
    %2315 = vmatprep.subr.mxu0 0.0
    %2316 = vmatpush2.msra.mxu0 0.0
    %2317 = vmatprep.subr.mxu0 0.0
    %2318 = vmatpush2.msra.mxu0 0.0
    %2319 = vmatprep.subr.mxu0 0.0
    %2320 = vmatpush2.msra.mxu0 0.0
    %2321 = vmatprep.subr.mxu0 0.0
    %2322 = vmatpush2.msra.mxu0 0.0
    %2323 = vmatprep.subr.mxu0 0.0
    %2324 = vmatpush2.msra.mxu0 0.0
    %2325 = vmatprep.subr.mxu0 0.0
    %2326 = vmatpush2.msra.mxu0 0.0
    %2327 = vmatprep.subr.mxu0 0.0
    %2328 = vmatpush2.msra.mxu0 0.0
    %2329 = vmatprep.subr.mxu0 0.0
    %2330 = vmatpush2.msra.mxu0 0.0
    %2331 = vmatprep.subr.mxu0 0.0
    %2332 = vmatpush2.msra.mxu0 0.0
    %2333 = vmatprep.subr.mxu0 0.0
    %2334 = vmatpush2.msra.mxu0 0.0
    %2335 = vmatprep.subr.mxu0 0.0
    %2336 = vmatpush2.msra.mxu0 0.0
    %2337 = vmatprep.subr.mxu0 0.0
    %2338 = vmatpush2.msra.mxu0 0.0
    %2339 = vmatprep.subr.mxu0 0.0
    %2340 = vmatpush2.msra.mxu0 0.0
    %2341 = vmatprep.subr.mxu0 0.0
    %2342 = vmatpush2.msra.mxu0 0.0
    %2343 = vmatprep.mubr.f32.mxu0 0.0
    %2344 = vmatmul.mubr.f32.gmra.mxu0 0.0
    %v2345 = vpop.f32.mrf.mxu0
    %v2346 = vadd.f32 0.0, %v2345
    %v2347 = vpop.f32.mrf.mxu0
    %v2348 = vadd.f32 0.0, %v2347
    %2349 = vdwg.mxu0
    %2350 = vmatprep.subr.mxu0 %v2274
    %2351 = vmatpush1.msra.mxu0 %v2273
    %2352 = vmatprep.subr.mxu0 %v2270
    %2353 = vmatpush1.msra.mxu0 %v2269
    %2354 = vmatprep.subr.mxu0 %v2266
    %2355 = vmatpush1.msra.mxu0 %v2265
    %2356 = vmatprep.subr.mxu0 %v2262
    %2357 = vmatpush1.msra.mxu0 %v2261
    %2358 = vmatprep.subr.mxu0 %v2258
    %2359 = vmatpush1.msra.mxu0 %v2257
    %2360 = vmatprep.subr.mxu0 %v2254
    %2361 = vmatpush1.msra.mxu0 %v2253
    %2362 = vmatprep.subr.mxu0 %v2250
    %2363 = vmatpush1.msra.mxu0 %v2249
    %2364 = vmatprep.subr.mxu0 %v2246
    %2365 = vmatpush1.msra.mxu0 %v2245
    %2366 = vmatprep.subr.mxu0 %v2242
    %2367 = vmatpush1.msra.mxu0 %v2241
    %2368 = vmatprep.subr.mxu0 %v2238
    %2369 = vmatpush1.msra.mxu0 %v2237
    %2370 = vmatprep.subr.mxu0 %v2234
    %2371 = vmatpush1.msra.mxu0 %v2233
    %2372 = vmatprep.subr.mxu0 %v2230
    %2373 = vmatpush1.msra.mxu0 %v2229
    %2374 = vmatprep.subr.mxu0 %v2226
    %2375 = vmatpush1.msra.mxu0 %v2225
    %2376 = vmatprep.subr.mxu0 %v2222
    %2377 = vmatpush1.msra.mxu0 %v2221
    %2378 = vmatprep.subr.mxu0 %v2218
    %2379 = vmatpush1.msra.mxu0 %v2217
    %2380 = vmatprep.subr.mxu0 %v2214
    %2381 = vmatpush1.msra.mxu0 %v2213
    %2382 = vmatprep.subr.mxu0 0.0
    %2383 = vmatpush2.msra.mxu0 0.0
    %2384 = vmatprep.subr.mxu0 0.0
    %2385 = vmatpush2.msra.mxu0 0.0
    %2386 = vmatprep.subr.mxu0 0.0
    %2387 = vmatpush2.msra.mxu0 0.0
    %2388 = vmatprep.subr.mxu0 0.0
    %2389 = vmatpush2.msra.mxu0 0.0
    %2390 = vmatprep.subr.mxu0 0.0
    %2391 = vmatpush2.msra.mxu0 0.0
    %2392 = vmatprep.subr.mxu0 0.0
    %2393 = vmatpush2.msra.mxu0 0.0
    %2394 = vmatprep.subr.mxu0 0.0
    %2395 = vmatpush2.msra.mxu0 0.0
    %2396 = vmatprep.subr.mxu0 0.0
    %2397 = vmatpush2.msra.mxu0 0.0
    %2398 = vmatprep.subr.mxu0 0.0
    %2399 = vmatpush2.msra.mxu0 0.0
    %2400 = vmatprep.subr.mxu0 0.0
    %2401 = vmatpush2.msra.mxu0 0.0
    %2402 = vmatprep.subr.mxu0 0.0
    %2403 = vmatpush2.msra.mxu0 0.0
    %2404 = vmatprep.subr.mxu0 0.0
    %2405 = vmatpush2.msra.mxu0 0.0
    %2406 = vmatprep.subr.mxu0 0.0
    %2407 = vmatpush2.msra.mxu0 0.0
    %2408 = vmatprep.subr.mxu0 0.0
    %2409 = vmatpush2.msra.mxu0 0.0
    %2410 = vmatprep.subr.mxu0 0.0
    %2411 = vmatpush2.msra.mxu0 0.0
    %2412 = vmatprep.subr.mxu0 0.0
    %2413 = vmatpush2.msra.mxu0 0.0
    %2414 = vmatprep.mubr.f32.mxu0 0.0
    %2415 = vmatmul.mubr.f32.gmra.mxu0 0.0
    %v2416 = vpop.f32.mrf.mxu0
    %v2417 = vadd.f32 0.0, %v2416
    %v2418 = vpop.f32.mrf.mxu0
    %v2419 = vadd.f32 0.0, %v2418
    %2420 = vdwg.mxu0
    %v2421 = vadd.f32 %v2275, %v2346
    %v2422 = vadd.f32 %v2276, %v2348
    %v2423 = vadd.f32 %v2277, %v2417
    %v2424 = vadd.f32 %v2278, %v2419
    %v2425 = vtanh.pop %v2421
    %v2426 = vtanh.pop %v2422
    %v2427 = vtanh.pop %v2423
    %v2428 = vtanh.pop %v2424
    %v2429 = vmul.f32 %v2425, 0.5
    %v2430 = vadd.f32 %v2429, 0.5
    %v2431 = vmul.f32 %v2426, 0.5
    %v2432 = vadd.f32 %v2431, 0.5
    %v2433 = vmul.f32 %v2427, 0.5
    %v2434 = vadd.f32 %v2433, 0.5
    %v2435 = vmul.f32 %v2432, 0.0
    %v2436 = vmul.f32 %v2430, %v2428
    %v2437 = vadd.f32 %v2435, %v2436
    %v2438 = vtanh.pop %v2437
    %v2439 = vmul.f32 %v2434, %v2438
    %v2440 = vld [vmem:[#allocation2 + $0x20] sm:$0xff]
    %v2441 = vld [vmem:[#allocation2 + $0x28] sm:$0xff]
    %v2442 = vld [vmem:[#allocation2 + $0x30] sm:$0xff]
    %v2443 = vld [vmem:[#allocation2 + $0x38] sm:$0xff]
    %2444 = vmatprep.subr.mxu0 %v2272
    %2445 = vmatpush1.msra.mxu0 %v2271
    %2446 = vmatprep.subr.mxu0 %v2268
    %2447 = vmatpush1.msra.mxu0 %v2267
    %2448 = vmatprep.subr.mxu0 %v2264
    %2449 = vmatpush1.msra.mxu0 %v2263
    %2450 = vmatprep.subr.mxu0 %v2260
    %2451 = vmatpush1.msra.mxu0 %v2259
    %2452 = vmatprep.subr.mxu0 %v2256
    %2453 = vmatpush1.msra.mxu0 %v2255
    %2454 = vmatprep.subr.mxu0 %v2252
    %2455 = vmatpush1.msra.mxu0 %v2251
    %2456 = vmatprep.subr.mxu0 %v2248
    %2457 = vmatpush1.msra.mxu0 %v2247
    %2458 = vmatprep.subr.mxu0 %v2244
    %2459 = vmatpush1.msra.mxu0 %v2243
    %2460 = vmatprep.subr.mxu0 %v2240
    %2461 = vmatpush1.msra.mxu0 %v2239
    %2462 = vmatprep.subr.mxu0 %v2236
    %2463 = vmatpush1.msra.mxu0 %v2235
    %2464 = vmatprep.subr.mxu0 %v2232
    %2465 = vmatpush1.msra.mxu0 %v2231
    %2466 = vmatprep.subr.mxu0 %v2228
    %2467 = vmatpush1.msra.mxu0 %v2227
    %2468 = vmatprep.subr.mxu0 %v2224
    %2469 = vmatpush1.msra.mxu0 %v2223
    %2470 = vmatprep.subr.mxu0 %v2220
    %2471 = vmatpush1.msra.mxu0 %v2219
    %2472 = vmatprep.subr.mxu0 %v2216
    %2473 = vmatpush1.msra.mxu0 %v2215
    %2474 = vmatprep.subr.mxu0 %v2212
    %2475 = vmatpush1.msra.mxu0 %v2211
    %2476 = vmatprep.subr.mxu0 0.0
    %2477 = vmatpush2.msra.mxu0 0.0
    %2478 = vmatprep.subr.mxu0 0.0
    %2479 = vmatpush2.msra.mxu0 0.0
    %2480 = vmatprep.subr.mxu0 0.0
    %2481 = vmatpush2.msra.mxu0 0.0
    %2482 = vmatprep.subr.mxu0 0.0
    %2483 = vmatpush2.msra.mxu0 0.0
    %2484 = vmatprep.subr.mxu0 0.0
    %2485 = vmatpush2.msra.mxu0 0.0
    %2486 = vmatprep.subr.mxu0 0.0
    %2487 = vmatpush2.msra.mxu0 0.0
    %2488 = vmatprep.subr.mxu0 0.0
    %2489 = vmatpush2.msra.mxu0 0.0
    %2490 = vmatprep.subr.mxu0 0.0
    %2491 = vmatpush2.msra.mxu0 0.0
    %2492 = vmatprep.subr.mxu0 0.0
    %2493 = vmatpush2.msra.mxu0 0.0
    %2494 = vmatprep.subr.mxu0 0.0
    %2495 = vmatpush2.msra.mxu0 0.0
    %2496 = vmatprep.subr.mxu0 0.0
    %2497 = vmatpush2.msra.mxu0 0.0
    %2498 = vmatprep.subr.mxu0 0.0
    %2499 = vmatpush2.msra.mxu0 0.0
    %2500 = vmatprep.subr.mxu0 0.0
    %2501 = vmatpush2.msra.mxu0 0.0
    %2502 = vmatprep.subr.mxu0 0.0
    %2503 = vmatpush2.msra.mxu0 0.0
    %2504 = vmatprep.subr.mxu0 0.0
    %2505 = vmatpush2.msra.mxu0 0.0
    %2506 = vmatprep.subr.mxu0 0.0
    %2507 = vmatpush2.msra.mxu0 0.0
    %2508 = vmatprep.mubr.f32.mxu0 0.0
    %2509 = vmatmul.mubr.f32.gmra.mxu0 %v2439
    %v2510 = vpop.f32.mrf.mxu0
    %v2511 = vadd.f32 0.0, %v2510
    %v2512 = vpop.f32.mrf.mxu0
    %v2513 = vadd.f32 0.0, %v2512
    %2514 = vdwg.mxu0
    %2515 = vmatprep.subr.mxu0 %v2274
    %2516 = vmatpush1.msra.mxu0 %v2273
    %2517 = vmatprep.subr.mxu0 %v2270
    %2518 = vmatpush1.msra.mxu0 %v2269
    %2519 = vmatprep.subr.mxu0 %v2266
    %2520 = vmatpush1.msra.mxu0 %v2265
    %2521 = vmatprep.subr.mxu0 %v2262
    %2522 = vmatpush1.msra.mxu0 %v2261
    %2523 = vmatprep.subr.mxu0 %v2258
    %2524 = vmatpush1.msra.mxu0 %v2257
    %2525 = vmatprep.subr.mxu0 %v2254
    %2526 = vmatpush1.msra.mxu0 %v2253
    %2527 = vmatprep.subr.mxu0 %v2250
    %2528 = vmatpush1.msra.mxu0 %v2249
    %2529 = vmatprep.subr.mxu0 %v2246
    %2530 = vmatpush1.msra.mxu0 %v2245
    %2531 = vmatprep.subr.mxu0 %v2242
    %2532 = vmatpush1.msra.mxu0 %v2241
    %2533 = vmatprep.subr.mxu0 %v2238
    %2534 = vmatpush1.msra.mxu0 %v2237
    %2535 = vmatprep.subr.mxu0 %v2234
    %2536 = vmatpush1.msra.mxu0 %v2233
    %2537 = vmatprep.subr.mxu0 %v2230
    %2538 = vmatpush1.msra.mxu0 %v2229
    %2539 = vmatprep.subr.mxu0 %v2226
    %2540 = vmatpush1.msra.mxu0 %v2225
    %2541 = vmatprep.subr.mxu0 %v2222
    %2542 = vmatpush1.msra.mxu0 %v2221
    %2543 = vmatprep.subr.mxu0 %v2218
    %2544 = vmatpush1.msra.mxu0 %v2217
    %2545 = vmatprep.subr.mxu0 %v2214
    %2546 = vmatpush1.msra.mxu0 %v2213
    %2547 = vmatprep.subr.mxu0 0.0
    %2548 = vmatpush2.msra.mxu0 0.0
    %2549 = vmatprep.subr.mxu0 0.0
    %2550 = vmatpush2.msra.mxu0 0.0
    %2551 = vmatprep.subr.mxu0 0.0
    %2552 = vmatpush2.msra.mxu0 0.0
    %2553 = vmatprep.subr.mxu0 0.0
    %2554 = vmatpush2.msra.mxu0 0.0
    %2555 = vmatprep.subr.mxu0 0.0
    %2556 = vmatpush2.msra.mxu0 0.0
    %2557 = vmatprep.subr.mxu0 0.0
    %2558 = vmatpush2.msra.mxu0 0.0
    %2559 = vmatprep.subr.mxu0 0.0
    %2560 = vmatpush2.msra.mxu0 0.0
    %2561 = vmatprep.subr.mxu0 0.0
    %2562 = vmatpush2.msra.mxu0 0.0
    %2563 = vmatprep.subr.mxu0 0.0
    %2564 = vmatpush2.msra.mxu0 0.0
    %2565 = vmatprep.subr.mxu0 0.0
    %2566 = vmatpush2.msra.mxu0 0.0
    %2567 = vmatprep.subr.mxu0 0.0
    %2568 = vmatpush2.msra.mxu0 0.0
    %2569 = vmatprep.subr.mxu0 0.0
    %2570 = vmatpush2.msra.mxu0 0.0
    %2571 = vmatprep.subr.mxu0 0.0
    %2572 = vmatpush2.msra.mxu0 0.0
    %2573 = vmatprep.subr.mxu0 0.0
    %2574 = vmatpush2.msra.mxu0 0.0
    %2575 = vmatprep.subr.mxu0 0.0
    %2576 = vmatpush2.msra.mxu0 0.0
    %2577 = vmatprep.subr.mxu0 0.0
    %2578 = vmatpush2.msra.mxu0 0.0
    %2579 = vmatprep.mubr.f32.mxu0 0.0
    %2580 = vmatmul.mubr.f32.gmra.mxu0 %v2439
    %v2581 = vpop.f32.mrf.mxu0
    %v2582 = vadd.f32 0.0, %v2581
    %v2583 = vpop.f32.mrf.mxu0
    %v2584 = vadd.f32 0.0, %v2583
    %2585 = vdwg.mxu0
    %v2586 = vadd.f32 %v2440, %v2511
    %v2587 = vadd.f32 %v2441, %v2513
    %v2588 = vadd.f32 %v2442, %v2582
    %v2589 = vadd.f32 %v2443, %v2584
    %v2590 = vtanh.pop %v2586
    %v2591 = vtanh.pop %v2587
    %v2592 = vtanh.pop %v2588
    %v2593 = vtanh.pop %v2589
    %v2594 = vmul.f32 %v2590, 0.5
    %v2595 = vadd.f32 %v2594, 0.5
    %v2596 = vmul.f32 %v2591, 0.5
    %v2597 = vadd.f32 %v2596, 0.5
    %v2598 = vmul.f32 %v2592, 0.5
    %v2599 = vadd.f32 %v2598, 0.5
    %v2600 = vmul.f32 %v2597, %v2437
    %v2601 = vmul.f32 %v2595, %v2593
    %v2602 = vadd.f32 %v2600, %v2601
    %v2603 = vtanh.pop %v2602
    %v2604 = vmul.f32 %v2599, %v2603
    %v2605 = vld [vmem:[#allocation2 + $0x40] sm:$0xff]
    %v2606 = vld [vmem:[#allocation2 + $0x48] sm:$0xff]
    %v2607 = vld [vmem:[#allocation2 + $0x50] sm:$0xff]
    %v2608 = vld [vmem:[#allocation2 + $0x58] sm:$0xff]
    %2609 = vmatprep.subr.mxu0 %v2272
    %2610 = vmatpush1.msra.mxu0 %v2271
    %2611 = vmatprep.subr.mxu0 %v2268
    %2612 = vmatpush1.msra.mxu0 %v2267
    %2613 = vmatprep.subr.mxu0 %v2264
    %2614 = vmatpush1.msra.mxu0 %v2263
    %2615 = vmatprep.subr.mxu0 %v2260
    %2616 = vmatpush1.msra.mxu0 %v2259
    %2617 = vmatprep.subr.mxu0 %v2256
    %2618 = vmatpush1.msra.mxu0 %v2255
    %2619 = vmatprep.subr.mxu0 %v2252
    %2620 = vmatpush1.msra.mxu0 %v2251
    %2621 = vmatprep.subr.mxu0 %v2248
    %2622 = vmatpush1.msra.mxu0 %v2247
    %2623 = vmatprep.subr.mxu0 %v2244
    %2624 = vmatpush1.msra.mxu0 %v2243
    %2625 = vmatprep.subr.mxu0 %v2240
    %2626 = vmatpush1.msra.mxu0 %v2239
    %2627 = vmatprep.subr.mxu0 %v2236
    %2628 = vmatpush1.msra.mxu0 %v2235
    %2629 = vmatprep.subr.mxu0 %v2232
    %2630 = vmatpush1.msra.mxu0 %v2231
    %2631 = vmatprep.subr.mxu0 %v2228
    %2632 = vmatpush1.msra.mxu0 %v2227
    %2633 = vmatprep.subr.mxu0 %v2224
    %2634 = vmatpush1.msra.mxu0 %v2223
    %2635 = vmatprep.subr.mxu0 %v2220
    %2636 = vmatpush1.msra.mxu0 %v2219
    %2637 = vmatprep.subr.mxu0 %v2216
    %2638 = vmatpush1.msra.mxu0 %v2215
    %2639 = vmatprep.subr.mxu0 %v2212
    %2640 = vmatpush1.msra.mxu0 %v2211
    %2641 = vmatprep.subr.mxu0 0.0
    %2642 = vmatpush2.msra.mxu0 0.0
    %2643 = vmatprep.subr.mxu0 0.0
    %2644 = vmatpush2.msra.mxu0 0.0
    %2645 = vmatprep.subr.mxu0 0.0
    %2646 = vmatpush2.msra.mxu0 0.0
    %2647 = vmatprep.subr.mxu0 0.0
    %2648 = vmatpush2.msra.mxu0 0.0
    %2649 = vmatprep.subr.mxu0 0.0
    %2650 = vmatpush2.msra.mxu0 0.0
    %2651 = vmatprep.subr.mxu0 0.0
    %2652 = vmatpush2.msra.mxu0 0.0
    %2653 = vmatprep.subr.mxu0 0.0
    %2654 = vmatpush2.msra.mxu0 0.0
    %2655 = vmatprep.subr.mxu0 0.0
    %2656 = vmatpush2.msra.mxu0 0.0
    %2657 = vmatprep.subr.mxu0 0.0
    %2658 = vmatpush2.msra.mxu0 0.0
    %2659 = vmatprep.subr.mxu0 0.0
    %2660 = vmatpush2.msra.mxu0 0.0
    %2661 = vmatprep.subr.mxu0 0.0
    %2662 = vmatpush2.msra.mxu0 0.0
    %2663 = vmatprep.subr.mxu0 0.0
    %2664 = vmatpush2.msra.mxu0 0.0
    %2665 = vmatprep.subr.mxu0 0.0
    %2666 = vmatpush2.msra.mxu0 0.0
    %2667 = vmatprep.subr.mxu0 0.0
    %2668 = vmatpush2.msra.mxu0 0.0
    %2669 = vmatprep.subr.mxu0 0.0
    %2670 = vmatpush2.msra.mxu0 0.0
    %2671 = vmatprep.subr.mxu0 0.0
    %2672 = vmatpush2.msra.mxu0 0.0
    %2673 = vmatprep.mubr.f32.mxu0 0.0
    %2674 = vmatmul.mubr.f32.gmra.mxu0 %v2604
    %v2675 = vpop.f32.mrf.mxu0
    %v2676 = vadd.f32 0.0, %v2675
    %v2677 = vpop.f32.mrf.mxu0
    %v2678 = vadd.f32 0.0, %v2677
    %2679 = vdwg.mxu0
    %2680 = vmatprep.subr.mxu0 %v2274
    %2681 = vmatpush1.msra.mxu0 %v2273
    %2682 = vmatprep.subr.mxu0 %v2270
    %2683 = vmatpush1.msra.mxu0 %v2269
    %2684 = vmatprep.subr.mxu0 %v2266
    %2685 = vmatpush1.msra.mxu0 %v2265
    %2686 = vmatprep.subr.mxu0 %v2262
    %2687 = vmatpush1.msra.mxu0 %v2261
    %2688 = vmatprep.subr.mxu0 %v2258
    %2689 = vmatpush1.msra.mxu0 %v2257
    %2690 = vmatprep.subr.mxu0 %v2254
    %2691 = vmatpush1.msra.mxu0 %v2253
    %2692 = vmatprep.subr.mxu0 %v2250
    %2693 = vmatpush1.msra.mxu0 %v2249
    %2694 = vmatprep.subr.mxu0 %v2246
    %2695 = vmatpush1.msra.mxu0 %v2245
    %2696 = vmatprep.subr.mxu0 %v2242
    %2697 = vmatpush1.msra.mxu0 %v2241
    %2698 = vmatprep.subr.mxu0 %v2238
    %2699 = vmatpush1.msra.mxu0 %v2237
    %2700 = vmatprep.subr.mxu0 %v2234
    %2701 = vmatpush1.msra.mxu0 %v2233
    %2702 = vmatprep.subr.mxu0 %v2230
    %2703 = vmatpush1.msra.mxu0 %v2229
    %2704 = vmatprep.subr.mxu0 %v2226
    %2705 = vmatpush1.msra.mxu0 %v2225
    %2706 = vmatprep.subr.mxu0 %v2222
    %2707 = vmatpush1.msra.mxu0 %v2221
    %2708 = vmatprep.subr.mxu0 %v2218
    %2709 = vmatpush1.msra.mxu0 %v2217
    %2710 = vmatprep.subr.mxu0 %v2214
    %2711 = vmatpush1.msra.mxu0 %v2213
    %2712 = vmatprep.subr.mxu0 0.0
    %2713 = vmatpush2.msra.mxu0 0.0
    %2714 = vmatprep.subr.mxu0 0.0
    %2715 = vmatpush2.msra.mxu0 0.0
    %2716 = vmatprep.subr.mxu0 0.0
    %2717 = vmatpush2.msra.mxu0 0.0
    %2718 = vmatprep.subr.mxu0 0.0
    %2719 = vmatpush2.msra.mxu0 0.0
    %2720 = vmatprep.subr.mxu0 0.0
    %2721 = vmatpush2.msra.mxu0 0.0
    %2722 = vmatprep.subr.mxu0 0.0
    %2723 = vmatpush2.msra.mxu0 0.0
    %2724 = vmatprep.subr.mxu0 0.0
    %2725 = vmatpush2.msra.mxu0 0.0
    %2726 = vmatprep.subr.mxu0 0.0
    %2727 = vmatpush2.msra.mxu0 0.0
    %2728 = vmatprep.subr.mxu0 0.0
    %2729 = vmatpush2.msra.mxu0 0.0
    %2730 = vmatprep.subr.mxu0 0.0
    %2731 = vmatpush2.msra.mxu0 0.0
    %2732 = vmatprep.subr.mxu0 0.0
    %2733 = vmatpush2.msra.mxu0 0.0
    %2734 = vmatprep.subr.mxu0 0.0
    %2735 = vmatpush2.msra.mxu0 0.0
    %2736 = vmatprep.subr.mxu0 0.0
    %2737 = vmatpush2.msra.mxu0 0.0
    %2738 = vmatprep.subr.mxu0 0.0
    %2739 = vmatpush2.msra.mxu0 0.0
    %2740 = vmatprep.subr.mxu0 0.0
    %2741 = vmatpush2.msra.mxu0 0.0
    %2742 = vmatprep.subr.mxu0 0.0
    %2743 = vmatpush2.msra.mxu0 0.0
    %2744 = vmatprep.mubr.f32.mxu0 0.0
    %2745 = vmatmul.mubr.f32.gmra.mxu0 %v2604
    %v2746 = vpop.f32.mrf.mxu0
    %v2747 = vadd.f32 0.0, %v2746
    %v2748 = vpop.f32.mrf.mxu0
    %v2749 = vadd.f32 0.0, %v2748
    %2750 = vdwg.mxu0
    %v2751 = vadd.f32 %v2605, %v2676
    %v2752 = vadd.f32 %v2606, %v2678
    %v2753 = vadd.f32 %v2607, %v2747
    %v2754 = vadd.f32 %v2608, %v2749
    %v2755 = vtanh.pop %v2751
    %v2756 = vtanh.pop %v2752
    %v2757 = vtanh.pop %v2753
    %v2758 = vtanh.pop %v2754
    %v2759 = vmul.f32 %v2755, 0.5
    %v2760 = vadd.f32 %v2759, 0.5
    %v2761 = vmul.f32 %v2756, 0.5
    %v2762 = vadd.f32 %v2761, 0.5
    %v2763 = vmul.f32 %v2757, 0.5
    %v2764 = vadd.f32 %v2763, 0.5
    %v2765 = vmul.f32 %v2762, %v2602
    %v2766 = vmul.f32 %v2760, %v2758
    %v2767 = vadd.f32 %v2765, %v2766
    %v2768 = vtanh.pop %v2767
    %v2769 = vmul.f32 %v2764, %v2768
    %v2770 = vld [vmem:[#allocation2 + $0x60] sm:$0xff]
    %v2771 = vld [vmem:[#allocation2 + $0x68] sm:$0xff]
    %v2772 = vld [vmem:[#allocation2 + $0x70] sm:$0xff]
    %v2773 = vld [vmem:[#allocation2 + $0x78] sm:$0xff]
    %2774 = vmatprep.subr.mxu0 %v2272
    %2775 = vmatpush1.msra.mxu0 %v2271
    %2776 = vmatprep.subr.mxu0 %v2268
    %2777 = vmatpush1.msra.mxu0 %v2267
    %2778 = vmatprep.subr.mxu0 %v2264
    %2779 = vmatpush1.msra.mxu0 %v2263
    %2780 = vmatprep.subr.mxu0 %v2260
    %2781 = vmatpush1.msra.mxu0 %v2259
    %2782 = vmatprep.subr.mxu0 %v2256
    %2783 = vmatpush1.msra.mxu0 %v2255
    %2784 = vmatprep.subr.mxu0 %v2252
    %2785 = vmatpush1.msra.mxu0 %v2251
    %2786 = vmatprep.subr.mxu0 %v2248
    %2787 = vmatpush1.msra.mxu0 %v2247
    %2788 = vmatprep.subr.mxu0 %v2244
    %2789 = vmatpush1.msra.mxu0 %v2243
    %2790 = vmatprep.subr.mxu0 %v2240
    %2791 = vmatpush1.msra.mxu0 %v2239
    %2792 = vmatprep.subr.mxu0 %v2236
    %2793 = vmatpush1.msra.mxu0 %v2235
    %2794 = vmatprep.subr.mxu0 %v2232
    %2795 = vmatpush1.msra.mxu0 %v2231
    %2796 = vmatprep.subr.mxu0 %v2228
    %2797 = vmatpush1.msra.mxu0 %v2227
    %2798 = vmatprep.subr.mxu0 %v2224
    %2799 = vmatpush1.msra.mxu0 %v2223
    %2800 = vmatprep.subr.mxu0 %v2220
    %2801 = vmatpush1.msra.mxu0 %v2219
    %2802 = vmatprep.subr.mxu0 %v2216
    %2803 = vmatpush1.msra.mxu0 %v2215
    %2804 = vmatprep.subr.mxu0 %v2212
    %2805 = vmatpush1.msra.mxu0 %v2211
    %2806 = vmatprep.subr.mxu0 0.0
    %2807 = vmatpush2.msra.mxu0 0.0
    %2808 = vmatprep.subr.mxu0 0.0
    %2809 = vmatpush2.msra.mxu0 0.0
    %2810 = vmatprep.subr.mxu0 0.0
    %2811 = vmatpush2.msra.mxu0 0.0
    %2812 = vmatprep.subr.mxu0 0.0
    %2813 = vmatpush2.msra.mxu0 0.0
    %2814 = vmatprep.subr.mxu0 0.0
    %2815 = vmatpush2.msra.mxu0 0.0
    %2816 = vmatprep.subr.mxu0 0.0
    %2817 = vmatpush2.msra.mxu0 0.0
    %2818 = vmatprep.subr.mxu0 0.0
    %2819 = vmatpush2.msra.mxu0 0.0
    %2820 = vmatprep.subr.mxu0 0.0
    %2821 = vmatpush2.msra.mxu0 0.0
    %2822 = vmatprep.subr.mxu0 0.0
    %2823 = vmatpush2.msra.mxu0 0.0
    %2824 = vmatprep.subr.mxu0 0.0
    %2825 = vmatpush2.msra.mxu0 0.0
    %2826 = vmatprep.subr.mxu0 0.0
    %2827 = vmatpush2.msra.mxu0 0.0
    %2828 = vmatprep.subr.mxu0 0.0
    %2829 = vmatpush2.msra.mxu0 0.0
    %2830 = vmatprep.subr.mxu0 0.0
    %2831 = vmatpush2.msra.mxu0 0.0
    %2832 = vmatprep.subr.mxu0 0.0
    %2833 = vmatpush2.msra.mxu0 0.0
    %2834 = vmatprep.subr.mxu0 0.0
    %2835 = vmatpush2.msra.mxu0 0.0
    %2836 = vmatprep.subr.mxu0 0.0
    %2837 = vmatpush2.msra.mxu0 0.0
    %2838 = vmatprep.mubr.f32.mxu0 0.0
    %2839 = vmatmul.mubr.f32.gmra.mxu0 %v2769
    %v2840 = vpop.f32.mrf.mxu0
    %v2841 = vadd.f32 0.0, %v2840
    %v2842 = vpop.f32.mrf.mxu0
    %v2843 = vadd.f32 0.0, %v2842
    %2844 = vdwg.mxu0
    %2845 = vmatprep.subr.mxu0 %v2274
    %2846 = vmatpush1.msra.mxu0 %v2273
    %2847 = vmatprep.subr.mxu0 %v2270
    %2848 = vmatpush1.msra.mxu0 %v2269
    %2849 = vmatprep.subr.mxu0 %v2266
    %2850 = vmatpush1.msra.mxu0 %v2265
    %2851 = vmatprep.subr.mxu0 %v2262
    %2852 = vmatpush1.msra.mxu0 %v2261
    %2853 = vmatprep.subr.mxu0 %v2258
    %2854 = vmatpush1.msra.mxu0 %v2257
    %2855 = vmatprep.subr.mxu0 %v2254
    %2856 = vmatpush1.msra.mxu0 %v2253
    %2857 = vmatprep.subr.mxu0 %v2250
    %2858 = vmatpush1.msra.mxu0 %v2249
    %2859 = vmatprep.subr.mxu0 %v2246
    %2860 = vmatpush1.msra.mxu0 %v2245
    %2861 = vmatprep.subr.mxu0 %v2242
    %2862 = vmatpush1.msra.mxu0 %v2241
    %2863 = vmatprep.subr.mxu0 %v2238
    %2864 = vmatpush1.msra.mxu0 %v2237
    %2865 = vmatprep.subr.mxu0 %v2234
    %2866 = vmatpush1.msra.mxu0 %v2233
    %2867 = vmatprep.subr.mxu0 %v2230
    %2868 = vmatpush1.msra.mxu0 %v2229
    %2869 = vmatprep.subr.mxu0 %v2226
    %2870 = vmatpush1.msra.mxu0 %v2225
    %2871 = vmatprep.subr.mxu0 %v2222
    %2872 = vmatpush1.msra.mxu0 %v2221
    %2873 = vmatprep.subr.mxu0 %v2218
    %2874 = vmatpush1.msra.mxu0 %v2217
    %2875 = vmatprep.subr.mxu0 %v2214
    %2876 = vmatpush1.msra.mxu0 %v2213
    %2877 = vmatprep.subr.mxu0 0.0
    %2878 = vmatpush2.msra.mxu0 0.0
    %2879 = vmatprep.subr.mxu0 0.0
    %2880 = vmatpush2.msra.mxu0 0.0
    %2881 = vmatprep.subr.mxu0 0.0
    %2882 = vmatpush2.msra.mxu0 0.0
    %2883 = vmatprep.subr.mxu0 0.0
    %2884 = vmatpush2.msra.mxu0 0.0
    %2885 = vmatprep.subr.mxu0 0.0
    %2886 = vmatpush2.msra.mxu0 0.0
    %2887 = vmatprep.subr.mxu0 0.0
    %2888 = vmatpush2.msra.mxu0 0.0
    %2889 = vmatprep.subr.mxu0 0.0
    %2890 = vmatpush2.msra.mxu0 0.0
    %2891 = vmatprep.subr.mxu0 0.0
    %2892 = vmatpush2.msra.mxu0 0.0
    %2893 = vmatprep.subr.mxu0 0.0
    %2894 = vmatpush2.msra.mxu0 0.0
    %2895 = vmatprep.subr.mxu0 0.0
    %2896 = vmatpush2.msra.mxu0 0.0
    %2897 = vmatprep.subr.mxu0 0.0
    %2898 = vmatpush2.msra.mxu0 0.0
    %2899 = vmatprep.subr.mxu0 0.0
    %2900 = vmatpush2.msra.mxu0 0.0
    %2901 = vmatprep.subr.mxu0 0.0
    %2902 = vmatpush2.msra.mxu0 0.0
    %2903 = vmatprep.subr.mxu0 0.0
    %2904 = vmatpush2.msra.mxu0 0.0
    %2905 = vmatprep.subr.mxu0 0.0
    %2906 = vmatpush2.msra.mxu0 0.0
    %2907 = vmatprep.subr.mxu0 0.0
    %2908 = vmatpush2.msra.mxu0 0.0
    %2909 = vmatprep.mubr.f32.mxu0 0.0
    %2910 = vmatmul.mubr.f32.gmra.mxu0 %v2769
    %v2911 = vpop.f32.mrf.mxu0
    %v2912 = vadd.f32 0.0, %v2911
    %v2913 = vpop.f32.mrf.mxu0
    %v2914 = vadd.f32 0.0, %v2913
    %2915 = vdwg.mxu0
    %v2916 = vadd.f32 %v2770, %v2841
    %v2917 = vadd.f32 %v2771, %v2843
    %v2918 = vadd.f32 %v2772, %v2912
    %v2919 = vadd.f32 %v2773, %v2914
    %v2920 = vtanh.pop %v2916
    %v2921 = vtanh.pop %v2917
    %v2922 = vtanh.pop %v2918
    %v2923 = vtanh.pop %v2919
    %v2924 = vmul.f32 %v2920, 0.5
    %v2925 = vadd.f32 %v2924, 0.5
    %v2926 = vmul.f32 %v2921, 0.5
    %v2927 = vadd.f32 %v2926, 0.5
    %v2928 = vmul.f32 %v2922, 0.5
    %v2929 = vadd.f32 %v2928, 0.5
    %v2930 = vmul.f32 %v2927, %v2767
    %v2931 = vmul.f32 %v2925, %v2923
    %v2932 = vadd.f32 %v2930, %v2931
    %v2933 = vtanh.pop %v2932
    %v2934 = vmul.f32 %v2929, %v2933
    %v2935 = vld [vmem:[#allocation2 + $0x80] sm:$0xff]
    %v2936 = vld [vmem:[#allocation2 + $0x88] sm:$0xff]
    %v2937 = vld [vmem:[#allocation2 + $0x90] sm:$0xff]
    %v2938 = vld [vmem:[#allocation2 + $0x98] sm:$0xff]
    %2939 = vmatprep.subr.mxu0 %v2272
    %2940 = vmatpush1.msra.mxu0 %v2271
    %2941 = vmatprep.subr.mxu0 %v2268
    %2942 = vmatpush1.msra.mxu0 %v2267
    %2943 = vmatprep.subr.mxu0 %v2264
    %2944 = vmatpush1.msra.mxu0 %v2263
    %2945 = vmatprep.subr.mxu0 %v2260
    %2946 = vmatpush1.msra.mxu0 %v2259
    %2947 = vmatprep.subr.mxu0 %v2256
    %2948 = vmatpush1.msra.mxu0 %v2255
    %2949 = vmatprep.subr.mxu0 %v2252
    %2950 = vmatpush1.msra.mxu0 %v2251
    %2951 = vmatprep.subr.mxu0 %v2248
    %2952 = vmatpush1.msra.mxu0 %v2247
    %2953 = vmatprep.subr.mxu0 %v2244
    %2954 = vmatpush1.msra.mxu0 %v2243
    %2955 = vmatprep.subr.mxu0 %v2240
    %2956 = vmatpush1.msra.mxu0 %v2239
    %2957 = vmatprep.subr.mxu0 %v2236
    %2958 = vmatpush1.msra.mxu0 %v2235
    %2959 = vmatprep.subr.mxu0 %v2232
    %2960 = vmatpush1.msra.mxu0 %v2231
    %2961 = vmatprep.subr.mxu0 %v2228
    %2962 = vmatpush1.msra.mxu0 %v2227
    %2963 = vmatprep.subr.mxu0 %v2224
    %2964 = vmatpush1.msra.mxu0 %v2223
    %2965 = vmatprep.subr.mxu0 %v2220
    %2966 = vmatpush1.msra.mxu0 %v2219
    %2967 = vmatprep.subr.mxu0 %v2216
    %2968 = vmatpush1.msra.mxu0 %v2215
    %2969 = vmatprep.subr.mxu0 %v2212
    %2970 = vmatpush1.msra.mxu0 %v2211
    %2971 = vmatprep.subr.mxu0 0.0
    %2972 = vmatpush2.msra.mxu0 0.0
    %2973 = vmatprep.subr.mxu0 0.0
    %2974 = vmatpush2.msra.mxu0 0.0
    %2975 = vmatprep.subr.mxu0 0.0
    %2976 = vmatpush2.msra.mxu0 0.0
    %2977 = vmatprep.subr.mxu0 0.0
    %2978 = vmatpush2.msra.mxu0 0.0
    %2979 = vmatprep.subr.mxu0 0.0
    %2980 = vmatpush2.msra.mxu0 0.0
    %2981 = vmatprep.subr.mxu0 0.0
    %2982 = vmatpush2.msra.mxu0 0.0
    %2983 = vmatprep.subr.mxu0 0.0
    %2984 = vmatpush2.msra.mxu0 0.0
    %2985 = vmatprep.subr.mxu0 0.0
    %2986 = vmatpush2.msra.mxu0 0.0
    %2987 = vmatprep.subr.mxu0 0.0
    %2988 = vmatpush2.msra.mxu0 0.0
    %2989 = vmatprep.subr.mxu0 0.0
    %2990 = vmatpush2.msra.mxu0 0.0
    %2991 = vmatprep.subr.mxu0 0.0
    %2992 = vmatpush2.msra.mxu0 0.0
    %2993 = vmatprep.subr.mxu0 0.0
    %2994 = vmatpush2.msra.mxu0 0.0
    %2995 = vmatprep.subr.mxu0 0.0
    %2996 = vmatpush2.msra.mxu0 0.0
    %2997 = vmatprep.subr.mxu0 0.0
    %2998 = vmatpush2.msra.mxu0 0.0
    %2999 = vmatprep.subr.mxu0 0.0
    %3000 = vmatpush2.msra.mxu0 0.0
    %3001 = vmatprep.subr.mxu0 0.0
    %3002 = vmatpush2.msra.mxu0 0.0
    %3003 = vmatprep.mubr.f32.mxu0 0.0
    %3004 = vmatmul.mubr.f32.gmra.mxu0 %v2934
    %v3005 = vpop.f32.mrf.mxu0
    %v3006 = vadd.f32 0.0, %v3005
    %v3007 = vpop.f32.mrf.mxu0
    %v3008 = vadd.f32 0.0, %v3007
    %3009 = vdwg.mxu0
    %3010 = vmatprep.subr.mxu0 %v2274
    %3011 = vmatpush1.msra.mxu0 %v2273
    %3012 = vmatprep.subr.mxu0 %v2270
    %3013 = vmatpush1.msra.mxu0 %v2269
    %3014 = vmatprep.subr.mxu0 %v2266
    %3015 = vmatpush1.msra.mxu0 %v2265
    %3016 = vmatprep.subr.mxu0 %v2262
    %3017 = vmatpush1.msra.mxu0 %v2261
    %3018 = vmatprep.subr.mxu0 %v2258
    %3019 = vmatpush1.msra.mxu0 %v2257
    %3020 = vmatprep.subr.mxu0 %v2254
    %3021 = vmatpush1.msra.mxu0 %v2253
    %3022 = vmatprep.subr.mxu0 %v2250
    %3023 = vmatpush1.msra.mxu0 %v2249
    %3024 = vmatprep.subr.mxu0 %v2246
    %3025 = vmatpush1.msra.mxu0 %v2245
    %3026 = vmatprep.subr.mxu0 %v2242
    %3027 = vmatpush1.msra.mxu0 %v2241
    %3028 = vmatprep.subr.mxu0 %v2238
    %3029 = vmatpush1.msra.mxu0 %v2237
    %3030 = vmatprep.subr.mxu0 %v2234
    %3031 = vmatpush1.msra.mxu0 %v2233
    %3032 = vmatprep.subr.mxu0 %v2230
    %3033 = vmatpush1.msra.mxu0 %v2229
    %3034 = vmatprep.subr.mxu0 %v2226
    %3035 = vmatpush1.msra.mxu0 %v2225
    %3036 = vmatprep.subr.mxu0 %v2222
    %3037 = vmatpush1.msra.mxu0 %v2221
    %3038 = vmatprep.subr.mxu0 %v2218
    %3039 = vmatpush1.msra.mxu0 %v2217
    %3040 = vmatprep.subr.mxu0 %v2214
    %3041 = vmatpush1.msra.mxu0 %v2213
    %3042 = vmatprep.subr.mxu0 0.0
    %3043 = vmatpush2.msra.mxu0 0.0
    %3044 = vmatprep.subr.mxu0 0.0
    %3045 = vmatpush2.msra.mxu0 0.0
    %3046 = vmatprep.subr.mxu0 0.0
    %3047 = vmatpush2.msra.mxu0 0.0
    %3048 = vmatprep.subr.mxu0 0.0
    %3049 = vmatpush2.msra.mxu0 0.0
    %3050 = vmatprep.subr.mxu0 0.0
    %3051 = vmatpush2.msra.mxu0 0.0
    %3052 = vmatprep.subr.mxu0 0.0
    %3053 = vmatpush2.msra.mxu0 0.0
    %3054 = vmatprep.subr.mxu0 0.0
    %3055 = vmatpush2.msra.mxu0 0.0
    %3056 = vmatprep.subr.mxu0 0.0
    %3057 = vmatpush2.msra.mxu0 0.0
    %3058 = vmatprep.subr.mxu0 0.0
    %3059 = vmatpush2.msra.mxu0 0.0
    %3060 = vmatprep.subr.mxu0 0.0
    %3061 = vmatpush2.msra.mxu0 0.0
    %3062 = vmatprep.subr.mxu0 0.0
    %3063 = vmatpush2.msra.mxu0 0.0
    %3064 = vmatprep.subr.mxu0 0.0
    %3065 = vmatpush2.msra.mxu0 0.0
    %3066 = vmatprep.subr.mxu0 0.0
    %3067 = vmatpush2.msra.mxu0 0.0
    %3068 = vmatprep.subr.mxu0 0.0
    %3069 = vmatpush2.msra.mxu0 0.0
    %3070 = vmatprep.subr.mxu0 0.0
    %3071 = vmatpush2.msra.mxu0 0.0
    %3072 = vmatprep.subr.mxu0 0.0
    %3073 = vmatpush2.msra.mxu0 0.0
    %3074 = vmatprep.mubr.f32.mxu0 0.0
    %3075 = vmatmul.mubr.f32.gmra.mxu0 %v2934
    %v3076 = vpop.f32.mrf.mxu0
    %v3077 = vadd.f32 0.0, %v3076
    %v3078 = vpop.f32.mrf.mxu0
    %v3079 = vadd.f32 0.0, %v3078
    %3080 = vdwg.mxu0
    %v3081 = vadd.f32 %v2935, %v3006
    %v3082 = vadd.f32 %v2936, %v3008
    %v3083 = vadd.f32 %v2937, %v3077
    %v3084 = vadd.f32 %v2938, %v3079
    %v3085 = vtanh.pop %v3081
    %v3086 = vtanh.pop %v3082
    %v3087 = vtanh.pop %v3083
    %v3088 = vtanh.pop %v3084
    %v3089 = vmul.f32 %v3085, 0.5
    %v3090 = vadd.f32 %v3089, 0.5
    %v3091 = vmul.f32 %v3086, 0.5
    %v3092 = vadd.f32 %v3091, 0.5
    %v3093 = vmul.f32 %v3087, 0.5
    %v3094 = vadd.f32 %v3093, 0.5
    %v3095 = vmul.f32 %v3092, %v2932
    %v3096 = vmul.f32 %v3090, %v3088
    %v3097 = vadd.f32 %v3095, %v3096
    %v3098 = vtanh.pop %v3097
    %v3099 = vmul.f32 %v3094, %v3098
    %v3100 = vld [vmem:[#allocation2 + $0xa0] sm:$0xff]
    %v3101 = vld [vmem:[#allocation2 + $0xa8] sm:$0xff]
    %v3102 = vld [vmem:[#allocation2 + $0xb0] sm:$0xff]
    %v3103 = vld [vmem:[#allocation2 + $0xb8] sm:$0xff]
    %3104 = vmatprep.subr.mxu0 %v2272
    %3105 = vmatpush1.msra.mxu0 %v2271
    %3106 = vmatprep.subr.mxu0 %v2268
    %3107 = vmatpush1.msra.mxu0 %v2267
    %3108 = vmatprep.subr.mxu0 %v2264
    %3109 = vmatpush1.msra.mxu0 %v2263
    %3110 = vmatprep.subr.mxu0 %v2260
    %3111 = vmatpush1.msra.mxu0 %v2259
    %3112 = vmatprep.subr.mxu0 %v2256
    %3113 = vmatpush1.msra.mxu0 %v2255
    %3114 = vmatprep.subr.mxu0 %v2252
    %3115 = vmatpush1.msra.mxu0 %v2251
    %3116 = vmatprep.subr.mxu0 %v2248
    %3117 = vmatpush1.msra.mxu0 %v2247
    %3118 = vmatprep.subr.mxu0 %v2244
    %3119 = vmatpush1.msra.mxu0 %v2243
    %3120 = vmatprep.subr.mxu0 %v2240
    %3121 = vmatpush1.msra.mxu0 %v2239
    %3122 = vmatprep.subr.mxu0 %v2236
    %3123 = vmatpush1.msra.mxu0 %v2235
    %3124 = vmatprep.subr.mxu0 %v2232
    %3125 = vmatpush1.msra.mxu0 %v2231
    %3126 = vmatprep.subr.mxu0 %v2228
    %3127 = vmatpush1.msra.mxu0 %v2227
    %3128 = vmatprep.subr.mxu0 %v2224
    %3129 = vmatpush1.msra.mxu0 %v2223
    %3130 = vmatprep.subr.mxu0 %v2220
    %3131 = vmatpush1.msra.mxu0 %v2219
    %3132 = vmatprep.subr.mxu0 %v2216
    %3133 = vmatpush1.msra.mxu0 %v2215
    %3134 = vmatprep.subr.mxu0 %v2212
    %3135 = vmatpush1.msra.mxu0 %v2211
    %3136 = vmatprep.subr.mxu0 0.0
    %3137 = vmatpush2.msra.mxu0 0.0
    %3138 = vmatprep.subr.mxu0 0.0
    %3139 = vmatpush2.msra.mxu0 0.0
    %3140 = vmatprep.subr.mxu0 0.0
    %3141 = vmatpush2.msra.mxu0 0.0
    %3142 = vmatprep.subr.mxu0 0.0
    %3143 = vmatpush2.msra.mxu0 0.0
    %3144 = vmatprep.subr.mxu0 0.0
    %3145 = vmatpush2.msra.mxu0 0.0
    %3146 = vmatprep.subr.mxu0 0.0
    %3147 = vmatpush2.msra.mxu0 0.0
    %3148 = vmatprep.subr.mxu0 0.0
    %3149 = vmatpush2.msra.mxu0 0.0
    %3150 = vmatprep.subr.mxu0 0.0
    %3151 = vmatpush2.msra.mxu0 0.0
    %3152 = vmatprep.subr.mxu0 0.0
    %3153 = vmatpush2.msra.mxu0 0.0
    %3154 = vmatprep.subr.mxu0 0.0
    %3155 = vmatpush2.msra.mxu0 0.0
    %3156 = vmatprep.subr.mxu0 0.0
    %3157 = vmatpush2.msra.mxu0 0.0
    %3158 = vmatprep.subr.mxu0 0.0
    %3159 = vmatpush2.msra.mxu0 0.0
    %3160 = vmatprep.subr.mxu0 0.0
    %3161 = vmatpush2.msra.mxu0 0.0
    %3162 = vmatprep.subr.mxu0 0.0
    %3163 = vmatpush2.msra.mxu0 0.0
    %3164 = vmatprep.subr.mxu0 0.0
    %3165 = vmatpush2.msra.mxu0 0.0
    %3166 = vmatprep.subr.mxu0 0.0
    %3167 = vmatpush2.msra.mxu0 0.0
    %3168 = vmatprep.mubr.f32.mxu0 0.0
    %3169 = vmatmul.mubr.f32.gmra.mxu0 %v3099
    %v3170 = vpop.f32.mrf.mxu0
    %v3171 = vadd.f32 0.0, %v3170
    %v3172 = vpop.f32.mrf.mxu0
    %v3173 = vadd.f32 0.0, %v3172
    %3174 = vdwg.mxu0
    %3175 = vmatprep.subr.mxu0 %v2274
    %3176 = vmatpush1.msra.mxu0 %v2273
    %3177 = vmatprep.subr.mxu0 %v2270
    %3178 = vmatpush1.msra.mxu0 %v2269
    %3179 = vmatprep.subr.mxu0 %v2266
    %3180 = vmatpush1.msra.mxu0 %v2265
    %3181 = vmatprep.subr.mxu0 %v2262
    %3182 = vmatpush1.msra.mxu0 %v2261
    %3183 = vmatprep.subr.mxu0 %v2258
    %3184 = vmatpush1.msra.mxu0 %v2257
    %3185 = vmatprep.subr.mxu0 %v2254
    %3186 = vmatpush1.msra.mxu0 %v2253
    %3187 = vmatprep.subr.mxu0 %v2250
    %3188 = vmatpush1.msra.mxu0 %v2249
    %3189 = vmatprep.subr.mxu0 %v2246
    %3190 = vmatpush1.msra.mxu0 %v2245
    %3191 = vmatprep.subr.mxu0 %v2242
    %3192 = vmatpush1.msra.mxu0 %v2241
    %3193 = vmatprep.subr.mxu0 %v2238
    %3194 = vmatpush1.msra.mxu0 %v2237
    %3195 = vmatprep.subr.mxu0 %v2234
    %3196 = vmatpush1.msra.mxu0 %v2233
    %3197 = vmatprep.subr.mxu0 %v2230
    %3198 = vmatpush1.msra.mxu0 %v2229
    %3199 = vmatprep.subr.mxu0 %v2226
    %3200 = vmatpush1.msra.mxu0 %v2225
    %3201 = vmatprep.subr.mxu0 %v2222
    %3202 = vmatpush1.msra.mxu0 %v2221
    %3203 = vmatprep.subr.mxu0 %v2218
    %3204 = vmatpush1.msra.mxu0 %v2217
    %3205 = vmatprep.subr.mxu0 %v2214
    %3206 = vmatpush1.msra.mxu0 %v2213
    %3207 = vmatprep.subr.mxu0 0.0
    %3208 = vmatpush2.msra.mxu0 0.0
    %3209 = vmatprep.subr.mxu0 0.0
    %3210 = vmatpush2.msra.mxu0 0.0
    %3211 = vmatprep.subr.mxu0 0.0
    %3212 = vmatpush2.msra.mxu0 0.0
    %3213 = vmatprep.subr.mxu0 0.0
    %3214 = vmatpush2.msra.mxu0 0.0
    %3215 = vmatprep.subr.mxu0 0.0
    %3216 = vmatpush2.msra.mxu0 0.0
    %3217 = vmatprep.subr.mxu0 0.0
    %3218 = vmatpush2.msra.mxu0 0.0
    %3219 = vmatprep.subr.mxu0 0.0
    %3220 = vmatpush2.msra.mxu0 0.0
    %3221 = vmatprep.subr.mxu0 0.0
    %3222 = vmatpush2.msra.mxu0 0.0
    %3223 = vmatprep.subr.mxu0 0.0
    %3224 = vmatpush2.msra.mxu0 0.0
    %3225 = vmatprep.subr.mxu0 0.0
    %3226 = vmatpush2.msra.mxu0 0.0
    %3227 = vmatprep.subr.mxu0 0.0
    %3228 = vmatpush2.msra.mxu0 0.0
    %3229 = vmatprep.subr.mxu0 0.0
    %3230 = vmatpush2.msra.mxu0 0.0
    %3231 = vmatprep.subr.mxu0 0.0
    %3232 = vmatpush2.msra.mxu0 0.0
    %3233 = vmatprep.subr.mxu0 0.0
    %3234 = vmatpush2.msra.mxu0 0.0
    %3235 = vmatprep.subr.mxu0 0.0
    %3236 = vmatpush2.msra.mxu0 0.0
    %3237 = vmatprep.subr.mxu0 0.0
    %3238 = vmatpush2.msra.mxu0 0.0
    %3239 = vmatprep.mubr.f32.mxu0 0.0
    %3240 = vmatmul.mubr.f32.gmra.mxu0 %v3099
    %v3241 = vpop.f32.mrf.mxu0
    %v3242 = vadd.f32 0.0, %v3241
    %v3243 = vpop.f32.mrf.mxu0
    %v3244 = vadd.f32 0.0, %v3243
    %3245 = vdwg.mxu0
    %v3246 = vadd.f32 %v3100, %v3171
    %v3247 = vadd.f32 %v3101, %v3173
    %v3248 = vadd.f32 %v3102, %v3242
    %v3249 = vadd.f32 %v3103, %v3244
    %v3250 = vtanh.pop %v3246
    %v3251 = vtanh.pop %v3247
    %v3252 = vtanh.pop %v3248
    %v3253 = vtanh.pop %v3249
    %v3254 = vmul.f32 %v3250, 0.5
    %v3255 = vadd.f32 %v3254, 0.5
    %v3256 = vmul.f32 %v3251, 0.5
    %v3257 = vadd.f32 %v3256, 0.5
    %v3258 = vmul.f32 %v3252, 0.5
    %v3259 = vadd.f32 %v3258, 0.5
    %v3260 = vmul.f32 %v3257, %v3097
    %v3261 = vmul.f32 %v3255, %v3253
    %v3262 = vadd.f32 %v3260, %v3261
    %v3263 = vtanh.pop %v3262
    %v3264 = vmul.f32 %v3259, %v3263
    %v3265 = vld [vmem:[#allocation2 + $0xc0] sm:$0xff]
    %v3266 = vld [vmem:[#allocation2 + $0xc8] sm:$0xff]
    %v3267 = vld [vmem:[#allocation2 + $0xd0] sm:$0xff]
    %v3268 = vld [vmem:[#allocation2 + $0xd8] sm:$0xff]
    %3269 = vmatprep.subr.mxu0 %v2272
    %3270 = vmatpush1.msra.mxu0 %v2271
    %3271 = vmatprep.subr.mxu0 %v2268
    %3272 = vmatpush1.msra.mxu0 %v2267
    %3273 = vmatprep.subr.mxu0 %v2264
    %3274 = vmatpush1.msra.mxu0 %v2263
    %3275 = vmatprep.subr.mxu0 %v2260
    %3276 = vmatpush1.msra.mxu0 %v2259
    %3277 = vmatprep.subr.mxu0 %v2256
    %3278 = vmatpush1.msra.mxu0 %v2255
    %3279 = vmatprep.subr.mxu0 %v2252
    %3280 = vmatpush1.msra.mxu0 %v2251
    %3281 = vmatprep.subr.mxu0 %v2248
    %3282 = vmatpush1.msra.mxu0 %v2247
    %3283 = vmatprep.subr.mxu0 %v2244
    %3284 = vmatpush1.msra.mxu0 %v2243
    %3285 = vmatprep.subr.mxu0 %v2240
    %3286 = vmatpush1.msra.mxu0 %v2239
    %3287 = vmatprep.subr.mxu0 %v2236
    %3288 = vmatpush1.msra.mxu0 %v2235
    %3289 = vmatprep.subr.mxu0 %v2232
    %3290 = vmatpush1.msra.mxu0 %v2231
    %3291 = vmatprep.subr.mxu0 %v2228
    %3292 = vmatpush1.msra.mxu0 %v2227
    %3293 = vmatprep.subr.mxu0 %v2224
    %3294 = vmatpush1.msra.mxu0 %v2223
    %3295 = vmatprep.subr.mxu0 %v2220
    %3296 = vmatpush1.msra.mxu0 %v2219
    %3297 = vmatprep.subr.mxu0 %v2216
    %3298 = vmatpush1.msra.mxu0 %v2215
    %3299 = vmatprep.subr.mxu0 %v2212
    %3300 = vmatpush1.msra.mxu0 %v2211
    %3301 = vmatprep.subr.mxu0 0.0
    %3302 = vmatpush2.msra.mxu0 0.0
    %3303 = vmatprep.subr.mxu0 0.0
    %3304 = vmatpush2.msra.mxu0 0.0
    %3305 = vmatprep.subr.mxu0 0.0
    %3306 = vmatpush2.msra.mxu0 0.0
    %3307 = vmatprep.subr.mxu0 0.0
    %3308 = vmatpush2.msra.mxu0 0.0
    %3309 = vmatprep.subr.mxu0 0.0
    %3310 = vmatpush2.msra.mxu0 0.0
    %3311 = vmatprep.subr.mxu0 0.0
    %3312 = vmatpush2.msra.mxu0 0.0
    %3313 = vmatprep.subr.mxu0 0.0
    %3314 = vmatpush2.msra.mxu0 0.0
    %3315 = vmatprep.subr.mxu0 0.0
    %3316 = vmatpush2.msra.mxu0 0.0
    %3317 = vmatprep.subr.mxu0 0.0
    %3318 = vmatpush2.msra.mxu0 0.0
    %3319 = vmatprep.subr.mxu0 0.0
    %3320 = vmatpush2.msra.mxu0 0.0
    %3321 = vmatprep.subr.mxu0 0.0
    %3322 = vmatpush2.msra.mxu0 0.0
    %3323 = vmatprep.subr.mxu0 0.0
    %3324 = vmatpush2.msra.mxu0 0.0
    %3325 = vmatprep.subr.mxu0 0.0
    %3326 = vmatpush2.msra.mxu0 0.0
    %3327 = vmatprep.subr.mxu0 0.0
    %3328 = vmatpush2.msra.mxu0 0.0
    %3329 = vmatprep.subr.mxu0 0.0
    %3330 = vmatpush2.msra.mxu0 0.0
    %3331 = vmatprep.subr.mxu0 0.0
    %3332 = vmatpush2.msra.mxu0 0.0
    %3333 = vmatprep.mubr.f32.mxu0 0.0
    %3334 = vmatmul.mubr.f32.gmra.mxu0 %v3264
    %v3335 = vpop.f32.mrf.mxu0
    %v3336 = vadd.f32 0.0, %v3335
    %v3337 = vpop.f32.mrf.mxu0
    %v3338 = vadd.f32 0.0, %v3337
    %3339 = vdwg.mxu0
    %3340 = vmatprep.subr.mxu0 %v2274
    %3341 = vmatpush1.msra.mxu0 %v2273
    %3342 = vmatprep.subr.mxu0 %v2270
    %3343 = vmatpush1.msra.mxu0 %v2269
    %3344 = vmatprep.subr.mxu0 %v2266
    %3345 = vmatpush1.msra.mxu0 %v2265
    %3346 = vmatprep.subr.mxu0 %v2262
    %3347 = vmatpush1.msra.mxu0 %v2261
    %3348 = vmatprep.subr.mxu0 %v2258
    %3349 = vmatpush1.msra.mxu0 %v2257
    %3350 = vmatprep.subr.mxu0 %v2254
    %3351 = vmatpush1.msra.mxu0 %v2253
    %3352 = vmatprep.subr.mxu0 %v2250
    %3353 = vmatpush1.msra.mxu0 %v2249
    %3354 = vmatprep.subr.mxu0 %v2246
    %3355 = vmatpush1.msra.mxu0 %v2245
    %3356 = vmatprep.subr.mxu0 %v2242
    %3357 = vmatpush1.msra.mxu0 %v2241
    %3358 = vmatprep.subr.mxu0 %v2238
    %3359 = vmatpush1.msra.mxu0 %v2237
    %3360 = vmatprep.subr.mxu0 %v2234
    %3361 = vmatpush1.msra.mxu0 %v2233
    %3362 = vmatprep.subr.mxu0 %v2230
    %3363 = vmatpush1.msra.mxu0 %v2229
    %3364 = vmatprep.subr.mxu0 %v2226
    %3365 = vmatpush1.msra.mxu0 %v2225
    %3366 = vmatprep.subr.mxu0 %v2222
    %3367 = vmatpush1.msra.mxu0 %v2221
    %3368 = vmatprep.subr.mxu0 %v2218
    %3369 = vmatpush1.msra.mxu0 %v2217
    %3370 = vmatprep.subr.mxu0 %v2214
    %3371 = vmatpush1.msra.mxu0 %v2213
    %3372 = vmatprep.subr.mxu0 0.0
    %3373 = vmatpush2.msra.mxu0 0.0
    %3374 = vmatprep.subr.mxu0 0.0
    %3375 = vmatpush2.msra.mxu0 0.0
    %3376 = vmatprep.subr.mxu0 0.0
    %3377 = vmatpush2.msra.mxu0 0.0
    %3378 = vmatprep.subr.mxu0 0.0
    %3379 = vmatpush2.msra.mxu0 0.0
    %3380 = vmatprep.subr.mxu0 0.0
    %3381 = vmatpush2.msra.mxu0 0.0
    %3382 = vmatprep.subr.mxu0 0.0
    %3383 = vmatpush2.msra.mxu0 0.0
    %3384 = vmatprep.subr.mxu0 0.0
    %3385 = vmatpush2.msra.mxu0 0.0
    %3386 = vmatprep.subr.mxu0 0.0
    %3387 = vmatpush2.msra.mxu0 0.0
    %3388 = vmatprep.subr.mxu0 0.0
    %3389 = vmatpush2.msra.mxu0 0.0
    %3390 = vmatprep.subr.mxu0 0.0
    %3391 = vmatpush2.msra.mxu0 0.0
    %3392 = vmatprep.subr.mxu0 0.0
    %3393 = vmatpush2.msra.mxu0 0.0
    %3394 = vmatprep.subr.mxu0 0.0
    %3395 = vmatpush2.msra.mxu0 0.0
    %3396 = vmatprep.subr.mxu0 0.0
    %3397 = vmatpush2.msra.mxu0 0.0
    %3398 = vmatprep.subr.mxu0 0.0
    %3399 = vmatpush2.msra.mxu0 0.0
    %3400 = vmatprep.subr.mxu0 0.0
    %3401 = vmatpush2.msra.mxu0 0.0
    %3402 = vmatprep.subr.mxu0 0.0
    %3403 = vmatpush2.msra.mxu0 0.0
    %3404 = vmatprep.mubr.f32.mxu0 0.0
    %3405 = vmatmul.mubr.f32.gmra.mxu0 %v3264
    %v3406 = vpop.f32.mrf.mxu0
    %v3407 = vadd.f32 0.0, %v3406
    %v3408 = vpop.f32.mrf.mxu0
    %v3409 = vadd.f32 0.0, %v3408
    %3410 = vdwg.mxu0
    %v3411 = vadd.f32 %v3265, %v3336
    %v3412 = vadd.f32 %v3266, %v3338
    %v3413 = vadd.f32 %v3267, %v3407
    %v3414 = vadd.f32 %v3268, %v3409
    %v3415 = vtanh.pop %v3411
    %v3416 = vtanh.pop %v3412
    %v3417 = vtanh.pop %v3413
    %v3418 = vtanh.pop %v3414
    %v3419 = vmul.f32 %v3415, 0.5
    %v3420 = vadd.f32 %v3419, 0.5
    %v3421 = vmul.f32 %v3416, 0.5
    %v3422 = vadd.f32 %v3421, 0.5
    %v3423 = vmul.f32 %v3417, 0.5
    %v3424 = vadd.f32 %v3423, 0.5
    %v3425 = vmul.f32 %v3422, %v3262
    %v3426 = vmul.f32 %v3420, %v3418
    %v3427 = vadd.f32 %v3425, %v3426
    %v3428 = vtanh.pop %v3427
    %v3429 = vmul.f32 %v3424, %v3428
    %v3430 = vld [vmem:[#allocation2 + $0xe0] sm:$0xff]
    %v3431 = vld [vmem:[#allocation2 + $0xe8] sm:$0xff]
    %v3432 = vld [vmem:[#allocation2 + $0xf0] sm:$0xff]
    %v3433 = vld [vmem:[#allocation2 + $0xf8] sm:$0xff]
    %3434 = vmatprep.subr.mxu0 %v2272
    %3435 = vmatpush1.msra.mxu0 %v2271
    %3436 = vmatprep.subr.mxu0 %v2268
    %3437 = vmatpush1.msra.mxu0 %v2267
    %3438 = vmatprep.subr.mxu0 %v2264
    %3439 = vmatpush1.msra.mxu0 %v2263
    %3440 = vmatprep.subr.mxu0 %v2260
    %3441 = vmatpush1.msra.mxu0 %v2259
    %3442 = vmatprep.subr.mxu0 %v2256
    %3443 = vmatpush1.msra.mxu0 %v2255
    %3444 = vmatprep.subr.mxu0 %v2252
    %3445 = vmatpush1.msra.mxu0 %v2251
    %3446 = vmatprep.subr.mxu0 %v2248
    %3447 = vmatpush1.msra.mxu0 %v2247
    %3448 = vmatprep.subr.mxu0 %v2244
    %3449 = vmatpush1.msra.mxu0 %v2243
    %3450 = vmatprep.subr.mxu0 %v2240
    %3451 = vmatpush1.msra.mxu0 %v2239
    %3452 = vmatprep.subr.mxu0 %v2236
    %3453 = vmatpush1.msra.mxu0 %v2235
    %3454 = vmatprep.subr.mxu0 %v2232
    %3455 = vmatpush1.msra.mxu0 %v2231
    %3456 = vmatprep.subr.mxu0 %v2228
    %3457 = vmatpush1.msra.mxu0 %v2227
    %3458 = vmatprep.subr.mxu0 %v2224
    %3459 = vmatpush1.msra.mxu0 %v2223
    %3460 = vmatprep.subr.mxu0 %v2220
    %3461 = vmatpush1.msra.mxu0 %v2219
    %3462 = vmatprep.subr.mxu0 %v2216
    %3463 = vmatpush1.msra.mxu0 %v2215
    %3464 = vmatprep.subr.mxu0 %v2212
    %3465 = vmatpush1.msra.mxu0 %v2211
    %3466 = vmatprep.subr.mxu0 0.0
    %3467 = vmatpush2.msra.mxu0 0.0
    %3468 = vmatprep.subr.mxu0 0.0
    %3469 = vmatpush2.msra.mxu0 0.0
    %3470 = vmatprep.subr.mxu0 0.0
    %3471 = vmatpush2.msra.mxu0 0.0
    %3472 = vmatprep.subr.mxu0 0.0
    %3473 = vmatpush2.msra.mxu0 0.0
    %3474 = vmatprep.subr.mxu0 0.0
    %3475 = vmatpush2.msra.mxu0 0.0
    %3476 = vmatprep.subr.mxu0 0.0
    %3477 = vmatpush2.msra.mxu0 0.0
    %3478 = vmatprep.subr.mxu0 0.0
    %3479 = vmatpush2.msra.mxu0 0.0
    %3480 = vmatprep.subr.mxu0 0.0
    %3481 = vmatpush2.msra.mxu0 0.0
    %3482 = vmatprep.subr.mxu0 0.0
    %3483 = vmatpush2.msra.mxu0 0.0
    %3484 = vmatprep.subr.mxu0 0.0
    %3485 = vmatpush2.msra.mxu0 0.0
    %3486 = vmatprep.subr.mxu0 0.0
    %3487 = vmatpush2.msra.mxu0 0.0
    %3488 = vmatprep.subr.mxu0 0.0
    %3489 = vmatpush2.msra.mxu0 0.0
    %3490 = vmatprep.subr.mxu0 0.0
    %3491 = vmatpush2.msra.mxu0 0.0
    %3492 = vmatprep.subr.mxu0 0.0
    %3493 = vmatpush2.msra.mxu0 0.0
    %3494 = vmatprep.subr.mxu0 0.0
    %3495 = vmatpush2.msra.mxu0 0.0
    %3496 = vmatprep.subr.mxu0 0.0
    %3497 = vmatpush2.msra.mxu0 0.0
    %3498 = vmatprep.mubr.f32.mxu0 0.0
    %3499 = vmatmul.mubr.f32.gmra.mxu0 %v3429
    %v3500 = vpop.f32.mrf.mxu0
    %v3501 = vadd.f32 0.0, %v3500
    %v3502 = vpop.f32.mrf.mxu0
    %v3503 = vadd.f32 0.0, %v3502
    %3504 = vdwg.mxu0
    %3505 = vmatprep.subr.mxu0 %v2274
    %3506 = vmatpush1.msra.mxu0 %v2273
    %3507 = vmatprep.subr.mxu0 %v2270
    %3508 = vmatpush1.msra.mxu0 %v2269
    %3509 = vmatprep.subr.mxu0 %v2266
    %3510 = vmatpush1.msra.mxu0 %v2265
    %3511 = vmatprep.subr.mxu0 %v2262
    %3512 = vmatpush1.msra.mxu0 %v2261
    %3513 = vmatprep.subr.mxu0 %v2258
    %3514 = vmatpush1.msra.mxu0 %v2257
    %3515 = vmatprep.subr.mxu0 %v2254
    %3516 = vmatpush1.msra.mxu0 %v2253
    %3517 = vmatprep.subr.mxu0 %v2250
    %3518 = vmatpush1.msra.mxu0 %v2249
    %3519 = vmatprep.subr.mxu0 %v2246
    %3520 = vmatpush1.msra.mxu0 %v2245
    %3521 = vmatprep.subr.mxu0 %v2242
    %3522 = vmatpush1.msra.mxu0 %v2241
    %3523 = vmatprep.subr.mxu0 %v2238
    %3524 = vmatpush1.msra.mxu0 %v2237
    %3525 = vmatprep.subr.mxu0 %v2234
    %3526 = vmatpush1.msra.mxu0 %v2233
    %3527 = vmatprep.subr.mxu0 %v2230
    %3528 = vmatpush1.msra.mxu0 %v2229
    %3529 = vmatprep.subr.mxu0 %v2226
    %3530 = vmatpush1.msra.mxu0 %v2225
    %3531 = vmatprep.subr.mxu0 %v2222
    %3532 = vmatpush1.msra.mxu0 %v2221
    %3533 = vmatprep.subr.mxu0 %v2218
    %3534 = vmatpush1.msra.mxu0 %v2217
    %3535 = vmatprep.subr.mxu0 %v2214
    %3536 = vmatpush1.msra.mxu0 %v2213
    %3537 = vmatprep.subr.mxu0 0.0
    %3538 = vmatpush2.msra.mxu0 0.0
    %3539 = vmatprep.subr.mxu0 0.0
    %3540 = vmatpush2.msra.mxu0 0.0
    %3541 = vmatprep.subr.mxu0 0.0
    %3542 = vmatpush2.msra.mxu0 0.0
    %3543 = vmatprep.subr.mxu0 0.0
    %3544 = vmatpush2.msra.mxu0 0.0
    %3545 = vmatprep.subr.mxu0 0.0
    %3546 = vmatpush2.msra.mxu0 0.0
    %3547 = vmatprep.subr.mxu0 0.0
    %3548 = vmatpush2.msra.mxu0 0.0
    %3549 = vmatprep.subr.mxu0 0.0
    %3550 = vmatpush2.msra.mxu0 0.0
    %3551 = vmatprep.subr.mxu0 0.0
    %3552 = vmatpush2.msra.mxu0 0.0
    %3553 = vmatprep.subr.mxu0 0.0
    %3554 = vmatpush2.msra.mxu0 0.0
    %3555 = vmatprep.subr.mxu0 0.0
    %3556 = vmatpush2.msra.mxu0 0.0
    %3557 = vmatprep.subr.mxu0 0.0
    %3558 = vmatpush2.msra.mxu0 0.0
    %3559 = vmatprep.subr.mxu0 0.0
    %3560 = vmatpush2.msra.mxu0 0.0
    %3561 = vmatprep.subr.mxu0 0.0
    %3562 = vmatpush2.msra.mxu0 0.0
    %3563 = vmatprep.subr.mxu0 0.0
    %3564 = vmatpush2.msra.mxu0 0.0
    %3565 = vmatprep.subr.mxu0 0.0
    %3566 = vmatpush2.msra.mxu0 0.0
    %3567 = vmatprep.subr.mxu0 0.0
    %3568 = vmatpush2.msra.mxu0 0.0
    %3569 = vmatprep.mubr.f32.mxu0 0.0
    %3570 = vmatmul.mubr.f32.gmra.mxu0 %v3429
    %v3571 = vpop.f32.mrf.mxu0
    %v3572 = vadd.f32 0.0, %v3571
    %v3573 = vpop.f32.mrf.mxu0
    %v3574 = vadd.f32 0.0, %v3573
    %3575 = vdwg.mxu0
    %v3576 = vadd.f32 %v3430, %v3501
    %v3577 = vadd.f32 %v3431, %v3503
    %v3578 = vadd.f32 %v3432, %v3572
    %v3579 = vadd.f32 %v3433, %v3574
    %v3580 = vtanh.pop %v3576
    %v3581 = vtanh.pop %v3577
    %v3582 = vtanh.pop %v3578
    %v3583 = vtanh.pop %v3579
    %v3584 = vmul.f32 %v3580, 0.5
    %v3585 = vadd.f32 %v3584, 0.5
    %v3586 = vmul.f32 %v3581, 0.5
    %v3587 = vadd.f32 %v3586, 0.5
    %v3588 = vmul.f32 %v3582, 0.5
    %v3589 = vadd.f32 %v3588, 0.5
    %v3590 = vmul.f32 %v3587, %v3427
    %v3591 = vmul.f32 %v3585, %v3583
    %v3592 = vadd.f32 %v3590, %v3591
    %v3593 = vtanh.pop %v3592
    %v3594 = vmul.f32 %v3589, %v3593
    %v3595 = vld [vmem:[#allocation13] sm:$0xff]
    %v3596 = vld [vmem:[#allocation13 + $0x8] sm:$0xff]
    %v3597 = vld [vmem:[#allocation13 + $0x10] sm:$0xff]
    %v3598 = vld [vmem:[#allocation13 + $0x18] sm:$0xff]
    %v3599 = vld [vmem:[#allocation13 + $0x20] sm:$0xff]
    %v3600 = vld [vmem:[#allocation13 + $0x28] sm:$0xff]
    %v3601 = vld [vmem:[#allocation13 + $0x30] sm:$0xff]
    %v3602 = vld [vmem:[#allocation13 + $0x38] sm:$0xff]
    %v3603 = vld [vmem:[#allocation13 + $0x40] sm:$0xff]
    %v3604 = vld [vmem:[#allocation13 + $0x48] sm:$0xff]
    %v3605 = vld [vmem:[#allocation13 + $0x50] sm:$0xff]
    %v3606 = vld [vmem:[#allocation13 + $0x58] sm:$0xff]
    %v3607 = vld [vmem:[#allocation13 + $0x60] sm:$0xff]
    %v3608 = vld [vmem:[#allocation13 + $0x68] sm:$0xff]
    %v3609 = vld [vmem:[#allocation13 + $0x70] sm:$0xff]
    %v3610 = vld [vmem:[#allocation13 + $0x78] sm:$0xff]
    %v3611 = vld [vmem:[%s8] sm:$0x1]
    %v3613 = vlaneseq
    %v3614 = vshrl.u32 %v3613, 7
    %v3615 = vsub.s32 0, %v3614
    %v3616 = vrot.slane %v3611, %v3615
    %3618 = vmatprep.subr.mxu0 0.0
    %3619 = vmatpush1.msra.mxu0 %v3610
    %3620 = vmatprep.subr.mxu0 0.0
    %3621 = vmatpush1.msra.mxu0 %v3609
    %3622 = vmatprep.subr.mxu0 0.0
    %3623 = vmatpush1.msra.mxu0 %v3608
    %3624 = vmatprep.subr.mxu0 0.0
    %3625 = vmatpush1.msra.mxu0 %v3607
    %3626 = vmatprep.subr.mxu0 0.0
    %3627 = vmatpush1.msra.mxu0 %v3606
    %3628 = vmatprep.subr.mxu0 0.0
    %3629 = vmatpush1.msra.mxu0 %v3605
    %3630 = vmatprep.subr.mxu0 0.0
    %3631 = vmatpush1.msra.mxu0 %v3604
    %3632 = vmatprep.subr.mxu0 0.0
    %3633 = vmatpush1.msra.mxu0 %v3603
    %3634 = vmatprep.subr.mxu0 0.0
    %3635 = vmatpush1.msra.mxu0 %v3602
    %3636 = vmatprep.subr.mxu0 0.0
    %3637 = vmatpush1.msra.mxu0 %v3601
    %3638 = vmatprep.subr.mxu0 0.0
    %3639 = vmatpush1.msra.mxu0 %v3600
    %3640 = vmatprep.subr.mxu0 0.0
    %3641 = vmatpush1.msra.mxu0 %v3599
    %3642 = vmatprep.subr.mxu0 0.0
    %3643 = vmatpush1.msra.mxu0 %v3598
    %3644 = vmatprep.subr.mxu0 0.0
    %3645 = vmatpush1.msra.mxu0 %v3597
    %3646 = vmatprep.subr.mxu0 0.0
    %3647 = vmatpush1.msra.mxu0 %v3596
    %3648 = vmatprep.subr.mxu0 0.0
    %3649 = vmatpush1.msra.mxu0 %v3595
    %3650 = vmatprep.subr.mxu0 0.0
    %3651 = vmatpush2.msra.mxu0 0.0
    %3652 = vmatprep.subr.mxu0 0.0
    %3653 = vmatpush2.msra.mxu0 0.0
    %3654 = vmatprep.subr.mxu0 0.0
    %3655 = vmatpush2.msra.mxu0 0.0
    %3656 = vmatprep.subr.mxu0 0.0
    %3657 = vmatpush2.msra.mxu0 0.0
    %3658 = vmatprep.subr.mxu0 0.0
    %3659 = vmatpush2.msra.mxu0 0.0
    %3660 = vmatprep.subr.mxu0 0.0
    %3661 = vmatpush2.msra.mxu0 0.0
    %3662 = vmatprep.subr.mxu0 0.0
    %3663 = vmatpush2.msra.mxu0 0.0
    %3664 = vmatprep.subr.mxu0 0.0
    %3665 = vmatpush2.msra.mxu0 0.0
    %3666 = vmatprep.subr.mxu0 0.0
    %3667 = vmatpush2.msra.mxu0 0.0
    %3668 = vmatprep.subr.mxu0 0.0
    %3669 = vmatpush2.msra.mxu0 0.0
    %3670 = vmatprep.subr.mxu0 0.0
    %3671 = vmatpush2.msra.mxu0 0.0
    %3672 = vmatprep.subr.mxu0 0.0
    %3673 = vmatpush2.msra.mxu0 0.0
    %3674 = vmatprep.subr.mxu0 0.0
    %3675 = vmatpush2.msra.mxu0 0.0
    %3676 = vmatprep.subr.mxu0 0.0
    %3677 = vmatpush2.msra.mxu0 0.0
    %3678 = vmatprep.subr.mxu0 0.0
    %3679 = vmatpush2.msra.mxu0 0.0
    %3680 = vmatprep.subr.mxu0 0.0
    %3681 = vmatpush2.msra.mxu0 0.0
    %3682 = vmatprep.mubr.f32.mxu0 0.0
    %3683 = vmatmul.mubr.f32.gmra.mxu0 %v3594
    %v3684 = vpop.f32.mrf.mxu0
    %v3685 = vadd.f32 %v3616, %v3684
    %v3686 = vpop.f32.mrf.mxu0
    %3687 = vdwg.mxu0
    %3688 = vst [vmem:[#allocation15] sm:$0xff] %v3685
    // Predicated region
    $region62: #{tpu_custom_call.1} parent=1 // pred_check
      _
    $region63: #{tpu_custom_call.1} parent=1 // pred_check_branch
      %3690 = sbr.rel (0) target = $region65
    $region64: #{tpu_custom_call.1} parent=1 // pred_region
      %s3692 = ssub.s32 128, 128
      %3693 = vsyncadd [#allocation6], %s3692
      %s3695 = sshll.u32 [#allocation15], 4
      %s3696 = int_to_ptr.vmem [resolvable:$true] %s3695
      %3698 = dma.vmem_to_hbm [thread:$0]  %s3696, 128, %s9, [#allocation6]
    $region65: #{tpu_custom_call.1} parent=1 // pred_fallthru
      _
    // Predicated region
    $region66: #{tpu_custom_call.1} parent=1 // pred_check
      _
    $region67: #{tpu_custom_call.1} parent=1 // pred_check_branch
      %3700 = sbr.rel (0) target = $region69
    $region68: #{tpu_custom_call.1} parent=1 // pred_region
      %3701 = dma.done [#allocation6], 128
    $region69: #{tpu_custom_call.1} parent=1 // pred_fallthru
      _
    %3702 = vsyncpa [#allocation5], 1
    %3703 = vsyncpa [#allocation8], 1
    %3704 = vsyncpa [#allocation11], 1
    %3705 = vsyncpa [#allocation14], 1
    %3706 = vsyncpa [#allocation6], 1

</llo_original>
